<compile_context>
chip_gen: v7x
topology: tpu7x:2x2x1
jax: 0.10.0
libtpu: 0.0.40
codegen_flags: <defaults>
</compile_context>

<pallas_src>
import jax
import jax.numpy as jnp
import numpy as np
from jax.experimental import pallas as pl
from jax.experimental.pallas import tpu as pltpu

EPS = 0.003
H1, H2 = 250, 500        # true hidden widths of the PyTorch module
H1P, H2P = 256, 512      # zero-padded widths used inside the kernel
TB = 256                 # batch rows per grid step


def _round_up(x, m):
    return (x + m - 1) // m * m


# ----------------------------------------------------------------------------
# Kernel
# ----------------------------------------------------------------------------
def critic_kernel(x_ref, win_ref, bin_ref, w2_ref, b2_ref, w3_ref, b3_ref,
                  out_ref):
    # Layer 1 (fc1 & fa1 merged, block-diagonal weight): bf16 MXU, f32 acc.
    h1 = jnp.dot(x_ref[...], win_ref[...], preferred_element_type=jnp.float32)
    h1 = jnp.maximum(h1 + bin_ref[...], 0.0)                      # (TB, 2*H1P) f32

    # Layer 2 (fca1, concat folded into the row layout of w2): bf16 MXU, f32 acc.
    h2 = jnp.dot(h1.astype(jnp.bfloat16), w2_ref[...],
                 preferred_element_type=jnp.float32)
    h2 = jnp.maximum(h2 + b2_ref[...], 0.0)                       # (TB, H2P) f32

    # Layer 3 (fca2, out_features=1): VPU multiply + XLU lane reduce instead of
    # a degenerate N=1 MXU matmul; store lane-dense (batch on the lane axis).
    vs = jnp.sum(h2 * w3_ref[...], axis=-1)                       # (TB,) f32
    out_ref[0, 0, :] = vs + b3_ref[0, 0]


# ----------------------------------------------------------------------------
# Wrapper
# ----------------------------------------------------------------------------
def critic_forward(state, action, packed, *, tb=TB):
    B, state_dim = state.shape
    action_dim = action.shape[1]
    d_in = state_dim + action_dim
    d_in_p = packed["win"].shape[0]

    n_tiles = _round_up(B, tb) // tb
    b_pad = n_tiles * tb

    # [state | action], zero-padded to (b_pad, d_in_p), cast to bf16 for the MXU.
    x = jnp.zeros((b_pad, d_in_p), jnp.float32)
    x = x.at[:B, :state_dim].set(state)
    x = x.at[:B, state_dim:d_in].set(action)
    x = x.astype(jnp.bfloat16)

    const = lambda i: (0, 0)
    args = (x, packed["win"], packed["bin"], packed["w2"], packed["b2"],
            packed["w3"], packed["b3"])

    flops = 2 * b_pad * (d_in_p * 2 * H1P + 2 * H1P * H2P + H2P)
    bytes_accessed = sum(int(a.size) * a.dtype.itemsize for a in args) + b_pad * 4

    out = pl.pallas_call(
        critic_kernel,
        out_shape=jax.ShapeDtypeStruct((n_tiles, 1, tb), jnp.float32),
        grid=(n_tiles,),
        in_specs=[
            pl.BlockSpec((tb, d_in_p), lambda i: (i, 0)),        # x, batch-tiled
            pl.BlockSpec((d_in_p, 2 * H1P), const),              # merged fc1/fa1 weight (bf16)
            pl.BlockSpec((1, 2 * H1P), const),                   # merged bias (f32)
            pl.BlockSpec((2 * H1P, H2P), const),                 # fca1 weight (bf16)
            pl.BlockSpec((1, H2P), const),                       # fca1 bias (f32)
            pl.BlockSpec((1, H2P), const),                       # fca2 weight row (f32)
            pl.BlockSpec(memory_space=pltpu.MemorySpace.SMEM),   # fca2 bias scalar
        ],
        out_specs=pl.BlockSpec((1, 1, tb), lambda i: (i, 0, 0)),
        compiler_params=pltpu.CompilerParams(
            dimension_semantics=("parallel",)),
        cost_estimate=pl.CostEstimate(flops=flops, transcendentals=0,
                                      bytes_accessed=bytes_accessed),
    )(*args)

    # (n_tiles, 1, tb) lane-dense tiles -> (B, 1)
    return out.reshape(b_pad, 1)[:B]


# ----------------------------------------------------------------------------
# Parameter init (matches the PyTorch module) and host-side packing
# ----------------------------------------------------------------------------
def fanin_init(key, shape, fanin=None):
    # Matches PyTorch fanin_init: shape = (out, in), v = 1/sqrt(shape[0]).
    fanin = fanin or shape[0]
    v = 1.0 / np.sqrt(fanin)
    return jax.random.uniform(key, shape, jnp.float32, minval=-v, maxval=v)


def init_params(key, state_dim, action_dim):
    ks = jax.random.split(key, 8)
    # PyTorch Linear stores weight as (out, in); keep (in, out) so y = x @ W + b.
    w1 = fanin_init(ks[0], (H1, state_dim)).T                     # (state_dim, 250)
    b1 = jax.random.uniform(ks[1], (H1,), jnp.float32,
                            minval=-1.0 / np.sqrt(state_dim),
                            maxval=1.0 / np.sqrt(state_dim))
    wa = fanin_init(ks[2], (H1, action_dim)).T                    # (action_dim, 250)
    ba = jax.random.uniform(ks[3], (H1,), jnp.float32,
                            minval=-1.0 / np.sqrt(action_dim),
                            maxval=1.0 / np.sqrt(action_dim))
    w2 = fanin_init(ks[4], (H2, H2)).T                            # (500, 500)
    b2 = jax.random.uniform(ks[5], (H2,), jnp.float32,
                            minval=-1.0 / np.sqrt(H2), maxval=1.0 / np.sqrt(H2))
    w3 = jax.random.uniform(ks[6], (H2,), jnp.float32, minval=-EPS, maxval=EPS)
    b3 = jax.random.uniform(ks[7], (), jnp.float32,
                            minval=-1.0 / np.sqrt(H2), maxval=1.0 / np.sqrt(H2))
    return dict(w1=w1, b1=b1, wa=wa, ba=ba, w2=w2, b2=b2, w3=w3, b3=b3)


def pack_params(p, state_dim, action_dim):
    """Merge fc1/fa1, fold the concat into fca1, zero-pad to (16,128) multiples,
    and cast the MXU weights to bf16. Done once on the host."""
    d_in = state_dim + action_dim
    d_in_p = max(128, _round_up(d_in, 128))

    # Block-diagonal layer-1 weight: [state | action] -> [xs_pad | xa_pad].
    win = jnp.zeros((d_in_p, 2 * H1P), jnp.float32)
    win = win.at[:state_dim, :H1].set(p["w1"])
    win = win.at[state_dim:d_in, H1P:H1P + H1].set(p["wa"])
    bin_ = jnp.zeros((1, 2 * H1P), jnp.float32)
    bin_ = bin_.at[0, :H1].set(p["b1"])
    bin_ = bin_.at[0, H1P:H1P + H1].set(p["ba"])

    # fca1 weight with the concat folded in: rows [0:250) multiply xs,
    # rows [256:506) multiply xa; all padded rows/cols are zero.
    w2p = jnp.zeros((2 * H1P, H2P), jnp.float32)
    w2p = w2p.at[:H1, :H2].set(p["w2"][:H1, :])
    w2p = w2p.at[H1P:H1P + H1, :H2].set(p["w2"][H1:, :])
    b2p = jnp.zeros((1, H2P), jnp.float32).at[0, :H2].set(p["b2"])

    # fca2 as a (1, H2P) row for the VPU-mul + lane-reduce path.
    w3row = jnp.zeros((1, H2P), jnp.float32).at[0, :H2].set(p["w3"])
    b3 = p["b3"].reshape(1, 1)

    return dict(win=win.astype(jnp.bfloat16), bin=bin_,
                w2=w2p.astype(jnp.bfloat16), b2=b2p,
                w3=w3row, b3=b3)


def critic_reference(state, action, p):
    """Pure-JAX f32 reference identical to the PyTorch forward."""
    xs = jax.nn.relu(state @ p["w1"] + p["b1"])
    xa = jax.nn.relu(action @ p["wa"] + p["ba"])
    x = jnp.concatenate([xs, xa], axis=1)
    h = jax.nn.relu(x @ p["w2"] + p["b2"])
    return h @ p["w3"][:, None] + p["b3"]


if __name__ == "__main__":
    key = jax.random.PRNGKey(0)
    k_state, k_action, k_params = jax.random.split(key, 3)

    B, state_dim, action_dim = 2, 16, 4
    state = jax.random.normal(k_state, (B, state_dim), jnp.float32)
    action = jax.random.normal(k_action, (B, action_dim), jnp.float32)

    params = init_params(k_params, state_dim, action_dim)
    packed = pack_params(params, state_dim, action_dim)

    out = critic_forward(state, action, packed)
    out = jax.block_until_ready(out)
    assert out.shape == (B, 1)

    ref = critic_reference(state, action, params)
    # bf16 MXU inputs with f32 accumulation -> ~1e-3 relative drift vs f32 ref.
    np.testing.assert_allclose(np.asarray(out), np.asarray(ref),
                               rtol=5e-2, atol=5e-3)

    print("KERNEL_OK")
</pallas_src>

<mosaic_0001>
module attributes {stable_mosaic.version = 11 : i64} {
  func.func @critic_kernel(%arg0: i32, %arg1: memref<256x128xbf16, #tpu.memory_space<vmem>>, %arg2: memref<128x512xbf16, #tpu.memory_space<vmem>>, %arg3: memref<1x512xf32, #tpu.memory_space<vmem>>, %arg4: memref<512x512xbf16, #tpu.memory_space<vmem>>, %arg5: memref<1x512xf32, #tpu.memory_space<vmem>>, %arg6: memref<1x512xf32, #tpu.memory_space<vmem>>, %arg7: memref<1x1xf32, #tpu.memory_space<smem>>, %arg8: memref<1x1x256xf32, #tpu.memory_space<vmem>>) attributes {dimension_semantics = [#tpu.dimension_semantics<parallel>], iteration_bounds = array<i64: 1>, scalar_prefetch = 0 : i64, scratch_operands = 0 : i64, tpu.core_type = #tpu.core_type<tc>, window_params = [{transform_indices = @transform_0, window_bounds = array<i64: 256, 128>}, {pipeline_mode = #tpu.pipeline_mode<synchronous>, transform_indices = @transform_1, window_bounds = array<i64: 128, 512>}, {pipeline_mode = #tpu.pipeline_mode<synchronous>, transform_indices = @transform_2, window_bounds = array<i64: 1, 512>}, {pipeline_mode = #tpu.pipeline_mode<synchronous>, transform_indices = @transform_3, window_bounds = array<i64: 512, 512>}, {pipeline_mode = #tpu.pipeline_mode<synchronous>, transform_indices = @transform_4, window_bounds = array<i64: 1, 512>}, {pipeline_mode = #tpu.pipeline_mode<synchronous>, transform_indices = @transform_5, window_bounds = array<i64: 1, 512>}, {transform_indices = @transform_6, window_bounds = array<i64: 1, 1>}, {transform_indices = @transform_7, window_bounds = array<i64: 1, 1, 256>}]} {
    %c0 = arith.constant 0 : index
    %c0_0 = arith.constant 0 : index
    %0 = vector.load %arg1[%c0, %c0_0] : memref<256x128xbf16, #tpu.memory_space<vmem>>, vector<256x128xbf16>
    %c0_1 = arith.constant 0 : index
    %c0_2 = arith.constant 0 : index
    %1 = vector.load %arg2[%c0_1, %c0_2] : memref<128x512xbf16, #tpu.memory_space<vmem>>, vector<128x512xbf16>
    %cst = arith.constant dense<0.000000e+00> : vector<256x512xf32>
    %2 = tpu.matmul %0, %1, %cst {dimension_numbers = #tpu.dot_dimension_numbers<[1], [0], [0], [1], [0, 0, 1, 1], [], []>} : vector<256x128xbf16>, vector<128x512xbf16>, vector<256x512xf32> -> vector<256x512xf32>
    %c0_3 = arith.constant 0 : index
    %c0_4 = arith.constant 0 : index
    %3 = vector.load %arg3[%c0_3, %c0_4] : memref<1x512xf32, #tpu.memory_space<vmem>>, vector<1x512xf32>
    %4 = vector.broadcast %3 : vector<1x512xf32> to vector<256x512xf32>
    %5 = arith.addf %2, %4 : vector<256x512xf32>
    %cst_5 = arith.constant 0.000000e+00 : f32
    %6 = vector.broadcast %cst_5 : f32 to vector<256x512xf32>
    %7 = arith.maximumf %5, %6 : vector<256x512xf32>
    %8 = arith.truncf %7 : vector<256x512xf32> to vector<256x512xbf16>
    %c0_6 = arith.constant 0 : index
    %c0_7 = arith.constant 0 : index
    %9 = vector.load %arg4[%c0_6, %c0_7] : memref<512x512xbf16, #tpu.memory_space<vmem>>, vector<512x512xbf16>
    %cst_8 = arith.constant dense<0.000000e+00> : vector<256x512xf32>
    %10 = tpu.matmul %8, %9, %cst_8 {dimension_numbers = #tpu.dot_dimension_numbers<[1], [0], [0], [1], [0, 0, 1, 1], [], []>} : vector<256x512xbf16>, vector<512x512xbf16>, vector<256x512xf32> -> vector<256x512xf32>
    %c0_9 = arith.constant 0 : index
    %c0_10 = arith.constant 0 : index
    %11 = vector.load %arg5[%c0_9, %c0_10] : memref<1x512xf32, #tpu.memory_space<vmem>>, vector<1x512xf32>
    %12 = vector.broadcast %11 : vector<1x512xf32> to vector<256x512xf32>
    %13 = arith.addf %10, %12 : vector<256x512xf32>
    %cst_11 = arith.constant 0.000000e+00 : f32
    %14 = vector.broadcast %cst_11 : f32 to vector<256x512xf32>
    %15 = arith.maximumf %13, %14 : vector<256x512xf32>
    %c0_12 = arith.constant 0 : index
    %c0_13 = arith.constant 0 : index
    %16 = vector.load %arg6[%c0_12, %c0_13] : memref<1x512xf32, #tpu.memory_space<vmem>>, vector<1x512xf32>
    %17 = vector.broadcast %16 : vector<1x512xf32> to vector<256x512xf32>
    %18 = arith.mulf %15, %17 : vector<256x512xf32>
    %cst_14 = arith.constant dense<0.000000e+00> : vector<256xf32>
    %19 = vector.multi_reduction <add>, %18, %cst_14 [1] : vector<256x512xf32> to vector<256xf32>
    %c0_15 = arith.constant 0 : index
    %c0_16 = arith.constant 0 : index
    %20 = memref.load %arg7[%c0_15, %c0_16] : memref<1x1xf32, #tpu.memory_space<smem>>
    %21 = vector.broadcast %20 : f32 to vector<256xf32>
    %22 = arith.addf %19, %21 : vector<256xf32>
    %c0_17 = arith.constant 0 : index
    %c0_18 = arith.constant 0 : index
    %c0_19 = arith.constant 0 : index
    %23 = vector.load %arg8[%c0_17, %c0_18, %c0_19] : memref<1x1x256xf32, #tpu.memory_space<vmem>>, vector<1x1x256xf32>
    %24 = vector.shape_cast %23 : vector<1x1x256xf32> to vector<256xf32>
    %25 = vector.shape_cast %22 : vector<256xf32> to vector<1x1x256xf32>
    tpu.vector_store %arg8[%c0_17, %c0_18, %c0_19], %25 {strides = array<i32>} : memref<1x1x256xf32, #tpu.memory_space<vmem>>, vector<1x1x256xf32>,
    return
  }
  func.func @transform_0(%arg0: i32) -> (i32, i32) {
    %c0_i32 = arith.constant 0 : i32
    %c0_i32_0 = arith.constant 0 : i32
    return %arg0, %c0_i32 : i32, i32
  }
  func.func @transform_1(%arg0: i32) -> (i32, i32) {
    %c0_i32 = arith.constant 0 : i32
    %c0_i32_0 = arith.constant 0 : i32
    %c0_i32_1 = arith.constant 0 : i32
    return %c0_i32, %c0_i32_0 : i32, i32
  }
  func.func @transform_2(%arg0: i32) -> (i32, i32) {
    %c0_i32 = arith.constant 0 : i32
    %c0_i32_0 = arith.constant 0 : i32
    %c0_i32_1 = arith.constant 0 : i32
    return %c0_i32, %c0_i32_0 : i32, i32
  }
  func.func @transform_3(%arg0: i32) -> (i32, i32) {
    %c0_i32 = arith.constant 0 : i32
    %c0_i32_0 = arith.constant 0 : i32
    %c0_i32_1 = arith.constant 0 : i32
    return %c0_i32, %c0_i32_0 : i32, i32
  }
  func.func @transform_4(%arg0: i32) -> (i32, i32) {
    %c0_i32 = arith.constant 0 : i32
    %c0_i32_0 = arith.constant 0 : i32
    %c0_i32_1 = arith.constant 0 : i32
    return %c0_i32, %c0_i32_0 : i32, i32
  }
  func.func @transform_5(%arg0: i32) -> (i32, i32) {
    %c0_i32 = arith.constant 0 : i32
    %c0_i32_0 = arith.constant 0 : i32
    %c0_i32_1 = arith.constant 0 : i32
    return %c0_i32, %c0_i32_0 : i32, i32
  }
  func.func @transform_6(%arg0: i32) -> (i32, i32) {
    %c0_i32 = arith.constant 0 : i32
    %c0_i32_0 = arith.constant 0 : i32
    %c0_i32_1 = arith.constant 0 : i32
    return %c0_i32, %c0_i32_0 : i32, i32
  }
  func.func @transform_7(%arg0: i32) -> (i32, i32, i32) {
    %c0_i32 = arith.constant 0 : i32
    %c0_i32_0 = arith.constant 0 : i32
    %c0_i32_1 = arith.constant 0 : i32
    return %arg0, %c0_i32, %c0_i32_0 : i32, i32, i32
  }
}

</mosaic_0001>

<llo_original>
// kernel: tpu_custom_call.1
$region0: #{tpu_custom_call.1}
  #allocation0 [shape = 'u32[]', space=smem, size = 0x4, offset = 0x4, fixed_abs, tag = 'smem constant byte address 0x4 - core index']
  #allocation1 [shape = 'u32[144,128]{1,0:T(1,128)}', space=vmem, size = 0x12000, scoped, tag = 'internal scratch']
  #allocation2 [shape = 'f32[1,1]{1,0:T(1,128)S(6)}', space=smem, size = 0x200, scoped, tag = 'scoped memory for tpu_custom_call.1']
  %s0 = inlined_call_operand.hbm [shape: bf16[256,128], index: 0, kind: input, shape index: {}]
  %s1 = inlined_call_operand.hbm [shape: bf16[128,512], index: 1, kind: input, shape index: {}]
  %s2 = inlined_call_operand.vmem [shape: f32[1,512], index: 2, kind: input, shape index: {}]
  %s3 = inlined_call_operand.hbm [shape: bf16[512,512], index: 3, kind: input, shape index: {}]
  %s4 = inlined_call_operand.vmem [shape: f32[1,512], index: 4, kind: input, shape index: {}]
  %s5 = inlined_call_operand.vmem [shape: f32[1,512], index: 5, kind: input, shape index: {}]
  %s6 = inlined_call_operand.<no memory space> [shape: f32[1,1], index: 6, kind: input, shape index: {}]
  %s7 = inlined_call_operand.hbm [shape: f32[1,1,256], index: 7, kind: output, shape index: {}]
  %s8 = sld [smem:[#allocation0]]
  $region50: #{tpu_custom_call.1} parent=0
    _
  %s10 = ssub.s32 1, %s8
  %s11 = scalar_select 0, %s10, %s8
  %12 = sst [smem:[#allocation2]] %s6
  $region1: #{tpu_custom_call.1} parent=0
    #allocation3 [shape = 'u8[65536]{0}', space=vmem, size = 0x10000, scoped, tag = 'input window, operand 0, single buffered']
    #allocation4 [shape = 's32[1]{0}', space=sflag, size = 0x4, scoped, tag = 'scoped memory for tpu_custom_call.1']
    #allocation5 [shape = 's32[1]{0}', space=sflag, size = 0x4, scoped, tag = 'scoped memory for tpu_custom_call.1']
    #allocation6 [shape = 'u8[131072]{0}', space=vmem, size = 0x20000, scoped, tag = 'input window, operand 1, single buffered']
    #allocation7 [shape = 's32[1]{0}', space=sflag, size = 0x4, scoped, tag = 'scoped memory for tpu_custom_call.1']
    #allocation8 [shape = 'u8[524288]{0}', space=vmem, size = 0x80000, scoped, tag = 'input window, operand 3, single buffered']
    #allocation9 [shape = 'u8[1024]{0}', space=vmem, size = 0x400, scoped, tag = 'output window, operand 0, single buffered']
    %13 = vsyncpa [#allocation4], 0
    %14 = vsyncpa [#allocation7], 0
    %15 = vsyncpa [#allocation5], 0
    // Predicated region
    $region2: #{tpu_custom_call.1} parent=1 // pred_check
      _
    $region3: #{tpu_custom_call.1} parent=1 // pred_check_branch
      %17 = sbr.rel (0) target = $region5
    $region4: #{tpu_custom_call.1} parent=1 // pred_region
      %s19 = ssub.s32 2048, 2048
      %20 = vsyncadd [#allocation4], %s19
      %s21 = sshll.u32 [#allocation3], 4
      %s22 = int_to_ptr.vmem [resolvable:$true] %s21
      %27 = dma.hbm_to_vmem [thread:$0]  %s0, 2048, %s22, [#allocation4], 64, 64, 4
    $region5: #{tpu_custom_call.1} parent=1 // pred_fallthru
      _
    // Predicated region
    $region6: #{tpu_custom_call.1} parent=1 // pred_check
      _
    $region7: #{tpu_custom_call.1} parent=1 // pred_check_branch
      %29 = sbr.rel (0) target = $region9
    $region8: #{tpu_custom_call.1} parent=1 // pred_region
      %s31 = ssub.s32 4096, 4096
      %32 = vsyncadd [#allocation7], %s31
      %s33 = sshll.u32 [#allocation6], 4
      %s34 = int_to_ptr.vmem [resolvable:$true] %s33
      %39 = dma.hbm_to_vmem [thread:$0]  %s1, 4096, %s34, [#allocation7], 256, 256, 16
    $region9: #{tpu_custom_call.1} parent=1 // pred_fallthru
      _
    // Predicated region
    $region10: #{tpu_custom_call.1} parent=1 // pred_check
      _
    $region11: #{tpu_custom_call.1} parent=1 // pred_check_branch
      %41 = sbr.rel (0) target = $region13
    $region12: #{tpu_custom_call.1} parent=1 // pred_region
      _
    $region13: #{tpu_custom_call.1} parent=1 // pred_fallthru
      _
    // Predicated region
    $region14: #{tpu_custom_call.1} parent=1 // pred_check
      _
    $region15: #{tpu_custom_call.1} parent=1 // pred_check_branch
      %43 = sbr.rel (0) target = $region17
    $region16: #{tpu_custom_call.1} parent=1 // pred_region
      %s45 = ssub.s32 16384, 16384
      %46 = vsyncadd [#allocation7], %s45
      %s47 = sshll.u32 [#allocation8], 4
      %s48 = int_to_ptr.vmem [resolvable:$true] %s47
      %53 = dma.hbm_to_vmem [thread:$0]  %s3, 16384, %s48, [#allocation7], 256, 256, 16
    $region17: #{tpu_custom_call.1} parent=1 // pred_fallthru
      _
    // Predicated region
    $region18: #{tpu_custom_call.1} parent=1 // pred_check
      _
    $region19: #{tpu_custom_call.1} parent=1 // pred_check_branch
      %55 = sbr.rel (0) target = $region21
    $region20: #{tpu_custom_call.1} parent=1 // pred_region
      _
    $region21: #{tpu_custom_call.1} parent=1 // pred_fallthru
      _
    // Predicated region
    $region22: #{tpu_custom_call.1} parent=1 // pred_check
      _
    $region23: #{tpu_custom_call.1} parent=1 // pred_check_branch
      %57 = sbr.rel (0) target = $region25
    $region24: #{tpu_custom_call.1} parent=1 // pred_region
      _
    $region25: #{tpu_custom_call.1} parent=1 // pred_fallthru
      _
    // Predicated region
    $region26: #{tpu_custom_call.1} parent=1 // pred_check
      _
    $region27: #{tpu_custom_call.1} parent=1 // pred_check_branch
      %59 = sbr.rel (0) target = $region29
    $region28: #{tpu_custom_call.1} parent=1 // pred_region
      _
    $region29: #{tpu_custom_call.1} parent=1 // pred_fallthru
      _
    // Predicated region
    $region30: #{tpu_custom_call.1} parent=1 // pred_check
      _
    $region31: #{tpu_custom_call.1} parent=1 // pred_check_branch
      %61 = sbr.rel (0) target = $region33
    $region32: #{tpu_custom_call.1} parent=1 // pred_region
      %62 = dma.done [#allocation4], 2048
    $region33: #{tpu_custom_call.1} parent=1 // pred_fallthru
      _
    // Predicated region
    $region34: #{tpu_custom_call.1} parent=1 // pred_check
      _
    $region35: #{tpu_custom_call.1} parent=1 // pred_check_branch
      %64 = sbr.rel (0) target = $region37
    $region36: #{tpu_custom_call.1} parent=1 // pred_region
      %65 = dma.done [#allocation7], 4096
    $region37: #{tpu_custom_call.1} parent=1 // pred_fallthru
      _
    // Predicated region
    $region38: #{tpu_custom_call.1} parent=1 // pred_check
      _
    $region39: #{tpu_custom_call.1} parent=1 // pred_check_branch
      %67 = sbr.rel (0) target = $region41
    $region40: #{tpu_custom_call.1} parent=1 // pred_region
      %68 = dma.done [#allocation7], 16384
    $region41: #{tpu_custom_call.1} parent=1 // pred_fallthru
      _
    %v70 = vld [vmem:[#allocation3] sm:$0xf]
    %v71 = vld [vmem:[#allocation3 + $0x4] sm:$0xf]
    %v72 = vld [vmem:[#allocation3 + $0x8] sm:$0xf]
    %v73 = vld [vmem:[#allocation3 + $0xc] sm:$0xf]
    %v74 = vld [vmem:[#allocation3 + $0x10] sm:$0xf]
    %v75 = vld [vmem:[#allocation3 + $0x14] sm:$0xf]
    %v76 = vld [vmem:[#allocation3 + $0x18] sm:$0xf]
    %v77 = vld [vmem:[#allocation3 + $0x1c] sm:$0xf]
    %v78 = vld [vmem:[#allocation3 + $0x20] sm:$0xf]
    %v79 = vld [vmem:[#allocation3 + $0x24] sm:$0xf]
    %v80 = vld [vmem:[#allocation3 + $0x28] sm:$0xf]
    %v81 = vld [vmem:[#allocation3 + $0x2c] sm:$0xf]
    %v82 = vld [vmem:[#allocation3 + $0x30] sm:$0xf]
    %v83 = vld [vmem:[#allocation3 + $0x34] sm:$0xf]
    %v84 = vld [vmem:[#allocation3 + $0x38] sm:$0xf]
    %v85 = vld [vmem:[#allocation3 + $0x3c] sm:$0xf]
    %v86 = vld [vmem:[#allocation3 + $0x40] sm:$0xf]
    %v87 = vld [vmem:[#allocation3 + $0x44] sm:$0xf]
    %v88 = vld [vmem:[#allocation3 + $0x48] sm:$0xf]
    %v89 = vld [vmem:[#allocation3 + $0x4c] sm:$0xf]
    %v90 = vld [vmem:[#allocation3 + $0x50] sm:$0xf]
    %v91 = vld [vmem:[#allocation3 + $0x54] sm:$0xf]
    %v92 = vld [vmem:[#allocation3 + $0x58] sm:$0xf]
    %v93 = vld [vmem:[#allocation3 + $0x5c] sm:$0xf]
    %v94 = vld [vmem:[#allocation3 + $0x60] sm:$0xf]
    %v95 = vld [vmem:[#allocation3 + $0x64] sm:$0xf]
    %v96 = vld [vmem:[#allocation3 + $0x68] sm:$0xf]
    %v97 = vld [vmem:[#allocation3 + $0x6c] sm:$0xf]
    %v98 = vld [vmem:[#allocation3 + $0x70] sm:$0xf]
    %v99 = vld [vmem:[#allocation3 + $0x74] sm:$0xf]
    %v100 = vld [vmem:[#allocation3 + $0x78] sm:$0xf]
    %v101 = vld [vmem:[#allocation3 + $0x7c] sm:$0xf]
    %v102 = vld [vmem:[#allocation6] sm:$0xff]
    %v103 = vld [vmem:[#allocation6 + $0x8] sm:$0xff]
    %v104 = vld [vmem:[#allocation6 + $0x10] sm:$0xff]
    %v105 = vld [vmem:[#allocation6 + $0x18] sm:$0xff]
    %v106 = vld [vmem:[#allocation6 + $0x20] sm:$0xff]
    %v107 = vld [vmem:[#allocation6 + $0x28] sm:$0xff]
    %v108 = vld [vmem:[#allocation6 + $0x30] sm:$0xff]
    %v109 = vld [vmem:[#allocation6 + $0x38] sm:$0xff]
    %v110 = vld [vmem:[#allocation6 + $0x40] sm:$0xff]
    %v111 = vld [vmem:[#allocation6 + $0x48] sm:$0xff]
    %v112 = vld [vmem:[#allocation6 + $0x50] sm:$0xff]
    %v113 = vld [vmem:[#allocation6 + $0x58] sm:$0xff]
    %v114 = vld [vmem:[#allocation6 + $0x60] sm:$0xff]
    %v115 = vld [vmem:[#allocation6 + $0x68] sm:$0xff]
    %v116 = vld [vmem:[#allocation6 + $0x70] sm:$0xff]
    %v117 = vld [vmem:[#allocation6 + $0x78] sm:$0xff]
    %v118 = vld [vmem:[#allocation6 + $0x80] sm:$0xff]
    %v119 = vld [vmem:[#allocation6 + $0x88] sm:$0xff]
    %v120 = vld [vmem:[#allocation6 + $0x90] sm:$0xff]
    %v121 = vld [vmem:[#allocation6 + $0x98] sm:$0xff]
    %v122 = vld [vmem:[#allocation6 + $0xa0] sm:$0xff]
    %v123 = vld [vmem:[#allocation6 + $0xa8] sm:$0xff]
    %v124 = vld [vmem:[#allocation6 + $0xb0] sm:$0xff]
    %v125 = vld [vmem:[#allocation6 + $0xb8] sm:$0xff]
    %v126 = vld [vmem:[#allocation6 + $0xc0] sm:$0xff]
    %v127 = vld [vmem:[#allocation6 + $0xc8] sm:$0xff]
    %v128 = vld [vmem:[#allocation6 + $0xd0] sm:$0xff]
    %v129 = vld [vmem:[#allocation6 + $0xd8] sm:$0xff]
    %v130 = vld [vmem:[#allocation6 + $0xe0] sm:$0xff]
    %v131 = vld [vmem:[#allocation6 + $0xe8] sm:$0xff]
    %v132 = vld [vmem:[#allocation6 + $0xf0] sm:$0xff]
    %v133 = vld [vmem:[#allocation6 + $0xf8] sm:$0xff]
    %v134 = vld [vmem:[%s2] sm:$0xf]
    %v136 = vlaneseq
    %v137 = vshrl.u32 %v136, 7
    %v138 = vsub.s32 0, %v137
    %v139 = vrot.slane %v134, %v138
    %v140 = vlaneseq
    %v141 = vshrl.u32 %v140, 7
    %v142 = vsub.s32 1, %v141
    %v143 = vrot.slane %v134, %v142
    %v144 = vlaneseq
    %v145 = vshrl.u32 %v144, 7
    %v146 = vsub.s32 2, %v145
    %v147 = vrot.slane %v134, %v146
    %v148 = vlaneseq
    %v149 = vshrl.u32 %v148, 7
    %v150 = vsub.s32 3, %v149
    %v151 = vrot.slane %v134, %v150
    %v188 = vunpack.c.l.b16 %v70
    %v189 = vunpack.c.l.b16 %v71
    %v190 = vunpack.c.l.b16 %v72
    %v191 = vunpack.c.l.b16 %v73
    %v192 = vunpack.c.l.b16 %v74
    %v193 = vunpack.c.l.b16 %v75
    %v194 = vunpack.c.l.b16 %v76
    %v195 = vunpack.c.l.b16 %v77
    %v196 = vunpack.c.l.b16 %v78
    %v197 = vunpack.c.l.b16 %v79
    %v198 = vunpack.c.l.b16 %v80
    %v199 = vunpack.c.l.b16 %v81
    %v200 = vunpack.c.l.b16 %v82
    %v201 = vunpack.c.l.b16 %v83
    %v202 = vunpack.c.l.b16 %v84
    %v203 = vunpack.c.l.b16 %v85
    %v204 = vunpack.c.l.b16 %v86
    %v205 = vunpack.c.l.b16 %v87
    %v206 = vunpack.c.l.b16 %v88
    %v207 = vunpack.c.l.b16 %v89
    %v208 = vunpack.c.l.b16 %v90
    %v209 = vunpack.c.l.b16 %v91
    %v210 = vunpack.c.l.b16 %v92
    %v211 = vunpack.c.l.b16 %v93
    %v212 = vunpack.c.l.b16 %v94
    %v213 = vunpack.c.l.b16 %v95
    %v214 = vunpack.c.l.b16 %v96
    %v215 = vunpack.c.l.b16 %v97
    %v216 = vunpack.c.l.b16 %v98
    %v217 = vunpack.c.l.b16 %v99
    %v218 = vunpack.c.l.b16 %v100
    %v219 = vunpack.c.l.b16 %v101
    %v220 = vpack.c.b16 %v189, %v188
    %v221 = vpack.c.b16 %v191, %v190
    %v222 = vpack.c.b16 %v193, %v192
    %v223 = vpack.c.b16 %v195, %v194
    %v224 = vpack.c.b16 %v197, %v196
    %v225 = vpack.c.b16 %v199, %v198
    %v226 = vpack.c.b16 %v201, %v200
    %v227 = vpack.c.b16 %v203, %v202
    %v228 = vpack.c.b16 %v205, %v204
    %v229 = vpack.c.b16 %v207, %v206
    %v230 = vpack.c.b16 %v209, %v208
    %v231 = vpack.c.b16 %v211, %v210
    %v232 = vpack.c.b16 %v213, %v212
    %v233 = vpack.c.b16 %v215, %v214
    %v234 = vpack.c.b16 %v217, %v216
    %v235 = vpack.c.b16 %v219, %v218
    %v284 = vunpack.c.l.b16 %v102
    %v285 = vunpack.c.h.b16 %v102
    %v286 = vunpack.c.l.b16 %v103
    %v287 = vunpack.c.h.b16 %v103
    %v288 = vunpack.c.l.b16 %v104
    %v289 = vunpack.c.h.b16 %v104
    %v290 = vunpack.c.l.b16 %v105
    %v291 = vunpack.c.h.b16 %v105
    %v292 = vunpack.c.l.b16 %v106
    %v293 = vunpack.c.h.b16 %v106
    %v294 = vunpack.c.l.b16 %v107
    %v295 = vunpack.c.h.b16 %v107
    %v296 = vunpack.c.l.b16 %v108
    %v297 = vunpack.c.h.b16 %v108
    %v298 = vunpack.c.l.b16 %v109
    %v299 = vunpack.c.h.b16 %v109
    %v300 = vunpack.c.l.b16 %v110
    %v301 = vunpack.c.h.b16 %v110
    %v302 = vunpack.c.l.b16 %v111
    %v303 = vunpack.c.h.b16 %v111
    %v304 = vunpack.c.l.b16 %v112
    %v305 = vunpack.c.h.b16 %v112
    %v306 = vunpack.c.l.b16 %v113
    %v307 = vunpack.c.h.b16 %v113
    %v308 = vunpack.c.l.b16 %v114
    %v309 = vunpack.c.h.b16 %v114
    %v310 = vunpack.c.l.b16 %v115
    %v311 = vunpack.c.h.b16 %v115
    %v312 = vunpack.c.l.b16 %v116
    %v313 = vunpack.c.h.b16 %v116
    %v314 = vunpack.c.l.b16 %v117
    %v315 = vunpack.c.h.b16 %v117
    %v316 = vunpack.c.l.b16 %v118
    %v317 = vunpack.c.h.b16 %v118
    %v318 = vunpack.c.l.b16 %v119
    %v319 = vunpack.c.h.b16 %v119
    %v320 = vunpack.c.l.b16 %v120
    %v321 = vunpack.c.h.b16 %v120
    %v322 = vunpack.c.l.b16 %v121
    %v323 = vunpack.c.h.b16 %v121
    %v324 = vunpack.c.l.b16 %v122
    %v325 = vunpack.c.h.b16 %v122
    %v326 = vunpack.c.l.b16 %v123
    %v327 = vunpack.c.h.b16 %v123
    %v328 = vunpack.c.l.b16 %v124
    %v329 = vunpack.c.h.b16 %v124
    %v330 = vunpack.c.l.b16 %v125
    %v331 = vunpack.c.h.b16 %v125
    %v332 = vunpack.c.l.b16 %v126
    %v333 = vunpack.c.h.b16 %v126
    %v334 = vunpack.c.l.b16 %v127
    %v335 = vunpack.c.h.b16 %v127
    %v336 = vunpack.c.l.b16 %v128
    %v337 = vunpack.c.h.b16 %v128
    %v338 = vunpack.c.l.b16 %v129
    %v339 = vunpack.c.h.b16 %v129
    %v340 = vunpack.c.l.b16 %v130
    %v341 = vunpack.c.h.b16 %v130
    %v342 = vunpack.c.l.b16 %v131
    %v343 = vunpack.c.h.b16 %v131
    %v344 = vunpack.c.l.b16 %v132
    %v345 = vunpack.c.h.b16 %v132
    %v346 = vunpack.c.l.b16 %v133
    %v347 = vunpack.c.h.b16 %v133
    %v348 = vpack.c.b16 %v288, %v284
    %v349 = vpack.c.b16 %v289, %v285
    %v350 = vpack.c.b16 %v290, %v286
    %v351 = vpack.c.b16 %v291, %v287
    %v352 = vpack.c.b16 %v296, %v292
    %v353 = vpack.c.b16 %v297, %v293
    %v354 = vpack.c.b16 %v298, %v294
    %v355 = vpack.c.b16 %v299, %v295
    %v356 = vpack.c.b16 %v304, %v300
    %v357 = vpack.c.b16 %v305, %v301
    %v358 = vpack.c.b16 %v306, %v302
    %v359 = vpack.c.b16 %v307, %v303
    %v360 = vpack.c.b16 %v312, %v308
    %v361 = vpack.c.b16 %v313, %v309
    %v362 = vpack.c.b16 %v314, %v310
    %v363 = vpack.c.b16 %v315, %v311
    %v364 = vpack.c.b16 %v320, %v316
    %v365 = vpack.c.b16 %v321, %v317
    %v366 = vpack.c.b16 %v322, %v318
    %v367 = vpack.c.b16 %v323, %v319
    %v368 = vpack.c.b16 %v328, %v324
    %v369 = vpack.c.b16 %v329, %v325
    %v370 = vpack.c.b16 %v330, %v326
    %v371 = vpack.c.b16 %v331, %v327
    %v372 = vpack.c.b16 %v336, %v332
    %v373 = vpack.c.b16 %v337, %v333
    %v374 = vpack.c.b16 %v338, %v334
    %v375 = vpack.c.b16 %v339, %v335
    %v376 = vpack.c.b16 %v344, %v340
    %v377 = vpack.c.b16 %v345, %v341
    %v378 = vpack.c.b16 %v346, %v342
    %v379 = vpack.c.b16 %v347, %v343
    %412 = vmatprep.subr.bf16.mxu0 %v349
    %413 = vmatpush1.bf16.msra.mxu0 %v348
    %414 = vmatprep.subr.bf16.mxu0 %v353
    %415 = vmatpush1.bf16.msra.mxu0 %v352
    %416 = vmatprep.subr.bf16.mxu0 %v357
    %417 = vmatpush1.bf16.msra.mxu0 %v356
    %418 = vmatprep.subr.bf16.mxu0 %v361
    %419 = vmatpush1.bf16.msra.mxu0 %v360
    %420 = vmatprep.subr.bf16.mxu0 %v365
    %421 = vmatpush1.bf16.msra.mxu0 %v364
    %422 = vmatprep.subr.bf16.mxu0 %v369
    %423 = vmatpush1.bf16.msra.mxu0 %v368
    %424 = vmatprep.subr.bf16.mxu0 %v373
    %425 = vmatpush1.bf16.msra.mxu0 %v372
    %426 = vmatprep.subr.bf16.mxu0 %v377
    %427 = vmatpush1.bf16.msra.mxu0 %v376
    %428 = vmatprep.subr.bf16.mxu0 0
    %429 = vmatpush1.bf16.msra.mxu0 0
    %430 = vmatprep.subr.bf16.mxu0 0
    %431 = vmatpush1.bf16.msra.mxu0 0
    %432 = vmatprep.subr.bf16.mxu0 0
    %433 = vmatpush1.bf16.msra.mxu0 0
    %434 = vmatprep.subr.bf16.mxu0 0
    %435 = vmatpush1.bf16.msra.mxu0 0
    %436 = vmatprep.subr.bf16.mxu0 0
    %437 = vmatpush1.bf16.msra.mxu0 0
    %438 = vmatprep.subr.bf16.mxu0 0
    %439 = vmatpush1.bf16.msra.mxu0 0
    %440 = vmatprep.subr.bf16.mxu0 0
    %441 = vmatpush1.bf16.msra.mxu0 0
    %442 = vmatprep.subr.bf16.mxu0 0
    %443 = vmatpush1.bf16.msra.mxu0 0
    %444 = vmatprep.mubr.bf16.mxu0 0
    %445 = vmatmul.mubr.bf16.gmra.mrb[0].mxu0 %v220
    %v446 = vpop.f32.mrb[0].mxu0
    %v447 = vadd.f32 %v139, %v446
    %v448 = vpop.f32.mrb[0].mxu0
    %v449 = vadd.f32 %v143, %v448
    %v450 = vpop.f32.mrb[0].mxu0
    %v451 = vadd.f32 %v139, %v450
    %v452 = vpop.f32.mrb[0].mxu0
    %v453 = vadd.f32 %v143, %v452
    %454 = vmatprep.mubr.bf16.mxu0 0
    %455 = vmatmul.mubr.bf16.gmra.mrb[0].mxu0 %v221
    %v456 = vpop.f32.mrb[0].mxu0
    %v457 = vadd.f32 %v139, %v456
    %v458 = vpop.f32.mrb[0].mxu0
    %v459 = vadd.f32 %v143, %v458
    %v460 = vpop.f32.mrb[0].mxu0
    %v461 = vadd.f32 %v139, %v460
    %v462 = vpop.f32.mrb[0].mxu0
    %v463 = vadd.f32 %v143, %v462
    %464 = vmatprep.mubr.bf16.mxu0 0
    %465 = vmatmul.mubr.bf16.gmra.mrb[0].mxu0 %v222
    %v466 = vpop.f32.mrb[0].mxu0
    %v467 = vadd.f32 %v139, %v466
    %v468 = vpop.f32.mrb[0].mxu0
    %v469 = vadd.f32 %v143, %v468
    %v470 = vpop.f32.mrb[0].mxu0
    %v471 = vadd.f32 %v139, %v470
    %v472 = vpop.f32.mrb[0].mxu0
    %v473 = vadd.f32 %v143, %v472
    %474 = vmatprep.mubr.bf16.mxu0 0
    %475 = vmatmul.mubr.bf16.gmra.mrb[0].mxu0 %v223
    %v476 = vpop.f32.mrb[0].mxu0
    %v477 = vadd.f32 %v139, %v476
    %v478 = vpop.f32.mrb[0].mxu0
    %v479 = vadd.f32 %v143, %v478
    %v480 = vpop.f32.mrb[0].mxu0
    %v481 = vadd.f32 %v139, %v480
    %v482 = vpop.f32.mrb[0].mxu0
    %v483 = vadd.f32 %v143, %v482
    %484 = vmatprep.mubr.bf16.mxu0 0
    %485 = vmatmul.mubr.bf16.gmra.mrb[0].mxu0 %v224
    %v486 = vpop.f32.mrb[0].mxu0
    %v487 = vadd.f32 %v139, %v486
    %v488 = vpop.f32.mrb[0].mxu0
    %v489 = vadd.f32 %v143, %v488
    %v490 = vpop.f32.mrb[0].mxu0
    %v491 = vadd.f32 %v139, %v490
    %v492 = vpop.f32.mrb[0].mxu0
    %v493 = vadd.f32 %v143, %v492
    %494 = vmatprep.mubr.bf16.mxu0 0
    %495 = vmatmul.mubr.bf16.gmra.mrb[0].mxu0 %v225
    %v496 = vpop.f32.mrb[0].mxu0
    %v497 = vadd.f32 %v139, %v496
    %v498 = vpop.f32.mrb[0].mxu0
    %v499 = vadd.f32 %v143, %v498
    %v500 = vpop.f32.mrb[0].mxu0
    %v501 = vadd.f32 %v139, %v500
    %v502 = vpop.f32.mrb[0].mxu0
    %v503 = vadd.f32 %v143, %v502
    %504 = vmatprep.mubr.bf16.mxu0 0
    %505 = vmatmul.mubr.bf16.gmra.mrb[0].mxu0 %v226
    %v506 = vpop.f32.mrb[0].mxu0
    %v507 = vadd.f32 %v139, %v506
    %v508 = vpop.f32.mrb[0].mxu0
    %v509 = vadd.f32 %v143, %v508
    %v510 = vpop.f32.mrb[0].mxu0
    %v511 = vadd.f32 %v139, %v510
    %v512 = vpop.f32.mrb[0].mxu0
    %v513 = vadd.f32 %v143, %v512
    %514 = vmatprep.mubr.bf16.mxu0 0
    %515 = vmatmul.mubr.bf16.gmra.mrb[0].mxu0 %v227
    %v516 = vpop.f32.mrb[0].mxu0
    %v517 = vadd.f32 %v139, %v516
    %v518 = vpop.f32.mrb[0].mxu0
    %v519 = vadd.f32 %v143, %v518
    %v520 = vpop.f32.mrb[0].mxu0
    %v521 = vadd.f32 %v139, %v520
    %v522 = vpop.f32.mrb[0].mxu0
    %v523 = vadd.f32 %v143, %v522
    %524 = vmatprep.mubr.bf16.mxu0 0
    %525 = vmatmul.mubr.bf16.gmra.mrb[0].mxu0 %v228
    %v526 = vpop.f32.mrb[0].mxu0
    %v527 = vadd.f32 %v139, %v526
    %v528 = vpop.f32.mrb[0].mxu0
    %v529 = vadd.f32 %v143, %v528
    %v530 = vpop.f32.mrb[0].mxu0
    %v531 = vadd.f32 %v139, %v530
    %v532 = vpop.f32.mrb[0].mxu0
    %v533 = vadd.f32 %v143, %v532
    %534 = vmatprep.mubr.bf16.mxu0 0
    %535 = vmatmul.mubr.bf16.gmra.mrb[0].mxu0 %v229
    %v536 = vpop.f32.mrb[0].mxu0
    %v537 = vadd.f32 %v139, %v536
    %v538 = vpop.f32.mrb[0].mxu0
    %v539 = vadd.f32 %v143, %v538
    %v540 = vpop.f32.mrb[0].mxu0
    %v541 = vadd.f32 %v139, %v540
    %v542 = vpop.f32.mrb[0].mxu0
    %v543 = vadd.f32 %v143, %v542
    %544 = vmatprep.mubr.bf16.mxu0 0
    %545 = vmatmul.mubr.bf16.gmra.mrb[0].mxu0 %v230
    %v546 = vpop.f32.mrb[0].mxu0
    %v547 = vadd.f32 %v139, %v546
    %v548 = vpop.f32.mrb[0].mxu0
    %v549 = vadd.f32 %v143, %v548
    %v550 = vpop.f32.mrb[0].mxu0
    %v551 = vadd.f32 %v139, %v550
    %v552 = vpop.f32.mrb[0].mxu0
    %v553 = vadd.f32 %v143, %v552
    %554 = vmatprep.mubr.bf16.mxu0 0
    %555 = vmatmul.mubr.bf16.gmra.mrb[0].mxu0 %v231
    %v556 = vpop.f32.mrb[0].mxu0
    %v557 = vadd.f32 %v139, %v556
    %v558 = vpop.f32.mrb[0].mxu0
    %v559 = vadd.f32 %v143, %v558
    %v560 = vpop.f32.mrb[0].mxu0
    %v561 = vadd.f32 %v139, %v560
    %v562 = vpop.f32.mrb[0].mxu0
    %v563 = vadd.f32 %v143, %v562
    %564 = vmatprep.mubr.bf16.mxu0 0
    %565 = vmatmul.mubr.bf16.gmra.mrb[0].mxu0 %v232
    %v566 = vpop.f32.mrb[0].mxu0
    %v567 = vadd.f32 %v139, %v566
    %v568 = vpop.f32.mrb[0].mxu0
    %v569 = vadd.f32 %v143, %v568
    %v570 = vpop.f32.mrb[0].mxu0
    %v571 = vadd.f32 %v139, %v570
    %v572 = vpop.f32.mrb[0].mxu0
    %v573 = vadd.f32 %v143, %v572
    %574 = vmatprep.mubr.bf16.mxu0 0
    %575 = vmatmul.mubr.bf16.gmra.mrb[0].mxu0 %v233
    %v576 = vpop.f32.mrb[0].mxu0
    %v577 = vadd.f32 %v139, %v576
    %v578 = vpop.f32.mrb[0].mxu0
    %v579 = vadd.f32 %v143, %v578
    %v580 = vpop.f32.mrb[0].mxu0
    %v581 = vadd.f32 %v139, %v580
    %v582 = vpop.f32.mrb[0].mxu0
    %v583 = vadd.f32 %v143, %v582
    %584 = vmatprep.mubr.bf16.mxu0 0
    %585 = vmatmul.mubr.bf16.gmra.mrb[0].mxu0 %v234
    %v586 = vpop.f32.mrb[0].mxu0
    %v587 = vadd.f32 %v139, %v586
    %v588 = vpop.f32.mrb[0].mxu0
    %v589 = vadd.f32 %v143, %v588
    %v590 = vpop.f32.mrb[0].mxu0
    %v591 = vadd.f32 %v139, %v590
    %v592 = vpop.f32.mrb[0].mxu0
    %v593 = vadd.f32 %v143, %v592
    %594 = vmatprep.mubr.bf16.mxu0 0
    %595 = vmatmul.mubr.bf16.gmra.mrb[0].mxu0 %v235
    %v596 = vpop.f32.mrb[0].mxu0
    %v597 = vadd.f32 %v139, %v596
    %v598 = vpop.f32.mrb[0].mxu0
    %v599 = vadd.f32 %v143, %v598
    %v600 = vpop.f32.mrb[0].mxu0
    %v601 = vadd.f32 %v139, %v600
    %v602 = vpop.f32.mrb[0].mxu0
    %v603 = vadd.f32 %v143, %v602
    %604 = vdwg.mxu0
    %605 = vmatprep.subr.bf16.mxu0 %v351
    %606 = vmatpush1.bf16.msra.mxu0 %v350
    %607 = vmatprep.subr.bf16.mxu0 %v355
    %608 = vmatpush1.bf16.msra.mxu0 %v354
    %609 = vmatprep.subr.bf16.mxu0 %v359
    %610 = vmatpush1.bf16.msra.mxu0 %v358
    %611 = vmatprep.subr.bf16.mxu0 %v363
    %612 = vmatpush1.bf16.msra.mxu0 %v362
    %613 = vmatprep.subr.bf16.mxu0 %v367
    %614 = vmatpush1.bf16.msra.mxu0 %v366
    %615 = vmatprep.subr.bf16.mxu0 %v371
    %616 = vmatpush1.bf16.msra.mxu0 %v370
    %617 = vmatprep.subr.bf16.mxu0 %v375
    %618 = vmatpush1.bf16.msra.mxu0 %v374
    %619 = vmatprep.subr.bf16.mxu0 %v379
    %620 = vmatpush1.bf16.msra.mxu0 %v378
    %621 = vmatprep.subr.bf16.mxu0 0
    %622 = vmatpush1.bf16.msra.mxu0 0
    %623 = vmatprep.subr.bf16.mxu0 0
    %624 = vmatpush1.bf16.msra.mxu0 0
    %625 = vmatprep.subr.bf16.mxu0 0
    %626 = vmatpush1.bf16.msra.mxu0 0
    %627 = vmatprep.subr.bf16.mxu0 0
    %628 = vmatpush1.bf16.msra.mxu0 0
    %629 = vmatprep.subr.bf16.mxu0 0
    %630 = vmatpush1.bf16.msra.mxu0 0
    %631 = vmatprep.subr.bf16.mxu0 0
    %632 = vmatpush1.bf16.msra.mxu0 0
    %633 = vmatprep.subr.bf16.mxu0 0
    %634 = vmatpush1.bf16.msra.mxu0 0
    %635 = vmatprep.subr.bf16.mxu0 0
    %636 = vmatpush1.bf16.msra.mxu0 0
    %637 = vmatprep.mubr.bf16.mxu0 0
    %638 = vmatmul.mubr.bf16.gmra.mrb[0].mxu0 %v220
    %v639 = vpop.f32.mrb[0].mxu0
    %v640 = vadd.f32 %v147, %v639
    %v641 = vpop.f32.mrb[0].mxu0
    %v642 = vadd.f32 %v151, %v641
    %v643 = vpop.f32.mrb[0].mxu0
    %v644 = vadd.f32 %v147, %v643
    %v645 = vpop.f32.mrb[0].mxu0
    %v646 = vadd.f32 %v151, %v645
    %647 = vmatprep.mubr.bf16.mxu0 0
    %648 = vmatmul.mubr.bf16.gmra.mrb[0].mxu0 %v221
    %v649 = vpop.f32.mrb[0].mxu0
    %v650 = vadd.f32 %v147, %v649
    %v651 = vpop.f32.mrb[0].mxu0
    %v652 = vadd.f32 %v151, %v651
    %v653 = vpop.f32.mrb[0].mxu0
    %v654 = vadd.f32 %v147, %v653
    %v655 = vpop.f32.mrb[0].mxu0
    %v656 = vadd.f32 %v151, %v655
    %657 = vmatprep.mubr.bf16.mxu0 0
    %658 = vmatmul.mubr.bf16.gmra.mrb[0].mxu0 %v222
    %v659 = vpop.f32.mrb[0].mxu0
    %v660 = vadd.f32 %v147, %v659
    %v661 = vpop.f32.mrb[0].mxu0
    %v662 = vadd.f32 %v151, %v661
    %v663 = vpop.f32.mrb[0].mxu0
    %v664 = vadd.f32 %v147, %v663
    %v665 = vpop.f32.mrb[0].mxu0
    %v666 = vadd.f32 %v151, %v665
    %667 = vmatprep.mubr.bf16.mxu0 0
    %668 = vmatmul.mubr.bf16.gmra.mrb[0].mxu0 %v223
    %v669 = vpop.f32.mrb[0].mxu0
    %v670 = vadd.f32 %v147, %v669
    %v671 = vpop.f32.mrb[0].mxu0
    %v672 = vadd.f32 %v151, %v671
    %v673 = vpop.f32.mrb[0].mxu0
    %v674 = vadd.f32 %v147, %v673
    %v675 = vpop.f32.mrb[0].mxu0
    %v676 = vadd.f32 %v151, %v675
    %677 = vmatprep.mubr.bf16.mxu0 0
    %678 = vmatmul.mubr.bf16.gmra.mrb[0].mxu0 %v224
    %v679 = vpop.f32.mrb[0].mxu0
    %v680 = vadd.f32 %v147, %v679
    %v681 = vpop.f32.mrb[0].mxu0
    %v682 = vadd.f32 %v151, %v681
    %v683 = vpop.f32.mrb[0].mxu0
    %v684 = vadd.f32 %v147, %v683
    %v685 = vpop.f32.mrb[0].mxu0
    %v686 = vadd.f32 %v151, %v685
    %687 = vmatprep.mubr.bf16.mxu0 0
    %688 = vmatmul.mubr.bf16.gmra.mrb[0].mxu0 %v225
    %v689 = vpop.f32.mrb[0].mxu0
    %v690 = vadd.f32 %v147, %v689
    %v691 = vpop.f32.mrb[0].mxu0
    %v692 = vadd.f32 %v151, %v691
    %v693 = vpop.f32.mrb[0].mxu0
    %v694 = vadd.f32 %v147, %v693
    %v695 = vpop.f32.mrb[0].mxu0
    %v696 = vadd.f32 %v151, %v695
    %697 = vmatprep.mubr.bf16.mxu0 0
    %698 = vmatmul.mubr.bf16.gmra.mrb[0].mxu0 %v226
    %v699 = vpop.f32.mrb[0].mxu0
    %v700 = vadd.f32 %v147, %v699
    %v701 = vpop.f32.mrb[0].mxu0
    %v702 = vadd.f32 %v151, %v701
    %v703 = vpop.f32.mrb[0].mxu0
    %v704 = vadd.f32 %v147, %v703
    %v705 = vpop.f32.mrb[0].mxu0
    %v706 = vadd.f32 %v151, %v705
    %707 = vmatprep.mubr.bf16.mxu0 0
    %708 = vmatmul.mubr.bf16.gmra.mrb[0].mxu0 %v227
    %v709 = vpop.f32.mrb[0].mxu0
    %v710 = vadd.f32 %v147, %v709
    %v711 = vpop.f32.mrb[0].mxu0
    %v712 = vadd.f32 %v151, %v711
    %v713 = vpop.f32.mrb[0].mxu0
    %v714 = vadd.f32 %v147, %v713
    %v715 = vpop.f32.mrb[0].mxu0
    %v716 = vadd.f32 %v151, %v715
    %717 = vmatprep.mubr.bf16.mxu0 0
    %718 = vmatmul.mubr.bf16.gmra.mrb[0].mxu0 %v228
    %v719 = vpop.f32.mrb[0].mxu0
    %v720 = vadd.f32 %v147, %v719
    %v721 = vpop.f32.mrb[0].mxu0
    %v722 = vadd.f32 %v151, %v721
    %v723 = vpop.f32.mrb[0].mxu0
    %v724 = vadd.f32 %v147, %v723
    %v725 = vpop.f32.mrb[0].mxu0
    %v726 = vadd.f32 %v151, %v725
    %727 = vmatprep.mubr.bf16.mxu0 0
    %728 = vmatmul.mubr.bf16.gmra.mrb[0].mxu0 %v229
    %v729 = vpop.f32.mrb[0].mxu0
    %v730 = vadd.f32 %v147, %v729
    %v731 = vpop.f32.mrb[0].mxu0
    %v732 = vadd.f32 %v151, %v731
    %v733 = vpop.f32.mrb[0].mxu0
    %v734 = vadd.f32 %v147, %v733
    %v735 = vpop.f32.mrb[0].mxu0
    %v736 = vadd.f32 %v151, %v735
    %737 = vmatprep.mubr.bf16.mxu0 0
    %738 = vmatmul.mubr.bf16.gmra.mrb[0].mxu0 %v230
    %v739 = vpop.f32.mrb[0].mxu0
    %v740 = vadd.f32 %v147, %v739
    %v741 = vpop.f32.mrb[0].mxu0
    %v742 = vadd.f32 %v151, %v741
    %v743 = vpop.f32.mrb[0].mxu0
    %v744 = vadd.f32 %v147, %v743
    %v745 = vpop.f32.mrb[0].mxu0
    %v746 = vadd.f32 %v151, %v745
    %747 = vmatprep.mubr.bf16.mxu0 0
    %748 = vmatmul.mubr.bf16.gmra.mrb[0].mxu0 %v231
    %v749 = vpop.f32.mrb[0].mxu0
    %v750 = vadd.f32 %v147, %v749
    %v751 = vpop.f32.mrb[0].mxu0
    %v752 = vadd.f32 %v151, %v751
    %v753 = vpop.f32.mrb[0].mxu0
    %v754 = vadd.f32 %v147, %v753
    %v755 = vpop.f32.mrb[0].mxu0
    %v756 = vadd.f32 %v151, %v755
    %757 = vmatprep.mubr.bf16.mxu0 0
    %758 = vmatmul.mubr.bf16.gmra.mrb[0].mxu0 %v232
    %v759 = vpop.f32.mrb[0].mxu0
    %v760 = vadd.f32 %v147, %v759
    %v761 = vpop.f32.mrb[0].mxu0
    %v762 = vadd.f32 %v151, %v761
    %v763 = vpop.f32.mrb[0].mxu0
    %v764 = vadd.f32 %v147, %v763
    %v765 = vpop.f32.mrb[0].mxu0
    %v766 = vadd.f32 %v151, %v765
    %767 = vmatprep.mubr.bf16.mxu0 0
    %768 = vmatmul.mubr.bf16.gmra.mrb[0].mxu0 %v233
    %v769 = vpop.f32.mrb[0].mxu0
    %v770 = vadd.f32 %v147, %v769
    %v771 = vpop.f32.mrb[0].mxu0
    %v772 = vadd.f32 %v151, %v771
    %v773 = vpop.f32.mrb[0].mxu0
    %v774 = vadd.f32 %v147, %v773
    %v775 = vpop.f32.mrb[0].mxu0
    %v776 = vadd.f32 %v151, %v775
    %777 = vmatprep.mubr.bf16.mxu0 0
    %778 = vmatmul.mubr.bf16.gmra.mrb[0].mxu0 %v234
    %v779 = vpop.f32.mrb[0].mxu0
    %v780 = vadd.f32 %v147, %v779
    %v781 = vpop.f32.mrb[0].mxu0
    %v782 = vadd.f32 %v151, %v781
    %v783 = vpop.f32.mrb[0].mxu0
    %v784 = vadd.f32 %v147, %v783
    %v785 = vpop.f32.mrb[0].mxu0
    %v786 = vadd.f32 %v151, %v785
    %787 = vmatprep.mubr.bf16.mxu0 0
    %788 = vmatmul.mubr.bf16.gmra.mrb[0].mxu0 %v235
    %v789 = vpop.f32.mrb[0].mxu0
    %v790 = vadd.f32 %v147, %v789
    %v791 = vpop.f32.mrb[0].mxu0
    %v792 = vadd.f32 %v151, %v791
    %v793 = vpop.f32.mrb[0].mxu0
    %v794 = vadd.f32 %v147, %v793
    %v795 = vpop.f32.mrb[0].mxu0
    %v796 = vadd.f32 %v151, %v795
    %797 = vdwg.mxu0
    %v798 = vmax.f32 %v447, 0.0
    %v799 = vmax.f32 %v449, 0.0
    %v800 = vmax.f32 %v640, 0.0
    %v801 = vmax.f32 %v642, 0.0
    %v802 = vmax.f32 %v451, 0.0
    %v803 = vmax.f32 %v453, 0.0
    %v804 = vmax.f32 %v644, 0.0
    %v805 = vmax.f32 %v646, 0.0
    %v806 = vmax.f32 %v457, 0.0
    %v807 = vmax.f32 %v459, 0.0
    %v808 = vmax.f32 %v650, 0.0
    %v809 = vmax.f32 %v652, 0.0
    %v810 = vmax.f32 %v461, 0.0
    %v811 = vmax.f32 %v463, 0.0
    %v812 = vmax.f32 %v654, 0.0
    %v813 = vmax.f32 %v656, 0.0
    %v814 = vmax.f32 %v467, 0.0
    %v815 = vmax.f32 %v469, 0.0
    %v816 = vmax.f32 %v660, 0.0
    %v817 = vmax.f32 %v662, 0.0
    %v818 = vmax.f32 %v471, 0.0
    %v819 = vmax.f32 %v473, 0.0
    %v820 = vmax.f32 %v664, 0.0
    %v821 = vmax.f32 %v666, 0.0
    %v822 = vmax.f32 %v477, 0.0
    %v823 = vmax.f32 %v479, 0.0
    %v824 = vmax.f32 %v670, 0.0
    %v825 = vmax.f32 %v672, 0.0
    %v826 = vmax.f32 %v481, 0.0
    %v827 = vmax.f32 %v483, 0.0
    %v828 = vmax.f32 %v674, 0.0
    %v829 = vmax.f32 %v676, 0.0
    %v830 = vmax.f32 %v487, 0.0
    %v831 = vmax.f32 %v489, 0.0
    %v832 = vmax.f32 %v680, 0.0
    %v833 = vmax.f32 %v682, 0.0
    %v834 = vmax.f32 %v491, 0.0
    %v835 = vmax.f32 %v493, 0.0
    %v836 = vmax.f32 %v684, 0.0
    %v837 = vmax.f32 %v686, 0.0
    %v838 = vmax.f32 %v497, 0.0
    %v839 = vmax.f32 %v499, 0.0
    %v840 = vmax.f32 %v690, 0.0
    %v841 = vmax.f32 %v692, 0.0
    %v842 = vmax.f32 %v501, 0.0
    %v843 = vmax.f32 %v503, 0.0
    %v844 = vmax.f32 %v694, 0.0
    %v845 = vmax.f32 %v696, 0.0
    %v846 = vmax.f32 %v507, 0.0
    %v847 = vmax.f32 %v509, 0.0
    %v848 = vmax.f32 %v700, 0.0
    %v849 = vmax.f32 %v702, 0.0
    %v850 = vmax.f32 %v511, 0.0
    %v851 = vmax.f32 %v513, 0.0
    %v852 = vmax.f32 %v704, 0.0
    %v853 = vmax.f32 %v706, 0.0
    %v854 = vmax.f32 %v517, 0.0
    %v855 = vmax.f32 %v519, 0.0
    %v856 = vmax.f32 %v710, 0.0
    %v857 = vmax.f32 %v712, 0.0
    %v858 = vmax.f32 %v521, 0.0
    %v859 = vmax.f32 %v523, 0.0
    %v860 = vmax.f32 %v714, 0.0
    %v861 = vmax.f32 %v716, 0.0
    %v862 = vmax.f32 %v527, 0.0
    %v863 = vmax.f32 %v529, 0.0
    %v864 = vmax.f32 %v720, 0.0
    %v865 = vmax.f32 %v722, 0.0
    %v866 = vmax.f32 %v531, 0.0
    %v867 = vmax.f32 %v533, 0.0
    %v868 = vmax.f32 %v724, 0.0
    %v869 = vmax.f32 %v726, 0.0
    %v870 = vmax.f32 %v537, 0.0
    %v871 = vmax.f32 %v539, 0.0
    %v872 = vmax.f32 %v730, 0.0
    %v873 = vmax.f32 %v732, 0.0
    %v874 = vmax.f32 %v541, 0.0
    %v875 = vmax.f32 %v543, 0.0
    %v876 = vmax.f32 %v734, 0.0
    %v877 = vmax.f32 %v736, 0.0
    %v878 = vmax.f32 %v547, 0.0
    %v879 = vmax.f32 %v549, 0.0
    %v880 = vmax.f32 %v740, 0.0
    %v881 = vmax.f32 %v742, 0.0
    %v882 = vmax.f32 %v551, 0.0
    %v883 = vmax.f32 %v553, 0.0
    %v884 = vmax.f32 %v744, 0.0
    %v885 = vmax.f32 %v746, 0.0
    %v886 = vmax.f32 %v557, 0.0
    %v887 = vmax.f32 %v559, 0.0
    %v888 = vmax.f32 %v750, 0.0
    %v889 = vmax.f32 %v752, 0.0
    %v890 = vmax.f32 %v561, 0.0
    %v891 = vmax.f32 %v563, 0.0
    %v892 = vmax.f32 %v754, 0.0
    %v893 = vmax.f32 %v756, 0.0
    %v894 = vmax.f32 %v567, 0.0
    %v895 = vmax.f32 %v569, 0.0
    %v896 = vmax.f32 %v760, 0.0
    %v897 = vmax.f32 %v762, 0.0
    %v898 = vmax.f32 %v571, 0.0
    %v899 = vmax.f32 %v573, 0.0
    %v900 = vmax.f32 %v764, 0.0
    %v901 = vmax.f32 %v766, 0.0
    %v902 = vmax.f32 %v577, 0.0
    %v903 = vmax.f32 %v579, 0.0
    %v904 = vmax.f32 %v770, 0.0
    %v905 = vmax.f32 %v772, 0.0
    %v906 = vmax.f32 %v581, 0.0
    %v907 = vmax.f32 %v583, 0.0
    %v908 = vmax.f32 %v774, 0.0
    %v909 = vmax.f32 %v776, 0.0
    %v910 = vmax.f32 %v587, 0.0
    %v911 = vmax.f32 %v589, 0.0
    %v912 = vmax.f32 %v780, 0.0
    %v913 = vmax.f32 %v782, 0.0
    %v914 = vmax.f32 %v591, 0.0
    %v915 = vmax.f32 %v593, 0.0
    %v916 = vmax.f32 %v784, 0.0
    %v917 = vmax.f32 %v786, 0.0
    %v918 = vmax.f32 %v597, 0.0
    %v919 = vmax.f32 %v599, 0.0
    %v920 = vmax.f32 %v790, 0.0
    %v921 = vmax.f32 %v792, 0.0
    %v922 = vmax.f32 %v601, 0.0
    %v923 = vmax.f32 %v603, 0.0
    %v924 = vmax.f32 %v794, 0.0
    %v925 = vmax.f32 %v796, 0.0
    %v926 = vpack.c.bf16 %v802, %v798
    %v927 = vpack.c.bf16 %v803, %v799
    %v928 = vpack.c.bf16 %v804, %v800
    %v929 = vpack.c.bf16 %v805, %v801
    %v930 = vpack.c.bf16 %v810, %v806
    %v931 = vpack.c.bf16 %v811, %v807
    %v932 = vpack.c.bf16 %v812, %v808
    %v933 = vpack.c.bf16 %v813, %v809
    %v934 = vpack.c.bf16 %v818, %v814
    %v935 = vpack.c.bf16 %v819, %v815
    %v936 = vpack.c.bf16 %v820, %v816
    %v937 = vpack.c.bf16 %v821, %v817
    %v938 = vpack.c.bf16 %v826, %v822
    %v939 = vpack.c.bf16 %v827, %v823
    %v940 = vpack.c.bf16 %v828, %v824
    %v941 = vpack.c.bf16 %v829, %v825
    %v942 = vpack.c.bf16 %v834, %v830
    %v943 = vpack.c.bf16 %v835, %v831
    %v944 = vpack.c.bf16 %v836, %v832
    %v945 = vpack.c.bf16 %v837, %v833
    %v946 = vpack.c.bf16 %v842, %v838
    %v947 = vpack.c.bf16 %v843, %v839
    %v948 = vpack.c.bf16 %v844, %v840
    %v949 = vpack.c.bf16 %v845, %v841
    %v950 = vpack.c.bf16 %v850, %v846
    %v951 = vpack.c.bf16 %v851, %v847
    %v952 = vpack.c.bf16 %v852, %v848
    %v953 = vpack.c.bf16 %v853, %v849
    %v954 = vpack.c.bf16 %v858, %v854
    %v955 = vpack.c.bf16 %v859, %v855
    %v956 = vpack.c.bf16 %v860, %v856
    %v957 = vpack.c.bf16 %v861, %v857
    %v958 = vpack.c.bf16 %v866, %v862
    %v959 = vpack.c.bf16 %v867, %v863
    %v960 = vpack.c.bf16 %v868, %v864
    %v961 = vpack.c.bf16 %v869, %v865
    %v962 = vpack.c.bf16 %v874, %v870
    %v963 = vpack.c.bf16 %v875, %v871
    %v964 = vpack.c.bf16 %v876, %v872
    %v965 = vpack.c.bf16 %v877, %v873
    %v966 = vpack.c.bf16 %v882, %v878
    %v967 = vpack.c.bf16 %v883, %v879
    %v968 = vpack.c.bf16 %v884, %v880
    %v969 = vpack.c.bf16 %v885, %v881
    %v970 = vpack.c.bf16 %v890, %v886
    %v971 = vpack.c.bf16 %v891, %v887
    %v972 = vpack.c.bf16 %v892, %v888
    %v973 = vpack.c.bf16 %v893, %v889
    %v974 = vpack.c.bf16 %v898, %v894
    %v975 = vpack.c.bf16 %v899, %v895
    %v976 = vpack.c.bf16 %v900, %v896
    %v977 = vpack.c.bf16 %v901, %v897
    %v978 = vpack.c.bf16 %v906, %v902
    %v979 = vpack.c.bf16 %v907, %v903
    %v980 = vpack.c.bf16 %v908, %v904
    %v981 = vpack.c.bf16 %v909, %v905
    %v982 = vpack.c.bf16 %v914, %v910
    %v983 = vpack.c.bf16 %v915, %v911
    %v984 = vpack.c.bf16 %v916, %v912
    %v985 = vpack.c.bf16 %v917, %v913
    %v986 = vpack.c.bf16 %v922, %v918
    %v987 = vpack.c.bf16 %v923, %v919
    %v988 = vpack.c.bf16 %v924, %v920
    %v989 = vpack.c.bf16 %v925, %v921
    %v990 = vld [vmem:[#allocation8] sm:$0xff]
    %v991 = vld [vmem:[#allocation8 + $0x8] sm:$0xff]
    %v992 = vld [vmem:[#allocation8 + $0x10] sm:$0xff]
    %v993 = vld [vmem:[#allocation8 + $0x18] sm:$0xff]
    %v994 = vld [vmem:[#allocation8 + $0x20] sm:$0xff]
    %v995 = vld [vmem:[#allocation8 + $0x28] sm:$0xff]
    %v996 = vld [vmem:[#allocation8 + $0x30] sm:$0xff]
    %v997 = vld [vmem:[#allocation8 + $0x38] sm:$0xff]
    %v998 = vld [vmem:[#allocation8 + $0x40] sm:$0xff]
    %v999 = vld [vmem:[#allocation8 + $0x48] sm:$0xff]
    %v1000 = vld [vmem:[#allocation8 + $0x50] sm:$0xff]
    %v1001 = vld [vmem:[#allocation8 + $0x58] sm:$0xff]
    %v1002 = vld [vmem:[#allocation8 + $0x60] sm:$0xff]
    %v1003 = vld [vmem:[#allocation8 + $0x68] sm:$0xff]
    %v1004 = vld [vmem:[#allocation8 + $0x70] sm:$0xff]
    %v1005 = vld [vmem:[#allocation8 + $0x78] sm:$0xff]
    %v1006 = vld [vmem:[#allocation8 + $0x80] sm:$0xff]
    %v1007 = vld [vmem:[#allocation8 + $0x88] sm:$0xff]
    %v1008 = vld [vmem:[#allocation8 + $0x90] sm:$0xff]
    %v1009 = vld [vmem:[#allocation8 + $0x98] sm:$0xff]
    %v1010 = vld [vmem:[#allocation8 + $0xa0] sm:$0xff]
    %v1011 = vld [vmem:[#allocation8 + $0xa8] sm:$0xff]
    %v1012 = vld [vmem:[#allocation8 + $0xb0] sm:$0xff]
    %v1013 = vld [vmem:[#allocation8 + $0xb8] sm:$0xff]
    %v1014 = vld [vmem:[#allocation8 + $0xc0] sm:$0xff]
    %v1015 = vld [vmem:[#allocation8 + $0xc8] sm:$0xff]
    %v1016 = vld [vmem:[#allocation8 + $0xd0] sm:$0xff]
    %v1017 = vld [vmem:[#allocation8 + $0xd8] sm:$0xff]
    %v1018 = vld [vmem:[#allocation8 + $0xe0] sm:$0xff]
    %v1019 = vld [vmem:[#allocation8 + $0xe8] sm:$0xff]
    %v1020 = vld [vmem:[#allocation8 + $0xf0] sm:$0xff]
    %v1021 = vld [vmem:[#allocation8 + $0xf8] sm:$0xff]
    %v1022 = vld [vmem:[#allocation8 + $0x100] sm:$0xff]
    %v1023 = vld [vmem:[#allocation8 + $0x108] sm:$0xff]
    %v1024 = vld [vmem:[#allocation8 + $0x110] sm:$0xff]
    %v1025 = vld [vmem:[#allocation8 + $0x118] sm:$0xff]
    %v1026 = vld [vmem:[#allocation8 + $0x120] sm:$0xff]
    %v1027 = vld [vmem:[#allocation8 + $0x128] sm:$0xff]
    %v1028 = vld [vmem:[#allocation8 + $0x130] sm:$0xff]
    %v1029 = vld [vmem:[#allocation8 + $0x138] sm:$0xff]
    %v1030 = vld [vmem:[#allocation8 + $0x140] sm:$0xff]
    %v1031 = vld [vmem:[#allocation8 + $0x148] sm:$0xff]
    %v1032 = vld [vmem:[#allocation8 + $0x150] sm:$0xff]
    %v1033 = vld [vmem:[#allocation8 + $0x158] sm:$0xff]
    %v1034 = vld [vmem:[#allocation8 + $0x160] sm:$0xff]
    %v1035 = vld [vmem:[#allocation8 + $0x168] sm:$0xff]
    %v1036 = vld [vmem:[#allocation8 + $0x170] sm:$0xff]
    %v1037 = vld [vmem:[#allocation8 + $0x178] sm:$0xff]
    %v1038 = vld [vmem:[#allocation8 + $0x180] sm:$0xff]
    %v1039 = vld [vmem:[#allocation8 + $0x188] sm:$0xff]
    %v1040 = vld [vmem:[#allocation8 + $0x190] sm:$0xff]
    %v1041 = vld [vmem:[#allocation8 + $0x198] sm:$0xff]
    %v1042 = vld [vmem:[#allocation8 + $0x1a0] sm:$0xff]
    %v1043 = vld [vmem:[#allocation8 + $0x1a8] sm:$0xff]
    %v1044 = vld [vmem:[#allocation8 + $0x1b0] sm:$0xff]
    %v1045 = vld [vmem:[#allocation8 + $0x1b8] sm:$0xff]
    %v1046 = vld [vmem:[#allocation8 + $0x1c0] sm:$0xff]
    %v1047 = vld [vmem:[#allocation8 + $0x1c8] sm:$0xff]
    %v1048 = vld [vmem:[#allocation8 + $0x1d0] sm:$0xff]
    %v1049 = vld [vmem:[#allocation8 + $0x1d8] sm:$0xff]
    %v1050 = vld [vmem:[#allocation8 + $0x1e0] sm:$0xff]
    %v1051 = vld [vmem:[#allocation8 + $0x1e8] sm:$0xff]
    %v1052 = vld [vmem:[#allocation8 + $0x1f0] sm:$0xff]
    %v1053 = vld [vmem:[#allocation8 + $0x1f8] sm:$0xff]
    %v1054 = vld [vmem:[#allocation8 + $0x200] sm:$0xff]
    %v1055 = vld [vmem:[#allocation8 + $0x208] sm:$0xff]
    %v1056 = vld [vmem:[#allocation8 + $0x210] sm:$0xff]
    %v1057 = vld [vmem:[#allocation8 + $0x218] sm:$0xff]
    %v1058 = vld [vmem:[#allocation8 + $0x220] sm:$0xff]
    %v1059 = vld [vmem:[#allocation8 + $0x228] sm:$0xff]
    %v1060 = vld [vmem:[#allocation8 + $0x230] sm:$0xff]
    %v1061 = vld [vmem:[#allocation8 + $0x238] sm:$0xff]
    %v1062 = vld [vmem:[#allocation8 + $0x240] sm:$0xff]
    %v1063 = vld [vmem:[#allocation8 + $0x248] sm:$0xff]
    %v1064 = vld [vmem:[#allocation8 + $0x250] sm:$0xff]
    %v1065 = vld [vmem:[#allocation8 + $0x258] sm:$0xff]
    %v1066 = vld [vmem:[#allocation8 + $0x260] sm:$0xff]
    %v1067 = vld [vmem:[#allocation8 + $0x268] sm:$0xff]
    %v1068 = vld [vmem:[#allocation8 + $0x270] sm:$0xff]
    %v1069 = vld [vmem:[#allocation8 + $0x278] sm:$0xff]
    %v1070 = vld [vmem:[#allocation8 + $0x280] sm:$0xff]
    %v1071 = vld [vmem:[#allocation8 + $0x288] sm:$0xff]
    %v1072 = vld [vmem:[#allocation8 + $0x290] sm:$0xff]
    %v1073 = vld [vmem:[#allocation8 + $0x298] sm:$0xff]
    %v1074 = vld [vmem:[#allocation8 + $0x2a0] sm:$0xff]
    %v1075 = vld [vmem:[#allocation8 + $0x2a8] sm:$0xff]
    %v1076 = vld [vmem:[#allocation8 + $0x2b0] sm:$0xff]
    %v1077 = vld [vmem:[#allocation8 + $0x2b8] sm:$0xff]
    %v1078 = vld [vmem:[#allocation8 + $0x2c0] sm:$0xff]
    %v1079 = vld [vmem:[#allocation8 + $0x2c8] sm:$0xff]
    %v1080 = vld [vmem:[#allocation8 + $0x2d0] sm:$0xff]
    %v1081 = vld [vmem:[#allocation8 + $0x2d8] sm:$0xff]
    %v1082 = vld [vmem:[#allocation8 + $0x2e0] sm:$0xff]
    %v1083 = vld [vmem:[#allocation8 + $0x2e8] sm:$0xff]
    %v1084 = vld [vmem:[#allocation8 + $0x2f0] sm:$0xff]
    %v1085 = vld [vmem:[#allocation8 + $0x2f8] sm:$0xff]
    %v1086 = vld [vmem:[#allocation8 + $0x300] sm:$0xff]
    %v1087 = vld [vmem:[#allocation8 + $0x308] sm:$0xff]
    %v1088 = vld [vmem:[#allocation8 + $0x310] sm:$0xff]
    %v1089 = vld [vmem:[#allocation8 + $0x318] sm:$0xff]
    %v1090 = vld [vmem:[#allocation8 + $0x320] sm:$0xff]
    %v1091 = vld [vmem:[#allocation8 + $0x328] sm:$0xff]
    %v1092 = vld [vmem:[#allocation8 + $0x330] sm:$0xff]
    %v1093 = vld [vmem:[#allocation8 + $0x338] sm:$0xff]
    %v1094 = vld [vmem:[#allocation8 + $0x340] sm:$0xff]
    %v1095 = vld [vmem:[#allocation8 + $0x348] sm:$0xff]
    %v1096 = vld [vmem:[#allocation8 + $0x350] sm:$0xff]
    %v1097 = vld [vmem:[#allocation8 + $0x358] sm:$0xff]
    %v1098 = vld [vmem:[#allocation8 + $0x360] sm:$0xff]
    %v1099 = vld [vmem:[#allocation8 + $0x368] sm:$0xff]
    %v1100 = vld [vmem:[#allocation8 + $0x370] sm:$0xff]
    %v1101 = vld [vmem:[#allocation8 + $0x378] sm:$0xff]
    %v1102 = vld [vmem:[#allocation8 + $0x380] sm:$0xff]
    %v1103 = vld [vmem:[#allocation8 + $0x388] sm:$0xff]
    %v1104 = vld [vmem:[#allocation8 + $0x390] sm:$0xff]
    %v1105 = vld [vmem:[#allocation8 + $0x398] sm:$0xff]
    %v1106 = vld [vmem:[#allocation8 + $0x3a0] sm:$0xff]
    %v1107 = vld [vmem:[#allocation8 + $0x3a8] sm:$0xff]
    %v1108 = vld [vmem:[#allocation8 + $0x3b0] sm:$0xff]
    %v1109 = vld [vmem:[#allocation8 + $0x3b8] sm:$0xff]
    %v1110 = vld [vmem:[#allocation8 + $0x3c0] sm:$0xff]
    %v1111 = vld [vmem:[#allocation8 + $0x3c8] sm:$0xff]
    %v1112 = vld [vmem:[#allocation8 + $0x3d0] sm:$0xff]
    %v1113 = vld [vmem:[#allocation8 + $0x3d8] sm:$0xff]
    %v1114 = vld [vmem:[#allocation8 + $0x3e0] sm:$0xff]
    %v1115 = vld [vmem:[#allocation8 + $0x3e8] sm:$0xff]
    %v1116 = vld [vmem:[#allocation8 + $0x3f0] sm:$0xff]
    %v1117 = vld [vmem:[#allocation8 + $0x3f8] sm:$0xff]
    %v1118 = vld [vmem:[%s4] sm:$0xf]
    %v1120 = vlaneseq
    %v1121 = vshrl.u32 %v1120, 7
    %v1122 = vsub.s32 0, %v1121
    %v1123 = vrot.slane %v1118, %v1122
    %v1124 = vlaneseq
    %v1125 = vshrl.u32 %v1124, 7
    %v1126 = vsub.s32 1, %v1125
    %v1127 = vrot.slane %v1118, %v1126
    %v1128 = vlaneseq
    %v1129 = vshrl.u32 %v1128, 7
    %v1130 = vsub.s32 2, %v1129
    %v1131 = vrot.slane %v1118, %v1130
    %v1132 = vlaneseq
    %v1133 = vshrl.u32 %v1132, 7
    %v1134 = vsub.s32 3, %v1133
    %v1135 = vrot.slane %v1118, %v1134
    %v1268 = vunpack.c.l.b16 %v990
    %v1269 = vunpack.c.h.b16 %v990
    %v1270 = vunpack.c.l.b16 %v991
    %v1271 = vunpack.c.h.b16 %v991
    %v1272 = vunpack.c.l.b16 %v992
    %v1273 = vunpack.c.h.b16 %v992
    %v1274 = vunpack.c.l.b16 %v993
    %v1275 = vunpack.c.h.b16 %v993
    %v1276 = vunpack.c.l.b16 %v994
    %v1277 = vunpack.c.h.b16 %v994
    %v1278 = vunpack.c.l.b16 %v995
    %v1279 = vunpack.c.h.b16 %v995
    %v1280 = vunpack.c.l.b16 %v996
    %v1281 = vunpack.c.h.b16 %v996
    %v1282 = vunpack.c.l.b16 %v997
    %v1283 = vunpack.c.h.b16 %v997
    %v1284 = vunpack.c.l.b16 %v998
    %v1285 = vunpack.c.h.b16 %v998
    %v1286 = vunpack.c.l.b16 %v999
    %v1287 = vunpack.c.h.b16 %v999
    %v1288 = vunpack.c.l.b16 %v1000
    %v1289 = vunpack.c.h.b16 %v1000
    %v1290 = vunpack.c.l.b16 %v1001
    %v1291 = vunpack.c.h.b16 %v1001
    %v1292 = vunpack.c.l.b16 %v1002
    %v1293 = vunpack.c.h.b16 %v1002
    %v1294 = vunpack.c.l.b16 %v1003
    %v1295 = vunpack.c.h.b16 %v1003
    %v1296 = vunpack.c.l.b16 %v1004
    %v1297 = vunpack.c.h.b16 %v1004
    %v1298 = vunpack.c.l.b16 %v1005
    %v1299 = vunpack.c.h.b16 %v1005
    %v1300 = vunpack.c.l.b16 %v1006
    %v1301 = vunpack.c.h.b16 %v1006
    %v1302 = vunpack.c.l.b16 %v1007
    %v1303 = vunpack.c.h.b16 %v1007
    %v1304 = vunpack.c.l.b16 %v1008
    %v1305 = vunpack.c.h.b16 %v1008
    %v1306 = vunpack.c.l.b16 %v1009
    %v1307 = vunpack.c.h.b16 %v1009
    %v1308 = vunpack.c.l.b16 %v1010
    %v1309 = vunpack.c.h.b16 %v1010
    %v1310 = vunpack.c.l.b16 %v1011
    %v1311 = vunpack.c.h.b16 %v1011
    %v1312 = vunpack.c.l.b16 %v1012
    %v1313 = vunpack.c.h.b16 %v1012
    %v1314 = vunpack.c.l.b16 %v1013
    %v1315 = vunpack.c.h.b16 %v1013
    %v1316 = vunpack.c.l.b16 %v1014
    %v1317 = vunpack.c.h.b16 %v1014
    %v1318 = vunpack.c.l.b16 %v1015
    %v1319 = vunpack.c.h.b16 %v1015
    %v1320 = vunpack.c.l.b16 %v1016
    %v1321 = vunpack.c.h.b16 %v1016
    %v1322 = vunpack.c.l.b16 %v1017
    %v1323 = vunpack.c.h.b16 %v1017
    %v1324 = vunpack.c.l.b16 %v1018
    %v1325 = vunpack.c.h.b16 %v1018
    %v1326 = vunpack.c.l.b16 %v1019
    %v1327 = vunpack.c.h.b16 %v1019
    %v1328 = vunpack.c.l.b16 %v1020
    %v1329 = vunpack.c.h.b16 %v1020
    %v1330 = vunpack.c.l.b16 %v1021
    %v1331 = vunpack.c.h.b16 %v1021
    %v1332 = vunpack.c.l.b16 %v1022
    %v1333 = vunpack.c.h.b16 %v1022
    %v1334 = vunpack.c.l.b16 %v1023
    %v1335 = vunpack.c.h.b16 %v1023
    %v1336 = vunpack.c.l.b16 %v1024
    %v1337 = vunpack.c.h.b16 %v1024
    %v1338 = vunpack.c.l.b16 %v1025
    %v1339 = vunpack.c.h.b16 %v1025
    %v1340 = vunpack.c.l.b16 %v1026
    %v1341 = vunpack.c.h.b16 %v1026
    %v1342 = vunpack.c.l.b16 %v1027
    %v1343 = vunpack.c.h.b16 %v1027
    %v1344 = vunpack.c.l.b16 %v1028
    %v1345 = vunpack.c.h.b16 %v1028
    %v1346 = vunpack.c.l.b16 %v1029
    %v1347 = vunpack.c.h.b16 %v1029
    %v1348 = vunpack.c.l.b16 %v1030
    %v1349 = vunpack.c.h.b16 %v1030
    %v1350 = vunpack.c.l.b16 %v1031
    %v1351 = vunpack.c.h.b16 %v1031
    %v1352 = vunpack.c.l.b16 %v1032
    %v1353 = vunpack.c.h.b16 %v1032
    %v1354 = vunpack.c.l.b16 %v1033
    %v1355 = vunpack.c.h.b16 %v1033
    %v1356 = vunpack.c.l.b16 %v1034
    %v1357 = vunpack.c.h.b16 %v1034
    %v1358 = vunpack.c.l.b16 %v1035
    %v1359 = vunpack.c.h.b16 %v1035
    %v1360 = vunpack.c.l.b16 %v1036
    %v1361 = vunpack.c.h.b16 %v1036
    %v1362 = vunpack.c.l.b16 %v1037
    %v1363 = vunpack.c.h.b16 %v1037
    %v1364 = vunpack.c.l.b16 %v1038
    %v1365 = vunpack.c.h.b16 %v1038
    %v1366 = vunpack.c.l.b16 %v1039
    %v1367 = vunpack.c.h.b16 %v1039
    %v1368 = vunpack.c.l.b16 %v1040
    %v1369 = vunpack.c.h.b16 %v1040
    %v1370 = vunpack.c.l.b16 %v1041
    %v1371 = vunpack.c.h.b16 %v1041
    %v1372 = vunpack.c.l.b16 %v1042
    %v1373 = vunpack.c.h.b16 %v1042
    %v1374 = vunpack.c.l.b16 %v1043
    %v1375 = vunpack.c.h.b16 %v1043
    %v1376 = vunpack.c.l.b16 %v1044
    %v1377 = vunpack.c.h.b16 %v1044
    %v1378 = vunpack.c.l.b16 %v1045
    %v1379 = vunpack.c.h.b16 %v1045
    %v1380 = vunpack.c.l.b16 %v1046
    %v1381 = vunpack.c.h.b16 %v1046
    %v1382 = vunpack.c.l.b16 %v1047
    %v1383 = vunpack.c.h.b16 %v1047
    %v1384 = vunpack.c.l.b16 %v1048
    %v1385 = vunpack.c.h.b16 %v1048
    %v1386 = vunpack.c.l.b16 %v1049
    %v1387 = vunpack.c.h.b16 %v1049
    %v1388 = vunpack.c.l.b16 %v1050
    %v1389 = vunpack.c.h.b16 %v1050
    %v1390 = vunpack.c.l.b16 %v1051
    %v1391 = vunpack.c.h.b16 %v1051
    %v1392 = vunpack.c.l.b16 %v1052
    %v1393 = vunpack.c.h.b16 %v1052
    %v1394 = vunpack.c.l.b16 %v1053
    %v1395 = vunpack.c.h.b16 %v1053
    %v1396 = vunpack.c.l.b16 %v1054
    %v1397 = vunpack.c.h.b16 %v1054
    %v1398 = vunpack.c.l.b16 %v1055
    %v1399 = vunpack.c.h.b16 %v1055
    %v1400 = vunpack.c.l.b16 %v1056
    %v1401 = vunpack.c.h.b16 %v1056
    %v1402 = vunpack.c.l.b16 %v1057
    %v1403 = vunpack.c.h.b16 %v1057
    %v1404 = vunpack.c.l.b16 %v1058
    %v1405 = vunpack.c.h.b16 %v1058
    %v1406 = vunpack.c.l.b16 %v1059
    %v1407 = vunpack.c.h.b16 %v1059
    %v1408 = vunpack.c.l.b16 %v1060
    %v1409 = vunpack.c.h.b16 %v1060
    %v1410 = vunpack.c.l.b16 %v1061
    %v1411 = vunpack.c.h.b16 %v1061
    %v1412 = vunpack.c.l.b16 %v1062
    %v1413 = vunpack.c.h.b16 %v1062
    %v1414 = vunpack.c.l.b16 %v1063
    %v1415 = vunpack.c.h.b16 %v1063
    %v1416 = vunpack.c.l.b16 %v1064
    %v1417 = vunpack.c.h.b16 %v1064
    %v1418 = vunpack.c.l.b16 %v1065
    %v1419 = vunpack.c.h.b16 %v1065
    %v1420 = vunpack.c.l.b16 %v1066
    %v1421 = vunpack.c.h.b16 %v1066
    %v1422 = vunpack.c.l.b16 %v1067
    %v1423 = vunpack.c.h.b16 %v1067
    %v1424 = vunpack.c.l.b16 %v1068
    %v1425 = vunpack.c.h.b16 %v1068
    %v1426 = vunpack.c.l.b16 %v1069
    %v1427 = vunpack.c.h.b16 %v1069
    %v1428 = vunpack.c.l.b16 %v1070
    %v1429 = vunpack.c.h.b16 %v1070
    %v1430 = vunpack.c.l.b16 %v1071
    %v1431 = vunpack.c.h.b16 %v1071
    %v1432 = vunpack.c.l.b16 %v1072
    %v1433 = vunpack.c.h.b16 %v1072
    %v1434 = vunpack.c.l.b16 %v1073
    %v1435 = vunpack.c.h.b16 %v1073
    %v1436 = vunpack.c.l.b16 %v1074
    %v1437 = vunpack.c.h.b16 %v1074
    %v1438 = vunpack.c.l.b16 %v1075
    %v1439 = vunpack.c.h.b16 %v1075
    %v1440 = vunpack.c.l.b16 %v1076
    %v1441 = vunpack.c.h.b16 %v1076
    %v1442 = vunpack.c.l.b16 %v1077
    %v1443 = vunpack.c.h.b16 %v1077
    %v1444 = vunpack.c.l.b16 %v1078
    %v1445 = vunpack.c.h.b16 %v1078
    %v1446 = vunpack.c.l.b16 %v1079
    %v1447 = vunpack.c.h.b16 %v1079
    %v1448 = vunpack.c.l.b16 %v1080
    %v1449 = vunpack.c.h.b16 %v1080
    %v1450 = vunpack.c.l.b16 %v1081
    %v1451 = vunpack.c.h.b16 %v1081
    %v1452 = vunpack.c.l.b16 %v1082
    %v1453 = vunpack.c.h.b16 %v1082
    %v1454 = vunpack.c.l.b16 %v1083
    %v1455 = vunpack.c.h.b16 %v1083
    %v1456 = vunpack.c.l.b16 %v1084
    %v1457 = vunpack.c.h.b16 %v1084
    %v1458 = vunpack.c.l.b16 %v1085
    %v1459 = vunpack.c.h.b16 %v1085
    %v1460 = vunpack.c.l.b16 %v1086
    %v1461 = vunpack.c.h.b16 %v1086
    %v1462 = vunpack.c.l.b16 %v1087
    %v1463 = vunpack.c.h.b16 %v1087
    %v1464 = vunpack.c.l.b16 %v1088
    %v1465 = vunpack.c.h.b16 %v1088
    %v1466 = vunpack.c.l.b16 %v1089
    %v1467 = vunpack.c.h.b16 %v1089
    %v1468 = vunpack.c.l.b16 %v1090
    %v1469 = vunpack.c.h.b16 %v1090
    %v1470 = vunpack.c.l.b16 %v1091
    %v1471 = vunpack.c.h.b16 %v1091
    %v1472 = vunpack.c.l.b16 %v1092
    %v1473 = vunpack.c.h.b16 %v1092
    %v1474 = vunpack.c.l.b16 %v1093
    %v1475 = vunpack.c.h.b16 %v1093
    %v1476 = vunpack.c.l.b16 %v1094
    %v1477 = vunpack.c.h.b16 %v1094
    %v1478 = vunpack.c.l.b16 %v1095
    %v1479 = vunpack.c.h.b16 %v1095
    %v1480 = vunpack.c.l.b16 %v1096
    %v1481 = vunpack.c.h.b16 %v1096
    %v1482 = vunpack.c.l.b16 %v1097
    %v1483 = vunpack.c.h.b16 %v1097
    %v1484 = vunpack.c.l.b16 %v1098
    %v1485 = vunpack.c.h.b16 %v1098
    %v1486 = vunpack.c.l.b16 %v1099
    %v1487 = vunpack.c.h.b16 %v1099
    %v1488 = vunpack.c.l.b16 %v1100
    %v1489 = vunpack.c.h.b16 %v1100
    %v1490 = vunpack.c.l.b16 %v1101
    %v1491 = vunpack.c.h.b16 %v1101
    %v1492 = vunpack.c.l.b16 %v1102
    %v1493 = vunpack.c.h.b16 %v1102
    %v1494 = vunpack.c.l.b16 %v1103
    %v1495 = vunpack.c.h.b16 %v1103
    %v1496 = vunpack.c.l.b16 %v1104
    %v1497 = vunpack.c.h.b16 %v1104
    %v1498 = vunpack.c.l.b16 %v1105
    %v1499 = vunpack.c.h.b16 %v1105
    %v1500 = vunpack.c.l.b16 %v1106
    %v1501 = vunpack.c.h.b16 %v1106
    %v1502 = vunpack.c.l.b16 %v1107
    %v1503 = vunpack.c.h.b16 %v1107
    %v1504 = vunpack.c.l.b16 %v1108
    %v1505 = vunpack.c.h.b16 %v1108
    %v1506 = vunpack.c.l.b16 %v1109
    %v1507 = vunpack.c.h.b16 %v1109
    %v1508 = vunpack.c.l.b16 %v1110
    %v1509 = vunpack.c.h.b16 %v1110
    %v1510 = vunpack.c.l.b16 %v1111
    %v1511 = vunpack.c.h.b16 %v1111
    %v1512 = vunpack.c.l.b16 %v1112
    %v1513 = vunpack.c.h.b16 %v1112
    %v1514 = vunpack.c.l.b16 %v1113
    %v1515 = vunpack.c.h.b16 %v1113
    %v1516 = vunpack.c.l.b16 %v1114
    %v1517 = vunpack.c.h.b16 %v1114
    %v1518 = vunpack.c.l.b16 %v1115
    %v1519 = vunpack.c.h.b16 %v1115
    %v1520 = vunpack.c.l.b16 %v1116
    %v1521 = vunpack.c.h.b16 %v1116
    %v1522 = vunpack.c.l.b16 %v1117
    %v1523 = vunpack.c.h.b16 %v1117
    %v1524 = vpack.c.b16 %v1272, %v1268
    %v1525 = vpack.c.b16 %v1273, %v1269
    %v1526 = vpack.c.b16 %v1274, %v1270
    %v1527 = vpack.c.b16 %v1275, %v1271
    %v1528 = vpack.c.b16 %v1280, %v1276
    %v1529 = vpack.c.b16 %v1281, %v1277
    %v1530 = vpack.c.b16 %v1282, %v1278
    %v1531 = vpack.c.b16 %v1283, %v1279
    %v1532 = vpack.c.b16 %v1288, %v1284
    %v1533 = vpack.c.b16 %v1289, %v1285
    %v1534 = vpack.c.b16 %v1290, %v1286
    %v1535 = vpack.c.b16 %v1291, %v1287
    %v1536 = vpack.c.b16 %v1296, %v1292
    %v1537 = vpack.c.b16 %v1297, %v1293
    %v1538 = vpack.c.b16 %v1298, %v1294
    %v1539 = vpack.c.b16 %v1299, %v1295
    %v1540 = vpack.c.b16 %v1304, %v1300
    %v1541 = vpack.c.b16 %v1305, %v1301
    %v1542 = vpack.c.b16 %v1306, %v1302
    %v1543 = vpack.c.b16 %v1307, %v1303
    %v1544 = vpack.c.b16 %v1312, %v1308
    %v1545 = vpack.c.b16 %v1313, %v1309
    %v1546 = vpack.c.b16 %v1314, %v1310
    %v1547 = vpack.c.b16 %v1315, %v1311
    %v1548 = vpack.c.b16 %v1320, %v1316
    %v1549 = vpack.c.b16 %v1321, %v1317
    %v1550 = vpack.c.b16 %v1322, %v1318
    %v1551 = vpack.c.b16 %v1323, %v1319
    %v1552 = vpack.c.b16 %v1328, %v1324
    %v1553 = vpack.c.b16 %v1329, %v1325
    %v1554 = vpack.c.b16 %v1330, %v1326
    %v1555 = vpack.c.b16 %v1331, %v1327
    %v1556 = vpack.c.b16 %v1336, %v1332
    %v1557 = vpack.c.b16 %v1337, %v1333
    %v1558 = vpack.c.b16 %v1338, %v1334
    %v1559 = vpack.c.b16 %v1339, %v1335
    %v1560 = vpack.c.b16 %v1344, %v1340
    %v1561 = vpack.c.b16 %v1345, %v1341
    %v1562 = vpack.c.b16 %v1346, %v1342
    %v1563 = vpack.c.b16 %v1347, %v1343
    %v1564 = vpack.c.b16 %v1352, %v1348
    %v1565 = vpack.c.b16 %v1353, %v1349
    %v1566 = vpack.c.b16 %v1354, %v1350
    %v1567 = vpack.c.b16 %v1355, %v1351
    %v1568 = vpack.c.b16 %v1360, %v1356
    %v1569 = vpack.c.b16 %v1361, %v1357
    %v1570 = vpack.c.b16 %v1362, %v1358
    %v1571 = vpack.c.b16 %v1363, %v1359
    %v1572 = vpack.c.b16 %v1368, %v1364
    %v1573 = vpack.c.b16 %v1369, %v1365
    %v1574 = vpack.c.b16 %v1370, %v1366
    %v1575 = vpack.c.b16 %v1371, %v1367
    %v1576 = vpack.c.b16 %v1376, %v1372
    %v1577 = vpack.c.b16 %v1377, %v1373
    %v1578 = vpack.c.b16 %v1378, %v1374
    %v1579 = vpack.c.b16 %v1379, %v1375
    %v1580 = vpack.c.b16 %v1384, %v1380
    %v1581 = vpack.c.b16 %v1385, %v1381
    %v1582 = vpack.c.b16 %v1386, %v1382
    %v1583 = vpack.c.b16 %v1387, %v1383
    %v1584 = vpack.c.b16 %v1392, %v1388
    %v1585 = vpack.c.b16 %v1393, %v1389
    %v1586 = vpack.c.b16 %v1394, %v1390
    %v1587 = vpack.c.b16 %v1395, %v1391
    %v1588 = vpack.c.b16 %v1400, %v1396
    %v1589 = vpack.c.b16 %v1401, %v1397
    %v1590 = vpack.c.b16 %v1402, %v1398
    %v1591 = vpack.c.b16 %v1403, %v1399
    %v1592 = vpack.c.b16 %v1408, %v1404
    %v1593 = vpack.c.b16 %v1409, %v1405
    %v1594 = vpack.c.b16 %v1410, %v1406
    %v1595 = vpack.c.b16 %v1411, %v1407
    %v1596 = vpack.c.b16 %v1416, %v1412
    %v1597 = vpack.c.b16 %v1417, %v1413
    %v1598 = vpack.c.b16 %v1418, %v1414
    %v1599 = vpack.c.b16 %v1419, %v1415
    %v1600 = vpack.c.b16 %v1424, %v1420
    %v1601 = vpack.c.b16 %v1425, %v1421
    %v1602 = vpack.c.b16 %v1426, %v1422
    %v1603 = vpack.c.b16 %v1427, %v1423
    %v1604 = vpack.c.b16 %v1432, %v1428
    %v1605 = vpack.c.b16 %v1433, %v1429
    %v1606 = vpack.c.b16 %v1434, %v1430
    %v1607 = vpack.c.b16 %v1435, %v1431
    %v1608 = vpack.c.b16 %v1440, %v1436
    %v1609 = vpack.c.b16 %v1441, %v1437
    %v1610 = vpack.c.b16 %v1442, %v1438
    %v1611 = vpack.c.b16 %v1443, %v1439
    %v1612 = vpack.c.b16 %v1448, %v1444
    %v1613 = vpack.c.b16 %v1449, %v1445
    %v1614 = vpack.c.b16 %v1450, %v1446
    %v1615 = vpack.c.b16 %v1451, %v1447
    %v1616 = vpack.c.b16 %v1456, %v1452
    %v1617 = vpack.c.b16 %v1457, %v1453
    %v1618 = vpack.c.b16 %v1458, %v1454
    %v1619 = vpack.c.b16 %v1459, %v1455
    %v1620 = vpack.c.b16 %v1464, %v1460
    %v1621 = vpack.c.b16 %v1465, %v1461
    %v1622 = vpack.c.b16 %v1466, %v1462
    %v1623 = vpack.c.b16 %v1467, %v1463
    %v1624 = vpack.c.b16 %v1472, %v1468
    %v1625 = vpack.c.b16 %v1473, %v1469
    %v1626 = vpack.c.b16 %v1474, %v1470
    %v1627 = vpack.c.b16 %v1475, %v1471
    %v1628 = vpack.c.b16 %v1480, %v1476
    %v1629 = vpack.c.b16 %v1481, %v1477
    %v1630 = vpack.c.b16 %v1482, %v1478
    %v1631 = vpack.c.b16 %v1483, %v1479
    %v1632 = vpack.c.b16 %v1488, %v1484
    %v1633 = vpack.c.b16 %v1489, %v1485
    %v1634 = vpack.c.b16 %v1490, %v1486
    %v1635 = vpack.c.b16 %v1491, %v1487
    %v1636 = vpack.c.b16 %v1496, %v1492
    %v1637 = vpack.c.b16 %v1497, %v1493
    %v1638 = vpack.c.b16 %v1498, %v1494
    %v1639 = vpack.c.b16 %v1499, %v1495
    %v1640 = vpack.c.b16 %v1504, %v1500
    %v1641 = vpack.c.b16 %v1505, %v1501
    %v1642 = vpack.c.b16 %v1506, %v1502
    %v1643 = vpack.c.b16 %v1507, %v1503
    %v1644 = vpack.c.b16 %v1512, %v1508
    %v1645 = vpack.c.b16 %v1513, %v1509
    %v1646 = vpack.c.b16 %v1514, %v1510
    %v1647 = vpack.c.b16 %v1515, %v1511
    %v1648 = vpack.c.b16 %v1520, %v1516
    %v1649 = vpack.c.b16 %v1521, %v1517
    %v1650 = vpack.c.b16 %v1522, %v1518
    %v1651 = vpack.c.b16 %v1523, %v1519
    %1780 = vmatprep.subr.bf16.mxu0 %v1525
    %1781 = vmatpush1.bf16.msra.mxu0 %v1524
    %1782 = vmatprep.subr.bf16.mxu0 %v1529
    %1783 = vmatpush1.bf16.msra.mxu0 %v1528
    %1784 = vmatprep.subr.bf16.mxu0 %v1533
    %1785 = vmatpush1.bf16.msra.mxu0 %v1532
    %1786 = vmatprep.subr.bf16.mxu0 %v1537
    %1787 = vmatpush1.bf16.msra.mxu0 %v1536
    %1788 = vmatprep.subr.bf16.mxu0 %v1541
    %1789 = vmatpush1.bf16.msra.mxu0 %v1540
    %1790 = vmatprep.subr.bf16.mxu0 %v1545
    %1791 = vmatpush1.bf16.msra.mxu0 %v1544
    %1792 = vmatprep.subr.bf16.mxu0 %v1549
    %1793 = vmatpush1.bf16.msra.mxu0 %v1548
    %1794 = vmatprep.subr.bf16.mxu0 %v1553
    %1795 = vmatpush1.bf16.msra.mxu0 %v1552
    %1796 = vmatprep.subr.bf16.mxu0 %v1557
    %1797 = vmatpush1.bf16.msra.mxu0 %v1556
    %1798 = vmatprep.subr.bf16.mxu0 %v1561
    %1799 = vmatpush1.bf16.msra.mxu0 %v1560
    %1800 = vmatprep.subr.bf16.mxu0 %v1565
    %1801 = vmatpush1.bf16.msra.mxu0 %v1564
    %1802 = vmatprep.subr.bf16.mxu0 %v1569
    %1803 = vmatpush1.bf16.msra.mxu0 %v1568
    %1804 = vmatprep.subr.bf16.mxu0 %v1573
    %1805 = vmatpush1.bf16.msra.mxu0 %v1572
    %1806 = vmatprep.subr.bf16.mxu0 %v1577
    %1807 = vmatpush1.bf16.msra.mxu0 %v1576
    %1808 = vmatprep.subr.bf16.mxu0 %v1581
    %1809 = vmatpush1.bf16.msra.mxu0 %v1580
    %1810 = vmatprep.subr.bf16.mxu0 %v1585
    %1811 = vmatpush1.bf16.msra.mxu0 %v1584
    %1812 = vmatprep.mubr.bf16.mxu0 %v927
    %1813 = vmatmul.mubr.bf16.gmra.mrb[0].mxu0 %v926
    %v1814 = vpop.f32.mrb[0].mxu0
    %v1815 = vadd.f32 %v1123, %v1814
    %v1816 = vpop.f32.mrb[0].mxu0
    %v1817 = vadd.f32 %v1127, %v1816
    %v1818 = vpop.f32.mrb[0].mxu0
    %v1819 = vadd.f32 %v1123, %v1818
    %v1820 = vpop.f32.mrb[0].mxu0
    %v1821 = vadd.f32 %v1127, %v1820
    %1822 = vmatprep.mubr.bf16.mxu0 %v931
    %1823 = vmatmul.mubr.bf16.gmra.mrb[0].mxu0 %v930
    %v1824 = vpop.f32.mrb[0].mxu0
    %v1825 = vadd.f32 %v1123, %v1824
    %v1826 = vpop.f32.mrb[0].mxu0
    %v1827 = vadd.f32 %v1127, %v1826
    %v1828 = vpop.f32.mrb[0].mxu0
    %v1829 = vadd.f32 %v1123, %v1828
    %v1830 = vpop.f32.mrb[0].mxu0
    %v1831 = vadd.f32 %v1127, %v1830
    %1832 = vmatprep.mubr.bf16.mxu0 %v935
    %1833 = vmatmul.mubr.bf16.gmra.mrb[0].mxu0 %v934
    %v1834 = vpop.f32.mrb[0].mxu0
    %v1835 = vadd.f32 %v1123, %v1834
    %v1836 = vpop.f32.mrb[0].mxu0
    %v1837 = vadd.f32 %v1127, %v1836
    %v1838 = vpop.f32.mrb[0].mxu0
    %v1839 = vadd.f32 %v1123, %v1838
    %v1840 = vpop.f32.mrb[0].mxu0
    %v1841 = vadd.f32 %v1127, %v1840
    %1842 = vmatprep.mubr.bf16.mxu0 %v939
    %1843 = vmatmul.mubr.bf16.gmra.mrb[0].mxu0 %v938
    %v1844 = vpop.f32.mrb[0].mxu0
    %v1845 = vadd.f32 %v1123, %v1844
    %v1846 = vpop.f32.mrb[0].mxu0
    %v1847 = vadd.f32 %v1127, %v1846
    %v1848 = vpop.f32.mrb[0].mxu0
    %v1849 = vadd.f32 %v1123, %v1848
    %v1850 = vpop.f32.mrb[0].mxu0
    %v1851 = vadd.f32 %v1127, %v1850
    %1852 = vmatprep.mubr.bf16.mxu0 %v943
    %1853 = vmatmul.mubr.bf16.gmra.mrb[0].mxu0 %v942
    %v1854 = vpop.f32.mrb[0].mxu0
    %v1855 = vadd.f32 %v1123, %v1854
    %v1856 = vpop.f32.mrb[0].mxu0
    %v1857 = vadd.f32 %v1127, %v1856
    %v1858 = vpop.f32.mrb[0].mxu0
    %v1859 = vadd.f32 %v1123, %v1858
    %v1860 = vpop.f32.mrb[0].mxu0
    %v1861 = vadd.f32 %v1127, %v1860
    %1862 = vmatprep.mubr.bf16.mxu0 %v947
    %1863 = vmatmul.mubr.bf16.gmra.mrb[0].mxu0 %v946
    %v1864 = vpop.f32.mrb[0].mxu0
    %v1865 = vadd.f32 %v1123, %v1864
    %v1866 = vpop.f32.mrb[0].mxu0
    %v1867 = vadd.f32 %v1127, %v1866
    %v1868 = vpop.f32.mrb[0].mxu0
    %v1869 = vadd.f32 %v1123, %v1868
    %v1870 = vpop.f32.mrb[0].mxu0
    %v1871 = vadd.f32 %v1127, %v1870
    %1872 = vmatprep.mubr.bf16.mxu0 %v951
    %1873 = vmatmul.mubr.bf16.gmra.mrb[0].mxu0 %v950
    %v1874 = vpop.f32.mrb[0].mxu0
    %v1875 = vadd.f32 %v1123, %v1874
    %v1876 = vpop.f32.mrb[0].mxu0
    %v1877 = vadd.f32 %v1127, %v1876
    %v1878 = vpop.f32.mrb[0].mxu0
    %v1879 = vadd.f32 %v1123, %v1878
    %v1880 = vpop.f32.mrb[0].mxu0
    %v1881 = vadd.f32 %v1127, %v1880
    %1882 = vmatprep.mubr.bf16.mxu0 %v955
    %1883 = vmatmul.mubr.bf16.gmra.mrb[0].mxu0 %v954
    %v1884 = vpop.f32.mrb[0].mxu0
    %v1885 = vadd.f32 %v1123, %v1884
    %v1886 = vpop.f32.mrb[0].mxu0
    %v1887 = vadd.f32 %v1127, %v1886
    %v1888 = vpop.f32.mrb[0].mxu0
    %v1889 = vadd.f32 %v1123, %v1888
    %v1890 = vpop.f32.mrb[0].mxu0
    %v1891 = vadd.f32 %v1127, %v1890
    %1892 = vmatprep.mubr.bf16.mxu0 %v959
    %1893 = vmatmul.mubr.bf16.gmra.mrb[0].mxu0 %v958
    %v1894 = vpop.f32.mrb[0].mxu0
    %v1895 = vadd.f32 %v1123, %v1894
    %v1896 = vpop.f32.mrb[0].mxu0
    %v1897 = vadd.f32 %v1127, %v1896
    %v1898 = vpop.f32.mrb[0].mxu0
    %v1899 = vadd.f32 %v1123, %v1898
    %v1900 = vpop.f32.mrb[0].mxu0
    %v1901 = vadd.f32 %v1127, %v1900
    %1902 = vmatprep.mubr.bf16.mxu0 %v963
    %1903 = vmatmul.mubr.bf16.gmra.mrb[0].mxu0 %v962
    %v1904 = vpop.f32.mrb[0].mxu0
    %v1905 = vadd.f32 %v1123, %v1904
    %v1906 = vpop.f32.mrb[0].mxu0
    %v1907 = vadd.f32 %v1127, %v1906
    %v1908 = vpop.f32.mrb[0].mxu0
    %v1909 = vadd.f32 %v1123, %v1908
    %v1910 = vpop.f32.mrb[0].mxu0
    %v1911 = vadd.f32 %v1127, %v1910
    %1912 = vmatprep.mubr.bf16.mxu0 %v967
    %1913 = vmatmul.mubr.bf16.gmra.mrb[0].mxu0 %v966
    %v1914 = vpop.f32.mrb[0].mxu0
    %v1915 = vadd.f32 %v1123, %v1914
    %v1916 = vpop.f32.mrb[0].mxu0
    %v1917 = vadd.f32 %v1127, %v1916
    %v1918 = vpop.f32.mrb[0].mxu0
    %v1919 = vadd.f32 %v1123, %v1918
    %v1920 = vpop.f32.mrb[0].mxu0
    %v1921 = vadd.f32 %v1127, %v1920
    %1922 = vmatprep.mubr.bf16.mxu0 %v971
    %1923 = vmatmul.mubr.bf16.gmra.mrb[0].mxu0 %v970
    %v1924 = vpop.f32.mrb[0].mxu0
    %v1925 = vadd.f32 %v1123, %v1924
    %v1926 = vpop.f32.mrb[0].mxu0
    %v1927 = vadd.f32 %v1127, %v1926
    %v1928 = vpop.f32.mrb[0].mxu0
    %v1929 = vadd.f32 %v1123, %v1928
    %v1930 = vpop.f32.mrb[0].mxu0
    %v1931 = vadd.f32 %v1127, %v1930
    %1932 = vmatprep.mubr.bf16.mxu0 %v975
    %1933 = vmatmul.mubr.bf16.gmra.mrb[0].mxu0 %v974
    %v1934 = vpop.f32.mrb[0].mxu0
    %v1935 = vadd.f32 %v1123, %v1934
    %v1936 = vpop.f32.mrb[0].mxu0
    %v1937 = vadd.f32 %v1127, %v1936
    %v1938 = vpop.f32.mrb[0].mxu0
    %v1939 = vadd.f32 %v1123, %v1938
    %v1940 = vpop.f32.mrb[0].mxu0
    %v1941 = vadd.f32 %v1127, %v1940
    %1942 = vmatprep.mubr.bf16.mxu0 %v979
    %1943 = vmatmul.mubr.bf16.gmra.mrb[0].mxu0 %v978
    %v1944 = vpop.f32.mrb[0].mxu0
    %v1945 = vadd.f32 %v1123, %v1944
    %v1946 = vpop.f32.mrb[0].mxu0
    %v1947 = vadd.f32 %v1127, %v1946
    %v1948 = vpop.f32.mrb[0].mxu0
    %v1949 = vadd.f32 %v1123, %v1948
    %v1950 = vpop.f32.mrb[0].mxu0
    %v1951 = vadd.f32 %v1127, %v1950
    %1952 = vmatprep.mubr.bf16.mxu0 %v983
    %1953 = vmatmul.mubr.bf16.gmra.mrb[0].mxu0 %v982
    %v1954 = vpop.f32.mrb[0].mxu0
    %v1955 = vadd.f32 %v1123, %v1954
    %v1956 = vpop.f32.mrb[0].mxu0
    %v1957 = vadd.f32 %v1127, %v1956
    %v1958 = vpop.f32.mrb[0].mxu0
    %v1959 = vadd.f32 %v1123, %v1958
    %v1960 = vpop.f32.mrb[0].mxu0
    %v1961 = vadd.f32 %v1127, %v1960
    %1962 = vmatprep.mubr.bf16.mxu0 %v987
    %1963 = vmatmul.mubr.bf16.gmra.mrb[0].mxu0 %v986
    %v1964 = vpop.f32.mrb[0].mxu0
    %v1965 = vadd.f32 %v1123, %v1964
    %v1966 = vpop.f32.mrb[0].mxu0
    %v1967 = vadd.f32 %v1127, %v1966
    %v1968 = vpop.f32.mrb[0].mxu0
    %v1969 = vadd.f32 %v1123, %v1968
    %v1970 = vpop.f32.mrb[0].mxu0
    %v1971 = vadd.f32 %v1127, %v1970
    %1972 = vdwg.mxu0
    %1973 = vmatprep.subr.bf16.mxu0 %v1589
    %1974 = vmatpush1.bf16.msra.mxu0 %v1588
    %1975 = vmatprep.subr.bf16.mxu0 %v1593
    %1976 = vmatpush1.bf16.msra.mxu0 %v1592
    %1977 = vmatprep.subr.bf16.mxu0 %v1597
    %1978 = vmatpush1.bf16.msra.mxu0 %v1596
    %1979 = vmatprep.subr.bf16.mxu0 %v1601
    %1980 = vmatpush1.bf16.msra.mxu0 %v1600
    %1981 = vmatprep.subr.bf16.mxu0 %v1605
    %1982 = vmatpush1.bf16.msra.mxu0 %v1604
    %1983 = vmatprep.subr.bf16.mxu0 %v1609
    %1984 = vmatpush1.bf16.msra.mxu0 %v1608
    %1985 = vmatprep.subr.bf16.mxu0 %v1613
    %1986 = vmatpush1.bf16.msra.mxu0 %v1612
    %1987 = vmatprep.subr.bf16.mxu0 %v1617
    %1988 = vmatpush1.bf16.msra.mxu0 %v1616
    %1989 = vmatprep.subr.bf16.mxu0 %v1621
    %1990 = vmatpush1.bf16.msra.mxu0 %v1620
    %1991 = vmatprep.subr.bf16.mxu0 %v1625
    %1992 = vmatpush1.bf16.msra.mxu0 %v1624
    %1993 = vmatprep.subr.bf16.mxu0 %v1629
    %1994 = vmatpush1.bf16.msra.mxu0 %v1628
    %1995 = vmatprep.subr.bf16.mxu0 %v1633
    %1996 = vmatpush1.bf16.msra.mxu0 %v1632
    %1997 = vmatprep.subr.bf16.mxu0 %v1637
    %1998 = vmatpush1.bf16.msra.mxu0 %v1636
    %1999 = vmatprep.subr.bf16.mxu0 %v1641
    %2000 = vmatpush1.bf16.msra.mxu0 %v1640
    %2001 = vmatprep.subr.bf16.mxu0 %v1645
    %2002 = vmatpush1.bf16.msra.mxu0 %v1644
    %2003 = vmatprep.subr.bf16.mxu0 %v1649
    %2004 = vmatpush1.bf16.msra.mxu0 %v1648
    %2005 = vmatprep.mubr.bf16.mxu0 %v929
    %2006 = vmatmul.mubr.bf16.gmra.mrb[0].mxu0 %v928
    %v2007 = vpop.f32.mrb[0].mxu0
    %v2008 = vadd.f32 %v1815, %v2007
    %v2009 = vpop.f32.mrb[0].mxu0
    %v2010 = vadd.f32 %v1817, %v2009
    %v2011 = vpop.f32.mrb[0].mxu0
    %v2012 = vadd.f32 %v1819, %v2011
    %v2013 = vpop.f32.mrb[0].mxu0
    %v2014 = vadd.f32 %v1821, %v2013
    %2015 = vmatprep.mubr.bf16.mxu0 %v933
    %2016 = vmatmul.mubr.bf16.gmra.mrb[0].mxu0 %v932
    %v2017 = vpop.f32.mrb[0].mxu0
    %v2018 = vadd.f32 %v1825, %v2017
    %v2019 = vpop.f32.mrb[0].mxu0
    %v2020 = vadd.f32 %v1827, %v2019
    %v2021 = vpop.f32.mrb[0].mxu0
    %v2022 = vadd.f32 %v1829, %v2021
    %v2023 = vpop.f32.mrb[0].mxu0
    %v2024 = vadd.f32 %v1831, %v2023
    %2025 = vmatprep.mubr.bf16.mxu0 %v937
    %2026 = vmatmul.mubr.bf16.gmra.mrb[0].mxu0 %v936
    %v2027 = vpop.f32.mrb[0].mxu0
    %v2028 = vadd.f32 %v1835, %v2027
    %v2029 = vpop.f32.mrb[0].mxu0
    %v2030 = vadd.f32 %v1837, %v2029
    %v2031 = vpop.f32.mrb[0].mxu0
    %v2032 = vadd.f32 %v1839, %v2031
    %v2033 = vpop.f32.mrb[0].mxu0
    %v2034 = vadd.f32 %v1841, %v2033
    %2035 = vmatprep.mubr.bf16.mxu0 %v941
    %2036 = vmatmul.mubr.bf16.gmra.mrb[0].mxu0 %v940
    %v2037 = vpop.f32.mrb[0].mxu0
    %v2038 = vadd.f32 %v1845, %v2037
    %v2039 = vpop.f32.mrb[0].mxu0
    %v2040 = vadd.f32 %v1847, %v2039
    %v2041 = vpop.f32.mrb[0].mxu0
    %v2042 = vadd.f32 %v1849, %v2041
    %v2043 = vpop.f32.mrb[0].mxu0
    %v2044 = vadd.f32 %v1851, %v2043
    %2045 = vmatprep.mubr.bf16.mxu0 %v945
    %2046 = vmatmul.mubr.bf16.gmra.mrb[0].mxu0 %v944
    %v2047 = vpop.f32.mrb[0].mxu0
    %v2048 = vadd.f32 %v1855, %v2047
    %v2049 = vpop.f32.mrb[0].mxu0
    %v2050 = vadd.f32 %v1857, %v2049
    %v2051 = vpop.f32.mrb[0].mxu0
    %v2052 = vadd.f32 %v1859, %v2051
    %v2053 = vpop.f32.mrb[0].mxu0
    %v2054 = vadd.f32 %v1861, %v2053
    %2055 = vmatprep.mubr.bf16.mxu0 %v949
    %2056 = vmatmul.mubr.bf16.gmra.mrb[0].mxu0 %v948
    %v2057 = vpop.f32.mrb[0].mxu0
    %v2058 = vadd.f32 %v1865, %v2057
    %v2059 = vpop.f32.mrb[0].mxu0
    %v2060 = vadd.f32 %v1867, %v2059
    %v2061 = vpop.f32.mrb[0].mxu0
    %v2062 = vadd.f32 %v1869, %v2061
    %v2063 = vpop.f32.mrb[0].mxu0
    %v2064 = vadd.f32 %v1871, %v2063
    %2065 = vmatprep.mubr.bf16.mxu0 %v953
    %2066 = vmatmul.mubr.bf16.gmra.mrb[0].mxu0 %v952
    %v2067 = vpop.f32.mrb[0].mxu0
    %v2068 = vadd.f32 %v1875, %v2067
    %v2069 = vpop.f32.mrb[0].mxu0
    %v2070 = vadd.f32 %v1877, %v2069
    %v2071 = vpop.f32.mrb[0].mxu0
    %v2072 = vadd.f32 %v1879, %v2071
    %v2073 = vpop.f32.mrb[0].mxu0
    %v2074 = vadd.f32 %v1881, %v2073
    %2075 = vmatprep.mubr.bf16.mxu0 %v957
    %2076 = vmatmul.mubr.bf16.gmra.mrb[0].mxu0 %v956
    %v2077 = vpop.f32.mrb[0].mxu0
    %v2078 = vadd.f32 %v1885, %v2077
    %v2079 = vpop.f32.mrb[0].mxu0
    %v2080 = vadd.f32 %v1887, %v2079
    %v2081 = vpop.f32.mrb[0].mxu0
    %v2082 = vadd.f32 %v1889, %v2081
    %v2083 = vpop.f32.mrb[0].mxu0
    %v2084 = vadd.f32 %v1891, %v2083
    %2085 = vmatprep.mubr.bf16.mxu0 %v961
    %2086 = vmatmul.mubr.bf16.gmra.mrb[0].mxu0 %v960
    %v2087 = vpop.f32.mrb[0].mxu0
    %v2088 = vadd.f32 %v1895, %v2087
    %v2089 = vpop.f32.mrb[0].mxu0
    %v2090 = vadd.f32 %v1897, %v2089
    %v2091 = vpop.f32.mrb[0].mxu0
    %v2092 = vadd.f32 %v1899, %v2091
    %v2093 = vpop.f32.mrb[0].mxu0
    %v2094 = vadd.f32 %v1901, %v2093
    %2095 = vmatprep.mubr.bf16.mxu0 %v965
    %2096 = vmatmul.mubr.bf16.gmra.mrb[0].mxu0 %v964
    %v2097 = vpop.f32.mrb[0].mxu0
    %v2098 = vadd.f32 %v1905, %v2097
    %v2099 = vpop.f32.mrb[0].mxu0
    %v2100 = vadd.f32 %v1907, %v2099
    %v2101 = vpop.f32.mrb[0].mxu0
    %v2102 = vadd.f32 %v1909, %v2101
    %v2103 = vpop.f32.mrb[0].mxu0
    %v2104 = vadd.f32 %v1911, %v2103
    %2105 = vmatprep.mubr.bf16.mxu0 %v969
    %2106 = vmatmul.mubr.bf16.gmra.mrb[0].mxu0 %v968
    %v2107 = vpop.f32.mrb[0].mxu0
    %v2108 = vadd.f32 %v1915, %v2107
    %v2109 = vpop.f32.mrb[0].mxu0
    %v2110 = vadd.f32 %v1917, %v2109
    %v2111 = vpop.f32.mrb[0].mxu0
    %v2112 = vadd.f32 %v1919, %v2111
    %v2113 = vpop.f32.mrb[0].mxu0
    %v2114 = vadd.f32 %v1921, %v2113
    %2115 = vmatprep.mubr.bf16.mxu0 %v973
    %2116 = vmatmul.mubr.bf16.gmra.mrb[0].mxu0 %v972
    %v2117 = vpop.f32.mrb[0].mxu0
    %v2118 = vadd.f32 %v1925, %v2117
    %v2119 = vpop.f32.mrb[0].mxu0
    %v2120 = vadd.f32 %v1927, %v2119
    %v2121 = vpop.f32.mrb[0].mxu0
    %v2122 = vadd.f32 %v1929, %v2121
    %v2123 = vpop.f32.mrb[0].mxu0
    %v2124 = vadd.f32 %v1931, %v2123
    %2125 = vmatprep.mubr.bf16.mxu0 %v977
    %2126 = vmatmul.mubr.bf16.gmra.mrb[0].mxu0 %v976
    %v2127 = vpop.f32.mrb[0].mxu0
    %v2128 = vadd.f32 %v1935, %v2127
    %v2129 = vpop.f32.mrb[0].mxu0
    %v2130 = vadd.f32 %v1937, %v2129
    %v2131 = vpop.f32.mrb[0].mxu0
    %v2132 = vadd.f32 %v1939, %v2131
    %v2133 = vpop.f32.mrb[0].mxu0
    %v2134 = vadd.f32 %v1941, %v2133
    %2135 = vmatprep.mubr.bf16.mxu0 %v981
    %2136 = vmatmul.mubr.bf16.gmra.mrb[0].mxu0 %v980
    %v2137 = vpop.f32.mrb[0].mxu0
    %v2138 = vadd.f32 %v1945, %v2137
    %v2139 = vpop.f32.mrb[0].mxu0
    %v2140 = vadd.f32 %v1947, %v2139
    %v2141 = vpop.f32.mrb[0].mxu0
    %v2142 = vadd.f32 %v1949, %v2141
    %v2143 = vpop.f32.mrb[0].mxu0
    %v2144 = vadd.f32 %v1951, %v2143
    %2145 = vmatprep.mubr.bf16.mxu0 %v985
    %2146 = vmatmul.mubr.bf16.gmra.mrb[0].mxu0 %v984
    %v2147 = vpop.f32.mrb[0].mxu0
    %v2148 = vadd.f32 %v1955, %v2147
    %v2149 = vpop.f32.mrb[0].mxu0
    %v2150 = vadd.f32 %v1957, %v2149
    %v2151 = vpop.f32.mrb[0].mxu0
    %v2152 = vadd.f32 %v1959, %v2151
    %v2153 = vpop.f32.mrb[0].mxu0
    %v2154 = vadd.f32 %v1961, %v2153
    %2155 = vmatprep.mubr.bf16.mxu0 %v989
    %2156 = vmatmul.mubr.bf16.gmra.mrb[0].mxu0 %v988
    %v2157 = vpop.f32.mrb[0].mxu0
    %v2158 = vadd.f32 %v1965, %v2157
    %v2159 = vpop.f32.mrb[0].mxu0
    %v2160 = vadd.f32 %v1967, %v2159
    %v2161 = vpop.f32.mrb[0].mxu0
    %v2162 = vadd.f32 %v1969, %v2161
    %v2163 = vpop.f32.mrb[0].mxu0
    %v2164 = vadd.f32 %v1971, %v2163
    %2165 = vdwg.mxu0
    %2166 = vmatprep.subr.bf16.mxu0 %v1527
    %2167 = vmatpush1.bf16.msra.mxu0 %v1526
    %2168 = vmatprep.subr.bf16.mxu0 %v1531
    %2169 = vmatpush1.bf16.msra.mxu0 %v1530
    %2170 = vmatprep.subr.bf16.mxu0 %v1535
    %2171 = vmatpush1.bf16.msra.mxu0 %v1534
    %2172 = vmatprep.subr.bf16.mxu0 %v1539
    %2173 = vmatpush1.bf16.msra.mxu0 %v1538
    %2174 = vmatprep.subr.bf16.mxu0 %v1543
    %2175 = vmatpush1.bf16.msra.mxu0 %v1542
    %2176 = vmatprep.subr.bf16.mxu0 %v1547
    %2177 = vmatpush1.bf16.msra.mxu0 %v1546
    %2178 = vmatprep.subr.bf16.mxu0 %v1551
    %2179 = vmatpush1.bf16.msra.mxu0 %v1550
    %2180 = vmatprep.subr.bf16.mxu0 %v1555
    %2181 = vmatpush1.bf16.msra.mxu0 %v1554
    %2182 = vmatprep.subr.bf16.mxu0 %v1559
    %2183 = vmatpush1.bf16.msra.mxu0 %v1558
    %2184 = vmatprep.subr.bf16.mxu0 %v1563
    %2185 = vmatpush1.bf16.msra.mxu0 %v1562
    %2186 = vmatprep.subr.bf16.mxu0 %v1567
    %2187 = vmatpush1.bf16.msra.mxu0 %v1566
    %2188 = vmatprep.subr.bf16.mxu0 %v1571
    %2189 = vmatpush1.bf16.msra.mxu0 %v1570
    %2190 = vmatprep.subr.bf16.mxu0 %v1575
    %2191 = vmatpush1.bf16.msra.mxu0 %v1574
    %2192 = vmatprep.subr.bf16.mxu0 %v1579
    %2193 = vmatpush1.bf16.msra.mxu0 %v1578
    %2194 = vmatprep.subr.bf16.mxu0 %v1583
    %2195 = vmatpush1.bf16.msra.mxu0 %v1582
    %2196 = vmatprep.subr.bf16.mxu0 %v1587
    %2197 = vmatpush1.bf16.msra.mxu0 %v1586
    %2198 = vmatprep.mubr.bf16.mxu0 %v927
    %2199 = vmatmul.mubr.bf16.gmra.mrb[0].mxu0 %v926
    %v2200 = vpop.f32.mrb[0].mxu0
    %v2201 = vadd.f32 %v1131, %v2200
    %v2202 = vpop.f32.mrb[0].mxu0
    %v2203 = vadd.f32 %v1135, %v2202
    %v2204 = vpop.f32.mrb[0].mxu0
    %v2205 = vadd.f32 %v1131, %v2204
    %v2206 = vpop.f32.mrb[0].mxu0
    %v2207 = vadd.f32 %v1135, %v2206
    %2208 = vmatprep.mubr.bf16.mxu0 %v931
    %2209 = vmatmul.mubr.bf16.gmra.mrb[0].mxu0 %v930
    %v2210 = vpop.f32.mrb[0].mxu0
    %v2211 = vadd.f32 %v1131, %v2210
    %v2212 = vpop.f32.mrb[0].mxu0
    %v2213 = vadd.f32 %v1135, %v2212
    %v2214 = vpop.f32.mrb[0].mxu0
    %v2215 = vadd.f32 %v1131, %v2214
    %v2216 = vpop.f32.mrb[0].mxu0
    %v2217 = vadd.f32 %v1135, %v2216
    %2218 = vmatprep.mubr.bf16.mxu0 %v935
    %2219 = vmatmul.mubr.bf16.gmra.mrb[0].mxu0 %v934
    %v2220 = vpop.f32.mrb[0].mxu0
    %v2221 = vadd.f32 %v1131, %v2220
    %v2222 = vpop.f32.mrb[0].mxu0
    %v2223 = vadd.f32 %v1135, %v2222
    %v2224 = vpop.f32.mrb[0].mxu0
    %v2225 = vadd.f32 %v1131, %v2224
    %v2226 = vpop.f32.mrb[0].mxu0
    %v2227 = vadd.f32 %v1135, %v2226
    %2228 = vmatprep.mubr.bf16.mxu0 %v939
    %2229 = vmatmul.mubr.bf16.gmra.mrb[0].mxu0 %v938
    %v2230 = vpop.f32.mrb[0].mxu0
    %v2231 = vadd.f32 %v1131, %v2230
    %v2232 = vpop.f32.mrb[0].mxu0
    %v2233 = vadd.f32 %v1135, %v2232
    %v2234 = vpop.f32.mrb[0].mxu0
    %v2235 = vadd.f32 %v1131, %v2234
    %v2236 = vpop.f32.mrb[0].mxu0
    %v2237 = vadd.f32 %v1135, %v2236
    %2238 = vmatprep.mubr.bf16.mxu0 %v943
    %2239 = vmatmul.mubr.bf16.gmra.mrb[0].mxu0 %v942
    %v2240 = vpop.f32.mrb[0].mxu0
    %v2241 = vadd.f32 %v1131, %v2240
    %v2242 = vpop.f32.mrb[0].mxu0
    %v2243 = vadd.f32 %v1135, %v2242
    %v2244 = vpop.f32.mrb[0].mxu0
    %v2245 = vadd.f32 %v1131, %v2244
    %v2246 = vpop.f32.mrb[0].mxu0
    %v2247 = vadd.f32 %v1135, %v2246
    %2248 = vmatprep.mubr.bf16.mxu0 %v947
    %2249 = vmatmul.mubr.bf16.gmra.mrb[0].mxu0 %v946
    %v2250 = vpop.f32.mrb[0].mxu0
    %v2251 = vadd.f32 %v1131, %v2250
    %v2252 = vpop.f32.mrb[0].mxu0
    %v2253 = vadd.f32 %v1135, %v2252
    %v2254 = vpop.f32.mrb[0].mxu0
    %v2255 = vadd.f32 %v1131, %v2254
    %v2256 = vpop.f32.mrb[0].mxu0
    %v2257 = vadd.f32 %v1135, %v2256
    %2258 = vmatprep.mubr.bf16.mxu0 %v951
    %2259 = vmatmul.mubr.bf16.gmra.mrb[0].mxu0 %v950
    %v2260 = vpop.f32.mrb[0].mxu0
    %v2261 = vadd.f32 %v1131, %v2260
    %v2262 = vpop.f32.mrb[0].mxu0
    %v2263 = vadd.f32 %v1135, %v2262
    %v2264 = vpop.f32.mrb[0].mxu0
    %v2265 = vadd.f32 %v1131, %v2264
    %v2266 = vpop.f32.mrb[0].mxu0
    %v2267 = vadd.f32 %v1135, %v2266
    %2268 = vmatprep.mubr.bf16.mxu0 %v955
    %2269 = vmatmul.mubr.bf16.gmra.mrb[0].mxu0 %v954
    %v2270 = vpop.f32.mrb[0].mxu0
    %v2271 = vadd.f32 %v1131, %v2270
    %v2272 = vpop.f32.mrb[0].mxu0
    %v2273 = vadd.f32 %v1135, %v2272
    %v2274 = vpop.f32.mrb[0].mxu0
    %v2275 = vadd.f32 %v1131, %v2274
    %v2276 = vpop.f32.mrb[0].mxu0
    %v2277 = vadd.f32 %v1135, %v2276
    %2278 = vmatprep.mubr.bf16.mxu0 %v959
    %2279 = vmatmul.mubr.bf16.gmra.mrb[0].mxu0 %v958
    %v2280 = vpop.f32.mrb[0].mxu0
    %v2281 = vadd.f32 %v1131, %v2280
    %v2282 = vpop.f32.mrb[0].mxu0
    %v2283 = vadd.f32 %v1135, %v2282
    %v2284 = vpop.f32.mrb[0].mxu0
    %v2285 = vadd.f32 %v1131, %v2284
    %v2286 = vpop.f32.mrb[0].mxu0
    %v2287 = vadd.f32 %v1135, %v2286
    %2288 = vmatprep.mubr.bf16.mxu0 %v963
    %2289 = vmatmul.mubr.bf16.gmra.mrb[0].mxu0 %v962
    %v2290 = vpop.f32.mrb[0].mxu0
    %v2291 = vadd.f32 %v1131, %v2290
    %v2292 = vpop.f32.mrb[0].mxu0
    %v2293 = vadd.f32 %v1135, %v2292
    %v2294 = vpop.f32.mrb[0].mxu0
    %v2295 = vadd.f32 %v1131, %v2294
    %v2296 = vpop.f32.mrb[0].mxu0
    %v2297 = vadd.f32 %v1135, %v2296
    %2298 = vmatprep.mubr.bf16.mxu0 %v967
    %2299 = vmatmul.mubr.bf16.gmra.mrb[0].mxu0 %v966
    %v2300 = vpop.f32.mrb[0].mxu0
    %v2301 = vadd.f32 %v1131, %v2300
    %v2302 = vpop.f32.mrb[0].mxu0
    %v2303 = vadd.f32 %v1135, %v2302
    %v2304 = vpop.f32.mrb[0].mxu0
    %v2305 = vadd.f32 %v1131, %v2304
    %v2306 = vpop.f32.mrb[0].mxu0
    %v2307 = vadd.f32 %v1135, %v2306
    %2308 = vmatprep.mubr.bf16.mxu0 %v971
    %2309 = vmatmul.mubr.bf16.gmra.mrb[0].mxu0 %v970
    %v2310 = vpop.f32.mrb[0].mxu0
    %v2311 = vadd.f32 %v1131, %v2310
    %v2312 = vpop.f32.mrb[0].mxu0
    %v2313 = vadd.f32 %v1135, %v2312
    %v2314 = vpop.f32.mrb[0].mxu0
    %v2315 = vadd.f32 %v1131, %v2314
    %v2316 = vpop.f32.mrb[0].mxu0
    %v2317 = vadd.f32 %v1135, %v2316
    %2318 = vmatprep.mubr.bf16.mxu0 %v975
    %2319 = vmatmul.mubr.bf16.gmra.mrb[0].mxu0 %v974
    %v2320 = vpop.f32.mrb[0].mxu0
    %v2321 = vadd.f32 %v1131, %v2320
    %v2322 = vpop.f32.mrb[0].mxu0
    %v2323 = vadd.f32 %v1135, %v2322
    %v2324 = vpop.f32.mrb[0].mxu0
    %v2325 = vadd.f32 %v1131, %v2324
    %v2326 = vpop.f32.mrb[0].mxu0
    %v2327 = vadd.f32 %v1135, %v2326
    %2328 = vmatprep.mubr.bf16.mxu0 %v979
    %2329 = vmatmul.mubr.bf16.gmra.mrb[0].mxu0 %v978
    %v2330 = vpop.f32.mrb[0].mxu0
    %v2331 = vadd.f32 %v1131, %v2330
    %v2332 = vpop.f32.mrb[0].mxu0
    %v2333 = vadd.f32 %v1135, %v2332
    %v2334 = vpop.f32.mrb[0].mxu0
    %v2335 = vadd.f32 %v1131, %v2334
    %v2336 = vpop.f32.mrb[0].mxu0
    %v2337 = vadd.f32 %v1135, %v2336
    %2338 = vmatprep.mubr.bf16.mxu0 %v983
    %2339 = vmatmul.mubr.bf16.gmra.mrb[0].mxu0 %v982
    %v2340 = vpop.f32.mrb[0].mxu0
    %v2341 = vadd.f32 %v1131, %v2340
    %v2342 = vpop.f32.mrb[0].mxu0
    %v2343 = vadd.f32 %v1135, %v2342
    %v2344 = vpop.f32.mrb[0].mxu0
    %v2345 = vadd.f32 %v1131, %v2344
    %v2346 = vpop.f32.mrb[0].mxu0
    %v2347 = vadd.f32 %v1135, %v2346
    %2348 = vmatprep.mubr.bf16.mxu0 %v987
    %2349 = vmatmul.mubr.bf16.gmra.mrb[0].mxu0 %v986
    %v2350 = vpop.f32.mrb[0].mxu0
    %v2351 = vadd.f32 %v1131, %v2350
    %v2352 = vpop.f32.mrb[0].mxu0
    %v2353 = vadd.f32 %v1135, %v2352
    %v2354 = vpop.f32.mrb[0].mxu0
    %v2355 = vadd.f32 %v1131, %v2354
    %v2356 = vpop.f32.mrb[0].mxu0
    %v2357 = vadd.f32 %v1135, %v2356
    %2358 = vdwg.mxu0
    %2359 = vmatprep.subr.bf16.mxu0 %v1591
    %2360 = vmatpush1.bf16.msra.mxu0 %v1590
    %2361 = vmatprep.subr.bf16.mxu0 %v1595
    %2362 = vmatpush1.bf16.msra.mxu0 %v1594
    %2363 = vmatprep.subr.bf16.mxu0 %v1599
    %2364 = vmatpush1.bf16.msra.mxu0 %v1598
    %2365 = vmatprep.subr.bf16.mxu0 %v1603
    %2366 = vmatpush1.bf16.msra.mxu0 %v1602
    %2367 = vmatprep.subr.bf16.mxu0 %v1607
    %2368 = vmatpush1.bf16.msra.mxu0 %v1606
    %2369 = vmatprep.subr.bf16.mxu0 %v1611
    %2370 = vmatpush1.bf16.msra.mxu0 %v1610
    %2371 = vmatprep.subr.bf16.mxu0 %v1615
    %2372 = vmatpush1.bf16.msra.mxu0 %v1614
    %2373 = vmatprep.subr.bf16.mxu0 %v1619
    %2374 = vmatpush1.bf16.msra.mxu0 %v1618
    %2375 = vmatprep.subr.bf16.mxu0 %v1623
    %2376 = vmatpush1.bf16.msra.mxu0 %v1622
    %2377 = vmatprep.subr.bf16.mxu0 %v1627
    %2378 = vmatpush1.bf16.msra.mxu0 %v1626
    %2379 = vmatprep.subr.bf16.mxu0 %v1631
    %2380 = vmatpush1.bf16.msra.mxu0 %v1630
    %2381 = vmatprep.subr.bf16.mxu0 %v1635
    %2382 = vmatpush1.bf16.msra.mxu0 %v1634
    %2383 = vmatprep.subr.bf16.mxu0 %v1639
    %2384 = vmatpush1.bf16.msra.mxu0 %v1638
    %2385 = vmatprep.subr.bf16.mxu0 %v1643
    %2386 = vmatpush1.bf16.msra.mxu0 %v1642
    %2387 = vmatprep.subr.bf16.mxu0 %v1647
    %2388 = vmatpush1.bf16.msra.mxu0 %v1646
    %2389 = vmatprep.subr.bf16.mxu0 %v1651
    %2390 = vmatpush1.bf16.msra.mxu0 %v1650
    %2391 = vmatprep.mubr.bf16.mxu0 %v929
    %2392 = vmatmul.mubr.bf16.gmra.mrb[0].mxu0 %v928
    %v2393 = vpop.f32.mrb[0].mxu0
    %v2394 = vadd.f32 %v2201, %v2393
    %v2395 = vpop.f32.mrb[0].mxu0
    %v2396 = vadd.f32 %v2203, %v2395
    %v2397 = vpop.f32.mrb[0].mxu0
    %v2398 = vadd.f32 %v2205, %v2397
    %v2399 = vpop.f32.mrb[0].mxu0
    %v2400 = vadd.f32 %v2207, %v2399
    %2401 = vmatprep.mubr.bf16.mxu0 %v933
    %2402 = vmatmul.mubr.bf16.gmra.mrb[0].mxu0 %v932
    %v2403 = vpop.f32.mrb[0].mxu0
    %v2404 = vadd.f32 %v2211, %v2403
    %v2405 = vpop.f32.mrb[0].mxu0
    %v2406 = vadd.f32 %v2213, %v2405
    %v2407 = vpop.f32.mrb[0].mxu0
    %v2408 = vadd.f32 %v2215, %v2407
    %v2409 = vpop.f32.mrb[0].mxu0
    %v2410 = vadd.f32 %v2217, %v2409
    %2411 = vmatprep.mubr.bf16.mxu0 %v937
    %2412 = vmatmul.mubr.bf16.gmra.mrb[0].mxu0 %v936
    %v2413 = vpop.f32.mrb[0].mxu0
    %v2414 = vadd.f32 %v2221, %v2413
    %v2415 = vpop.f32.mrb[0].mxu0
    %v2416 = vadd.f32 %v2223, %v2415
    %v2417 = vpop.f32.mrb[0].mxu0
    %v2418 = vadd.f32 %v2225, %v2417
    %v2419 = vpop.f32.mrb[0].mxu0
    %v2420 = vadd.f32 %v2227, %v2419
    %2421 = vmatprep.mubr.bf16.mxu0 %v941
    %2422 = vmatmul.mubr.bf16.gmra.mrb[0].mxu0 %v940
    %v2423 = vpop.f32.mrb[0].mxu0
    %v2424 = vadd.f32 %v2231, %v2423
    %v2425 = vpop.f32.mrb[0].mxu0
    %v2426 = vadd.f32 %v2233, %v2425
    %v2427 = vpop.f32.mrb[0].mxu0
    %v2428 = vadd.f32 %v2235, %v2427
    %v2429 = vpop.f32.mrb[0].mxu0
    %v2430 = vadd.f32 %v2237, %v2429
    %2431 = vmatprep.mubr.bf16.mxu0 %v945
    %2432 = vmatmul.mubr.bf16.gmra.mrb[0].mxu0 %v944
    %v2433 = vpop.f32.mrb[0].mxu0
    %v2434 = vadd.f32 %v2241, %v2433
    %v2435 = vpop.f32.mrb[0].mxu0
    %v2436 = vadd.f32 %v2243, %v2435
    %v2437 = vpop.f32.mrb[0].mxu0
    %v2438 = vadd.f32 %v2245, %v2437
    %v2439 = vpop.f32.mrb[0].mxu0
    %v2440 = vadd.f32 %v2247, %v2439
    %2441 = vmatprep.mubr.bf16.mxu0 %v949
    %2442 = vmatmul.mubr.bf16.gmra.mrb[0].mxu0 %v948
    %v2443 = vpop.f32.mrb[0].mxu0
    %v2444 = vadd.f32 %v2251, %v2443
    %v2445 = vpop.f32.mrb[0].mxu0
    %v2446 = vadd.f32 %v2253, %v2445
    %v2447 = vpop.f32.mrb[0].mxu0
    %v2448 = vadd.f32 %v2255, %v2447
    %v2449 = vpop.f32.mrb[0].mxu0
    %v2450 = vadd.f32 %v2257, %v2449
    %2451 = vmatprep.mubr.bf16.mxu0 %v953
    %2452 = vmatmul.mubr.bf16.gmra.mrb[0].mxu0 %v952
    %v2453 = vpop.f32.mrb[0].mxu0
    %v2454 = vadd.f32 %v2261, %v2453
    %v2455 = vpop.f32.mrb[0].mxu0
    %v2456 = vadd.f32 %v2263, %v2455
    %v2457 = vpop.f32.mrb[0].mxu0
    %v2458 = vadd.f32 %v2265, %v2457
    %v2459 = vpop.f32.mrb[0].mxu0
    %v2460 = vadd.f32 %v2267, %v2459
    %2461 = vmatprep.mubr.bf16.mxu0 %v957
    %2462 = vmatmul.mubr.bf16.gmra.mrb[0].mxu0 %v956
    %v2463 = vpop.f32.mrb[0].mxu0
    %v2464 = vadd.f32 %v2271, %v2463
    %v2465 = vpop.f32.mrb[0].mxu0
    %v2466 = vadd.f32 %v2273, %v2465
    %v2467 = vpop.f32.mrb[0].mxu0
    %v2468 = vadd.f32 %v2275, %v2467
    %v2469 = vpop.f32.mrb[0].mxu0
    %v2470 = vadd.f32 %v2277, %v2469
    %2471 = vmatprep.mubr.bf16.mxu0 %v961
    %2472 = vmatmul.mubr.bf16.gmra.mrb[0].mxu0 %v960
    %v2473 = vpop.f32.mrb[0].mxu0
    %v2474 = vadd.f32 %v2281, %v2473
    %v2475 = vpop.f32.mrb[0].mxu0
    %v2476 = vadd.f32 %v2283, %v2475
    %v2477 = vpop.f32.mrb[0].mxu0
    %v2478 = vadd.f32 %v2285, %v2477
    %v2479 = vpop.f32.mrb[0].mxu0
    %v2480 = vadd.f32 %v2287, %v2479
    %2481 = vmatprep.mubr.bf16.mxu0 %v965
    %2482 = vmatmul.mubr.bf16.gmra.mrb[0].mxu0 %v964
    %v2483 = vpop.f32.mrb[0].mxu0
    %v2484 = vadd.f32 %v2291, %v2483
    %v2485 = vpop.f32.mrb[0].mxu0
    %v2486 = vadd.f32 %v2293, %v2485
    %v2487 = vpop.f32.mrb[0].mxu0
    %v2488 = vadd.f32 %v2295, %v2487
    %v2489 = vpop.f32.mrb[0].mxu0
    %v2490 = vadd.f32 %v2297, %v2489
    %2491 = vmatprep.mubr.bf16.mxu0 %v969
    %2492 = vmatmul.mubr.bf16.gmra.mrb[0].mxu0 %v968
    %v2493 = vpop.f32.mrb[0].mxu0
    %v2494 = vadd.f32 %v2301, %v2493
    %v2495 = vpop.f32.mrb[0].mxu0
    %v2496 = vadd.f32 %v2303, %v2495
    %v2497 = vpop.f32.mrb[0].mxu0
    %v2498 = vadd.f32 %v2305, %v2497
    %v2499 = vpop.f32.mrb[0].mxu0
    %v2500 = vadd.f32 %v2307, %v2499
    %2501 = vmatprep.mubr.bf16.mxu0 %v973
    %2502 = vmatmul.mubr.bf16.gmra.mrb[0].mxu0 %v972
    %v2503 = vpop.f32.mrb[0].mxu0
    %v2504 = vadd.f32 %v2311, %v2503
    %v2505 = vpop.f32.mrb[0].mxu0
    %v2506 = vadd.f32 %v2313, %v2505
    %v2507 = vpop.f32.mrb[0].mxu0
    %v2508 = vadd.f32 %v2315, %v2507
    %v2509 = vpop.f32.mrb[0].mxu0
    %v2510 = vadd.f32 %v2317, %v2509
    %2511 = vmatprep.mubr.bf16.mxu0 %v977
    %2512 = vmatmul.mubr.bf16.gmra.mrb[0].mxu0 %v976
    %v2513 = vpop.f32.mrb[0].mxu0
    %v2514 = vadd.f32 %v2321, %v2513
    %v2515 = vpop.f32.mrb[0].mxu0
    %v2516 = vadd.f32 %v2323, %v2515
    %v2517 = vpop.f32.mrb[0].mxu0
    %v2518 = vadd.f32 %v2325, %v2517
    %v2519 = vpop.f32.mrb[0].mxu0
    %v2520 = vadd.f32 %v2327, %v2519
    %2521 = vmatprep.mubr.bf16.mxu0 %v981
    %2522 = vmatmul.mubr.bf16.gmra.mrb[0].mxu0 %v980
    %v2523 = vpop.f32.mrb[0].mxu0
    %v2524 = vadd.f32 %v2331, %v2523
    %v2525 = vpop.f32.mrb[0].mxu0
    %v2526 = vadd.f32 %v2333, %v2525
    %v2527 = vpop.f32.mrb[0].mxu0
    %v2528 = vadd.f32 %v2335, %v2527
    %v2529 = vpop.f32.mrb[0].mxu0
    %v2530 = vadd.f32 %v2337, %v2529
    %2531 = vmatprep.mubr.bf16.mxu0 %v985
    %2532 = vmatmul.mubr.bf16.gmra.mrb[0].mxu0 %v984
    %v2533 = vpop.f32.mrb[0].mxu0
    %v2534 = vadd.f32 %v2341, %v2533
    %v2535 = vpop.f32.mrb[0].mxu0
    %v2536 = vadd.f32 %v2343, %v2535
    %v2537 = vpop.f32.mrb[0].mxu0
    %v2538 = vadd.f32 %v2345, %v2537
    %v2539 = vpop.f32.mrb[0].mxu0
    %v2540 = vadd.f32 %v2347, %v2539
    %2541 = vmatprep.mubr.bf16.mxu0 %v989
    %2542 = vmatmul.mubr.bf16.gmra.mrb[0].mxu0 %v988
    %v2543 = vpop.f32.mrb[0].mxu0
    %v2544 = vadd.f32 %v2351, %v2543
    %v2545 = vpop.f32.mrb[0].mxu0
    %v2546 = vadd.f32 %v2353, %v2545
    %v2547 = vpop.f32.mrb[0].mxu0
    %v2548 = vadd.f32 %v2355, %v2547
    %v2549 = vpop.f32.mrb[0].mxu0
    %v2550 = vadd.f32 %v2357, %v2549
    %2551 = vdwg.mxu0
    %v2552 = vmax.f32 %v2008, 0.0
    %v2553 = vmax.f32 %v2010, 0.0
    %v2554 = vmax.f32 %v2394, 0.0
    %v2555 = vmax.f32 %v2396, 0.0
    %v2556 = vmax.f32 %v2012, 0.0
    %v2557 = vmax.f32 %v2014, 0.0
    %v2558 = vmax.f32 %v2398, 0.0
    %v2559 = vmax.f32 %v2400, 0.0
    %v2560 = vmax.f32 %v2018, 0.0
    %v2561 = vmax.f32 %v2020, 0.0
    %v2562 = vmax.f32 %v2404, 0.0
    %v2563 = vmax.f32 %v2406, 0.0
    %v2564 = vmax.f32 %v2022, 0.0
    %v2565 = vmax.f32 %v2024, 0.0
    %v2566 = vmax.f32 %v2408, 0.0
    %v2567 = vmax.f32 %v2410, 0.0
    %v2568 = vmax.f32 %v2028, 0.0
    %v2569 = vmax.f32 %v2030, 0.0
    %v2570 = vmax.f32 %v2414, 0.0
    %v2571 = vmax.f32 %v2416, 0.0
    %v2572 = vmax.f32 %v2032, 0.0
    %v2573 = vmax.f32 %v2034, 0.0
    %v2574 = vmax.f32 %v2418, 0.0
    %v2575 = vmax.f32 %v2420, 0.0
    %v2576 = vmax.f32 %v2038, 0.0
    %v2577 = vmax.f32 %v2040, 0.0
    %v2578 = vmax.f32 %v2424, 0.0
    %v2579 = vmax.f32 %v2426, 0.0
    %v2580 = vmax.f32 %v2042, 0.0
    %v2581 = vmax.f32 %v2044, 0.0
    %v2582 = vmax.f32 %v2428, 0.0
    %v2583 = vmax.f32 %v2430, 0.0
    %v2584 = vmax.f32 %v2048, 0.0
    %v2585 = vmax.f32 %v2050, 0.0
    %v2586 = vmax.f32 %v2434, 0.0
    %v2587 = vmax.f32 %v2436, 0.0
    %v2588 = vmax.f32 %v2052, 0.0
    %v2589 = vmax.f32 %v2054, 0.0
    %v2590 = vmax.f32 %v2438, 0.0
    %v2591 = vmax.f32 %v2440, 0.0
    %v2592 = vmax.f32 %v2058, 0.0
    %v2593 = vmax.f32 %v2060, 0.0
    %v2594 = vmax.f32 %v2444, 0.0
    %v2595 = vmax.f32 %v2446, 0.0
    %v2596 = vmax.f32 %v2062, 0.0
    %v2597 = vmax.f32 %v2064, 0.0
    %v2598 = vmax.f32 %v2448, 0.0
    %v2599 = vmax.f32 %v2450, 0.0
    %v2600 = vmax.f32 %v2068, 0.0
    %v2601 = vmax.f32 %v2070, 0.0
    %v2602 = vmax.f32 %v2454, 0.0
    %v2603 = vmax.f32 %v2456, 0.0
    %v2604 = vmax.f32 %v2072, 0.0
    %v2605 = vmax.f32 %v2074, 0.0
    %v2606 = vmax.f32 %v2458, 0.0
    %v2607 = vmax.f32 %v2460, 0.0
    %v2608 = vmax.f32 %v2078, 0.0
    %v2609 = vmax.f32 %v2080, 0.0
    %v2610 = vmax.f32 %v2464, 0.0
    %v2611 = vmax.f32 %v2466, 0.0
    %v2612 = vmax.f32 %v2082, 0.0
    %v2613 = vmax.f32 %v2084, 0.0
    %v2614 = vmax.f32 %v2468, 0.0
    %v2615 = vmax.f32 %v2470, 0.0
    %v2616 = vmax.f32 %v2088, 0.0
    %v2617 = vmax.f32 %v2090, 0.0
    %v2618 = vmax.f32 %v2474, 0.0
    %v2619 = vmax.f32 %v2476, 0.0
    %v2620 = vmax.f32 %v2092, 0.0
    %v2621 = vmax.f32 %v2094, 0.0
    %v2622 = vmax.f32 %v2478, 0.0
    %v2623 = vmax.f32 %v2480, 0.0
    %v2624 = vmax.f32 %v2098, 0.0
    %v2625 = vmax.f32 %v2100, 0.0
    %v2626 = vmax.f32 %v2484, 0.0
    %v2627 = vmax.f32 %v2486, 0.0
    %v2628 = vmax.f32 %v2102, 0.0
    %v2629 = vmax.f32 %v2104, 0.0
    %v2630 = vmax.f32 %v2488, 0.0
    %v2631 = vmax.f32 %v2490, 0.0
    %v2632 = vmax.f32 %v2108, 0.0
    %v2633 = vmax.f32 %v2110, 0.0
    %v2634 = vmax.f32 %v2494, 0.0
    %v2635 = vmax.f32 %v2496, 0.0
    %v2636 = vmax.f32 %v2112, 0.0
    %v2637 = vmax.f32 %v2114, 0.0
    %v2638 = vmax.f32 %v2498, 0.0
    %v2639 = vmax.f32 %v2500, 0.0
    %v2640 = vmax.f32 %v2118, 0.0
    %v2641 = vmax.f32 %v2120, 0.0
    %v2642 = vmax.f32 %v2504, 0.0
    %v2643 = vmax.f32 %v2506, 0.0
    %v2644 = vmax.f32 %v2122, 0.0
    %v2645 = vmax.f32 %v2124, 0.0
    %v2646 = vmax.f32 %v2508, 0.0
    %v2647 = vmax.f32 %v2510, 0.0
    %v2648 = vmax.f32 %v2128, 0.0
    %v2649 = vmax.f32 %v2130, 0.0
    %v2650 = vmax.f32 %v2514, 0.0
    %v2651 = vmax.f32 %v2516, 0.0
    %v2652 = vmax.f32 %v2132, 0.0
    %v2653 = vmax.f32 %v2134, 0.0
    %v2654 = vmax.f32 %v2518, 0.0
    %v2655 = vmax.f32 %v2520, 0.0
    %v2656 = vmax.f32 %v2138, 0.0
    %v2657 = vmax.f32 %v2140, 0.0
    %v2658 = vmax.f32 %v2524, 0.0
    %v2659 = vmax.f32 %v2526, 0.0
    %v2660 = vmax.f32 %v2142, 0.0
    %v2661 = vmax.f32 %v2144, 0.0
    %v2662 = vmax.f32 %v2528, 0.0
    %v2663 = vmax.f32 %v2530, 0.0
    %v2664 = vmax.f32 %v2148, 0.0
    %v2665 = vmax.f32 %v2150, 0.0
    %v2666 = vmax.f32 %v2534, 0.0
    %v2667 = vmax.f32 %v2536, 0.0
    %v2668 = vmax.f32 %v2152, 0.0
    %v2669 = vmax.f32 %v2154, 0.0
    %v2670 = vmax.f32 %v2538, 0.0
    %v2671 = vmax.f32 %v2540, 0.0
    %v2672 = vmax.f32 %v2158, 0.0
    %v2673 = vmax.f32 %v2160, 0.0
    %v2674 = vmax.f32 %v2544, 0.0
    %v2675 = vmax.f32 %v2546, 0.0
    %v2676 = vmax.f32 %v2162, 0.0
    %v2677 = vmax.f32 %v2164, 0.0
    %v2678 = vmax.f32 %v2548, 0.0
    %v2679 = vmax.f32 %v2550, 0.0
    %v2680 = vld [vmem:[%s5] sm:$0xf]
    %v2682 = vlaneseq
    %v2683 = vshrl.u32 %v2682, 7
    %v2684 = vsub.s32 0, %v2683
    %v2685 = vrot.slane %v2680, %v2684
    %v2686 = vlaneseq
    %v2687 = vshrl.u32 %v2686, 7
    %v2688 = vsub.s32 1, %v2687
    %v2689 = vrot.slane %v2680, %v2688
    %v2690 = vlaneseq
    %v2691 = vshrl.u32 %v2690, 7
    %v2692 = vsub.s32 2, %v2691
    %v2693 = vrot.slane %v2680, %v2692
    %v2694 = vlaneseq
    %v2695 = vshrl.u32 %v2694, 7
    %v2696 = vsub.s32 3, %v2695
    %v2697 = vrot.slane %v2680, %v2696
    %v2702 = vmul.f32 %v2552, %v2685
    %v2703 = vmul.f32 %v2553, %v2689
    %v2704 = vmul.f32 %v2554, %v2693
    %v2705 = vmul.f32 %v2555, %v2697
    %v2706 = vmul.f32 %v2556, %v2685
    %v2707 = vmul.f32 %v2557, %v2689
    %v2708 = vmul.f32 %v2558, %v2693
    %v2709 = vmul.f32 %v2559, %v2697
    %v2710 = vmul.f32 %v2560, %v2685
    %v2711 = vmul.f32 %v2561, %v2689
    %v2712 = vmul.f32 %v2562, %v2693
    %v2713 = vmul.f32 %v2563, %v2697
    %v2714 = vmul.f32 %v2564, %v2685
    %v2715 = vmul.f32 %v2565, %v2689
    %v2716 = vmul.f32 %v2566, %v2693
    %v2717 = vmul.f32 %v2567, %v2697
    %v2718 = vmul.f32 %v2568, %v2685
    %v2719 = vmul.f32 %v2569, %v2689
    %v2720 = vmul.f32 %v2570, %v2693
    %v2721 = vmul.f32 %v2571, %v2697
    %v2722 = vmul.f32 %v2572, %v2685
    %v2723 = vmul.f32 %v2573, %v2689
    %v2724 = vmul.f32 %v2574, %v2693
    %v2725 = vmul.f32 %v2575, %v2697
    %v2726 = vmul.f32 %v2576, %v2685
    %v2727 = vmul.f32 %v2577, %v2689
    %v2728 = vmul.f32 %v2578, %v2693
    %v2729 = vmul.f32 %v2579, %v2697
    %v2730 = vmul.f32 %v2580, %v2685
    %v2731 = vmul.f32 %v2581, %v2689
    %v2732 = vmul.f32 %v2582, %v2693
    %v2733 = vmul.f32 %v2583, %v2697
    %v2734 = vmul.f32 %v2584, %v2685
    %v2735 = vmul.f32 %v2585, %v2689
    %v2736 = vmul.f32 %v2586, %v2693
    %v2737 = vmul.f32 %v2587, %v2697
    %v2738 = vmul.f32 %v2588, %v2685
    %v2739 = vmul.f32 %v2589, %v2689
    %v2740 = vmul.f32 %v2590, %v2693
    %v2741 = vmul.f32 %v2591, %v2697
    %v2742 = vmul.f32 %v2592, %v2685
    %v2743 = vmul.f32 %v2593, %v2689
    %v2744 = vmul.f32 %v2594, %v2693
    %v2745 = vmul.f32 %v2595, %v2697
    %v2746 = vmul.f32 %v2596, %v2685
    %v2747 = vmul.f32 %v2597, %v2689
    %v2748 = vmul.f32 %v2598, %v2693
    %v2749 = vmul.f32 %v2599, %v2697
    %v2750 = vmul.f32 %v2600, %v2685
    %v2751 = vmul.f32 %v2601, %v2689
    %v2752 = vmul.f32 %v2602, %v2693
    %v2753 = vmul.f32 %v2603, %v2697
    %v2754 = vmul.f32 %v2604, %v2685
    %v2755 = vmul.f32 %v2605, %v2689
    %v2756 = vmul.f32 %v2606, %v2693
    %v2757 = vmul.f32 %v2607, %v2697
    %v2758 = vmul.f32 %v2608, %v2685
    %v2759 = vmul.f32 %v2609, %v2689
    %v2760 = vmul.f32 %v2610, %v2693
    %v2761 = vmul.f32 %v2611, %v2697
    %v2762 = vmul.f32 %v2612, %v2685
    %v2763 = vmul.f32 %v2613, %v2689
    %v2764 = vmul.f32 %v2614, %v2693
    %v2765 = vmul.f32 %v2615, %v2697
    %v2766 = vmul.f32 %v2616, %v2685
    %v2767 = vmul.f32 %v2617, %v2689
    %v2768 = vmul.f32 %v2618, %v2693
    %v2769 = vmul.f32 %v2619, %v2697
    %v2770 = vmul.f32 %v2620, %v2685
    %v2771 = vmul.f32 %v2621, %v2689
    %v2772 = vmul.f32 %v2622, %v2693
    %v2773 = vmul.f32 %v2623, %v2697
    %v2774 = vmul.f32 %v2624, %v2685
    %v2775 = vmul.f32 %v2625, %v2689
    %v2776 = vmul.f32 %v2626, %v2693
    %v2777 = vmul.f32 %v2627, %v2697
    %v2778 = vmul.f32 %v2628, %v2685
    %v2779 = vmul.f32 %v2629, %v2689
    %v2780 = vmul.f32 %v2630, %v2693
    %v2781 = vmul.f32 %v2631, %v2697
    %v2782 = vmul.f32 %v2632, %v2685
    %v2783 = vmul.f32 %v2633, %v2689
    %v2784 = vmul.f32 %v2634, %v2693
    %v2785 = vmul.f32 %v2635, %v2697
    %v2786 = vmul.f32 %v2636, %v2685
    %v2787 = vmul.f32 %v2637, %v2689
    %v2788 = vmul.f32 %v2638, %v2693
    %v2789 = vmul.f32 %v2639, %v2697
    %v2790 = vmul.f32 %v2640, %v2685
    %v2791 = vmul.f32 %v2641, %v2689
    %v2792 = vmul.f32 %v2642, %v2693
    %v2793 = vmul.f32 %v2643, %v2697
    %v2794 = vmul.f32 %v2644, %v2685
    %v2795 = vmul.f32 %v2645, %v2689
    %v2796 = vmul.f32 %v2646, %v2693
    %v2797 = vmul.f32 %v2647, %v2697
    %v2798 = vmul.f32 %v2648, %v2685
    %v2799 = vmul.f32 %v2649, %v2689
    %v2800 = vmul.f32 %v2650, %v2693
    %v2801 = vmul.f32 %v2651, %v2697
    %v2802 = vmul.f32 %v2652, %v2685
    %v2803 = vmul.f32 %v2653, %v2689
    %v2804 = vmul.f32 %v2654, %v2693
    %v2805 = vmul.f32 %v2655, %v2697
    %v2806 = vmul.f32 %v2656, %v2685
    %v2807 = vmul.f32 %v2657, %v2689
    %v2808 = vmul.f32 %v2658, %v2693
    %v2809 = vmul.f32 %v2659, %v2697
    %v2810 = vmul.f32 %v2660, %v2685
    %v2811 = vmul.f32 %v2661, %v2689
    %v2812 = vmul.f32 %v2662, %v2693
    %v2813 = vmul.f32 %v2663, %v2697
    %v2814 = vmul.f32 %v2664, %v2685
    %v2815 = vmul.f32 %v2665, %v2689
    %v2816 = vmul.f32 %v2666, %v2693
    %v2817 = vmul.f32 %v2667, %v2697
    %v2818 = vmul.f32 %v2668, %v2685
    %v2819 = vmul.f32 %v2669, %v2689
    %v2820 = vmul.f32 %v2670, %v2693
    %v2821 = vmul.f32 %v2671, %v2697
    %v2822 = vmul.f32 %v2672, %v2685
    %v2823 = vmul.f32 %v2673, %v2689
    %v2824 = vmul.f32 %v2674, %v2693
    %v2825 = vmul.f32 %v2675, %v2697
    %v2826 = vmul.f32 %v2676, %v2685
    %v2827 = vmul.f32 %v2677, %v2689
    %v2828 = vmul.f32 %v2678, %v2693
    %v2829 = vmul.f32 %v2679, %v2697
    %v2830 = vadd.f32 %v2702, %v2703
    %v2831 = vadd.f32 %v2830, %v2704
    %v2832 = vadd.f32 %v2831, %v2705
    %2833 = vadd.xlane.f32.xlu0 %v2832
    %v2834 = vpop.xlane.xlu0 %2833
    %v2835 = vadd.f32 %v2706, %v2707
    %v2836 = vadd.f32 %v2835, %v2708
    %v2837 = vadd.f32 %v2836, %v2709
    %2838 = vadd.xlane.f32.xlu0 %v2837
    %v2839 = vpop.xlane.xlu0 %2838
    %v2840 = vadd.f32 %v2710, %v2711
    %v2841 = vadd.f32 %v2840, %v2712
    %v2842 = vadd.f32 %v2841, %v2713
    %2843 = vadd.xlane.f32.xlu0 %v2842
    %v2844 = vpop.xlane.xlu0 %2843
    %v2845 = vadd.f32 %v2714, %v2715
    %v2846 = vadd.f32 %v2845, %v2716
    %v2847 = vadd.f32 %v2846, %v2717
    %2848 = vadd.xlane.f32.xlu0 %v2847
    %v2849 = vpop.xlane.xlu0 %2848
    %v2850 = vadd.f32 %v2718, %v2719
    %v2851 = vadd.f32 %v2850, %v2720
    %v2852 = vadd.f32 %v2851, %v2721
    %2853 = vadd.xlane.f32.xlu0 %v2852
    %v2854 = vpop.xlane.xlu0 %2853
    %v2855 = vadd.f32 %v2722, %v2723
    %v2856 = vadd.f32 %v2855, %v2724
    %v2857 = vadd.f32 %v2856, %v2725
    %2858 = vadd.xlane.f32.xlu0 %v2857
    %v2859 = vpop.xlane.xlu0 %2858
    %v2860 = vadd.f32 %v2726, %v2727
    %v2861 = vadd.f32 %v2860, %v2728
    %v2862 = vadd.f32 %v2861, %v2729
    %2863 = vadd.xlane.f32.xlu0 %v2862
    %v2864 = vpop.xlane.xlu0 %2863
    %v2865 = vadd.f32 %v2730, %v2731
    %v2866 = vadd.f32 %v2865, %v2732
    %v2867 = vadd.f32 %v2866, %v2733
    %2868 = vadd.xlane.f32.xlu0 %v2867
    %v2869 = vpop.xlane.xlu0 %2868
    %v2870 = vadd.f32 %v2734, %v2735
    %v2871 = vadd.f32 %v2870, %v2736
    %v2872 = vadd.f32 %v2871, %v2737
    %2873 = vadd.xlane.f32.xlu0 %v2872
    %v2874 = vpop.xlane.xlu0 %2873
    %v2875 = vadd.f32 %v2738, %v2739
    %v2876 = vadd.f32 %v2875, %v2740
    %v2877 = vadd.f32 %v2876, %v2741
    %2878 = vadd.xlane.f32.xlu0 %v2877
    %v2879 = vpop.xlane.xlu0 %2878
    %v2880 = vadd.f32 %v2742, %v2743
    %v2881 = vadd.f32 %v2880, %v2744
    %v2882 = vadd.f32 %v2881, %v2745
    %2883 = vadd.xlane.f32.xlu0 %v2882
    %v2884 = vpop.xlane.xlu0 %2883
    %v2885 = vadd.f32 %v2746, %v2747
    %v2886 = vadd.f32 %v2885, %v2748
    %v2887 = vadd.f32 %v2886, %v2749
    %2888 = vadd.xlane.f32.xlu0 %v2887
    %v2889 = vpop.xlane.xlu0 %2888
    %v2890 = vadd.f32 %v2750, %v2751
    %v2891 = vadd.f32 %v2890, %v2752
    %v2892 = vadd.f32 %v2891, %v2753
    %2893 = vadd.xlane.f32.xlu0 %v2892
    %v2894 = vpop.xlane.xlu0 %2893
    %v2895 = vadd.f32 %v2754, %v2755
    %v2896 = vadd.f32 %v2895, %v2756
    %v2897 = vadd.f32 %v2896, %v2757
    %2898 = vadd.xlane.f32.xlu0 %v2897
    %v2899 = vpop.xlane.xlu0 %2898
    %v2900 = vadd.f32 %v2758, %v2759
    %v2901 = vadd.f32 %v2900, %v2760
    %v2902 = vadd.f32 %v2901, %v2761
    %2903 = vadd.xlane.f32.xlu0 %v2902
    %v2904 = vpop.xlane.xlu0 %2903
    %v2905 = vadd.f32 %v2762, %v2763
    %v2906 = vadd.f32 %v2905, %v2764
    %v2907 = vadd.f32 %v2906, %v2765
    %2908 = vadd.xlane.f32.xlu0 %v2907
    %v2909 = vpop.xlane.xlu0 %2908
    %v2910 = vadd.f32 %v2766, %v2767
    %v2911 = vadd.f32 %v2910, %v2768
    %v2912 = vadd.f32 %v2911, %v2769
    %2913 = vadd.xlane.f32.xlu0 %v2912
    %v2914 = vpop.xlane.xlu0 %2913
    %v2915 = vadd.f32 %v2770, %v2771
    %v2916 = vadd.f32 %v2915, %v2772
    %v2917 = vadd.f32 %v2916, %v2773
    %2918 = vadd.xlane.f32.xlu0 %v2917
    %v2919 = vpop.xlane.xlu0 %2918
    %v2920 = vadd.f32 %v2774, %v2775
    %v2921 = vadd.f32 %v2920, %v2776
    %v2922 = vadd.f32 %v2921, %v2777
    %2923 = vadd.xlane.f32.xlu0 %v2922
    %v2924 = vpop.xlane.xlu0 %2923
    %v2925 = vadd.f32 %v2778, %v2779
    %v2926 = vadd.f32 %v2925, %v2780
    %v2927 = vadd.f32 %v2926, %v2781
    %2928 = vadd.xlane.f32.xlu0 %v2927
    %v2929 = vpop.xlane.xlu0 %2928
    %v2930 = vadd.f32 %v2782, %v2783
    %v2931 = vadd.f32 %v2930, %v2784
    %v2932 = vadd.f32 %v2931, %v2785
    %2933 = vadd.xlane.f32.xlu0 %v2932
    %v2934 = vpop.xlane.xlu0 %2933
    %v2935 = vadd.f32 %v2786, %v2787
    %v2936 = vadd.f32 %v2935, %v2788
    %v2937 = vadd.f32 %v2936, %v2789
    %2938 = vadd.xlane.f32.xlu0 %v2937
    %v2939 = vpop.xlane.xlu0 %2938
    %v2940 = vadd.f32 %v2790, %v2791
    %v2941 = vadd.f32 %v2940, %v2792
    %v2942 = vadd.f32 %v2941, %v2793
    %2943 = vadd.xlane.f32.xlu0 %v2942
    %v2944 = vpop.xlane.xlu0 %2943
    %v2945 = vadd.f32 %v2794, %v2795
    %v2946 = vadd.f32 %v2945, %v2796
    %v2947 = vadd.f32 %v2946, %v2797
    %2948 = vadd.xlane.f32.xlu0 %v2947
    %v2949 = vpop.xlane.xlu0 %2948
    %v2950 = vadd.f32 %v2798, %v2799
    %v2951 = vadd.f32 %v2950, %v2800
    %v2952 = vadd.f32 %v2951, %v2801
    %2953 = vadd.xlane.f32.xlu0 %v2952
    %v2954 = vpop.xlane.xlu0 %2953
    %v2955 = vadd.f32 %v2802, %v2803
    %v2956 = vadd.f32 %v2955, %v2804
    %v2957 = vadd.f32 %v2956, %v2805
    %2958 = vadd.xlane.f32.xlu0 %v2957
    %v2959 = vpop.xlane.xlu0 %2958
    %v2960 = vadd.f32 %v2806, %v2807
    %v2961 = vadd.f32 %v2960, %v2808
    %v2962 = vadd.f32 %v2961, %v2809
    %2963 = vadd.xlane.f32.xlu0 %v2962
    %v2964 = vpop.xlane.xlu0 %2963
    %v2965 = vadd.f32 %v2810, %v2811
    %v2966 = vadd.f32 %v2965, %v2812
    %v2967 = vadd.f32 %v2966, %v2813
    %2968 = vadd.xlane.f32.xlu0 %v2967
    %v2969 = vpop.xlane.xlu0 %2968
    %v2970 = vadd.f32 %v2814, %v2815
    %v2971 = vadd.f32 %v2970, %v2816
    %v2972 = vadd.f32 %v2971, %v2817
    %2973 = vadd.xlane.f32.xlu0 %v2972
    %v2974 = vpop.xlane.xlu0 %2973
    %v2975 = vadd.f32 %v2818, %v2819
    %v2976 = vadd.f32 %v2975, %v2820
    %v2977 = vadd.f32 %v2976, %v2821
    %2978 = vadd.xlane.f32.xlu0 %v2977
    %v2979 = vpop.xlane.xlu0 %2978
    %v2980 = vadd.f32 %v2822, %v2823
    %v2981 = vadd.f32 %v2980, %v2824
    %v2982 = vadd.f32 %v2981, %v2825
    %2983 = vadd.xlane.f32.xlu0 %v2982
    %v2984 = vpop.xlane.xlu0 %2983
    %v2985 = vadd.f32 %v2826, %v2827
    %v2986 = vadd.f32 %v2985, %v2828
    %v2987 = vadd.f32 %v2986, %v2829
    %2988 = vadd.xlane.f32.xlu0 %v2987
    %v2989 = vpop.xlane.xlu0 %2988
    %s2990 = sld [smem:[#allocation2]]
    %v2991 = vstv %s2990
    %v2992 = vadd.f32 %v2834, %v2991
    %v2993 = vadd.f32 %v2839, %v2991
    %v2994 = vadd.f32 %v2844, %v2991
    %v2995 = vadd.f32 %v2849, %v2991
    %v2996 = vadd.f32 %v2854, %v2991
    %v2997 = vadd.f32 %v2859, %v2991
    %v2998 = vadd.f32 %v2864, %v2991
    %v2999 = vadd.f32 %v2869, %v2991
    %v3000 = vadd.f32 %v2874, %v2991
    %v3001 = vadd.f32 %v2879, %v2991
    %v3002 = vadd.f32 %v2884, %v2991
    %v3003 = vadd.f32 %v2889, %v2991
    %v3004 = vadd.f32 %v2894, %v2991
    %v3005 = vadd.f32 %v2899, %v2991
    %v3006 = vadd.f32 %v2904, %v2991
    %v3007 = vadd.f32 %v2909, %v2991
    %v3008 = vadd.f32 %v2914, %v2991
    %v3009 = vadd.f32 %v2919, %v2991
    %v3010 = vadd.f32 %v2924, %v2991
    %v3011 = vadd.f32 %v2929, %v2991
    %v3012 = vadd.f32 %v2934, %v2991
    %v3013 = vadd.f32 %v2939, %v2991
    %v3014 = vadd.f32 %v2944, %v2991
    %v3015 = vadd.f32 %v2949, %v2991
    %v3016 = vadd.f32 %v2954, %v2991
    %v3017 = vadd.f32 %v2959, %v2991
    %v3018 = vadd.f32 %v2964, %v2991
    %v3019 = vadd.f32 %v2969, %v2991
    %v3020 = vadd.f32 %v2974, %v2991
    %v3021 = vadd.f32 %v2979, %v2991
    %v3022 = vadd.f32 %v2984, %v2991
    %v3023 = vadd.f32 %v2989, %v2991
    %v3056 = vlaneseq
    %v3057 = vshrl.u32 %v3056, 7
    %v3058 = vsub.s32 0, %v3057
    %v3059 = vrot.slane %v2992, %v3058
    %v3060 = vlaneseq
    %v3061 = vshrl.u32 %v3060, 7
    %v3062 = vsub.s32 1, %v3061
    %v3063 = vrot.slane %v2992, %v3062
    %v3064 = vlaneseq
    %v3065 = vshrl.u32 %v3064, 7
    %v3066 = vsub.s32 2, %v3065
    %v3067 = vrot.slane %v2992, %v3066
    %v3068 = vlaneseq
    %v3069 = vshrl.u32 %v3068, 7
    %v3070 = vsub.s32 3, %v3069
    %v3071 = vrot.slane %v2992, %v3070
    %v3072 = vlaneseq
    %v3073 = vshrl.u32 %v3072, 7
    %v3074 = vsub.s32 4, %v3073
    %v3075 = vrot.slane %v2992, %v3074
    %v3076 = vlaneseq
    %v3077 = vshrl.u32 %v3076, 7
    %v3078 = vsub.s32 5, %v3077
    %v3079 = vrot.slane %v2992, %v3078
    %v3080 = vlaneseq
    %v3081 = vshrl.u32 %v3080, 7
    %v3082 = vsub.s32 6, %v3081
    %v3083 = vrot.slane %v2992, %v3082
    %v3084 = vlaneseq
    %v3085 = vshrl.u32 %v3084, 7
    %v3086 = vsub.s32 7, %v3085
    %v3087 = vrot.slane %v2992, %v3086
    %v3088 = vlaneseq
    %v3089 = vshrl.u32 %v3088, 7
    %v3090 = vsub.s32 0, %v3089
    %v3091 = vrot.slane %v2993, %v3090
    %v3092 = vlaneseq
    %v3093 = vshrl.u32 %v3092, 7
    %v3094 = vsub.s32 1, %v3093
    %v3095 = vrot.slane %v2993, %v3094
    %v3096 = vlaneseq
    %v3097 = vshrl.u32 %v3096, 7
    %v3098 = vsub.s32 2, %v3097
    %v3099 = vrot.slane %v2993, %v3098
    %v3100 = vlaneseq
    %v3101 = vshrl.u32 %v3100, 7
    %v3102 = vsub.s32 3, %v3101
    %v3103 = vrot.slane %v2993, %v3102
    %v3104 = vlaneseq
    %v3105 = vshrl.u32 %v3104, 7
    %v3106 = vsub.s32 4, %v3105
    %v3107 = vrot.slane %v2993, %v3106
    %v3108 = vlaneseq
    %v3109 = vshrl.u32 %v3108, 7
    %v3110 = vsub.s32 5, %v3109
    %v3111 = vrot.slane %v2993, %v3110
    %v3112 = vlaneseq
    %v3113 = vshrl.u32 %v3112, 7
    %v3114 = vsub.s32 6, %v3113
    %v3115 = vrot.slane %v2993, %v3114
    %v3116 = vlaneseq
    %v3117 = vshrl.u32 %v3116, 7
    %v3118 = vsub.s32 7, %v3117
    %v3119 = vrot.slane %v2993, %v3118
    %v3120 = vlaneseq
    %v3121 = vshrl.u32 %v3120, 7
    %v3122 = vsub.s32 0, %v3121
    %v3123 = vrot.slane %v2994, %v3122
    %v3124 = vlaneseq
    %v3125 = vshrl.u32 %v3124, 7
    %v3126 = vsub.s32 1, %v3125
    %v3127 = vrot.slane %v2994, %v3126
    %v3128 = vlaneseq
    %v3129 = vshrl.u32 %v3128, 7
    %v3130 = vsub.s32 2, %v3129
    %v3131 = vrot.slane %v2994, %v3130
    %v3132 = vlaneseq
    %v3133 = vshrl.u32 %v3132, 7
    %v3134 = vsub.s32 3, %v3133
    %v3135 = vrot.slane %v2994, %v3134
    %v3136 = vlaneseq
    %v3137 = vshrl.u32 %v3136, 7
    %v3138 = vsub.s32 4, %v3137
    %v3139 = vrot.slane %v2994, %v3138
    %v3140 = vlaneseq
    %v3141 = vshrl.u32 %v3140, 7
    %v3142 = vsub.s32 5, %v3141
    %v3143 = vrot.slane %v2994, %v3142
    %v3144 = vlaneseq
    %v3145 = vshrl.u32 %v3144, 7
    %v3146 = vsub.s32 6, %v3145
    %v3147 = vrot.slane %v2994, %v3146
    %v3148 = vlaneseq
    %v3149 = vshrl.u32 %v3148, 7
    %v3150 = vsub.s32 7, %v3149
    %v3151 = vrot.slane %v2994, %v3150
    %v3152 = vlaneseq
    %v3153 = vshrl.u32 %v3152, 7
    %v3154 = vsub.s32 0, %v3153
    %v3155 = vrot.slane %v2995, %v3154
    %v3156 = vlaneseq
    %v3157 = vshrl.u32 %v3156, 7
    %v3158 = vsub.s32 1, %v3157
    %v3159 = vrot.slane %v2995, %v3158
    %v3160 = vlaneseq
    %v3161 = vshrl.u32 %v3160, 7
    %v3162 = vsub.s32 2, %v3161
    %v3163 = vrot.slane %v2995, %v3162
    %v3164 = vlaneseq
    %v3165 = vshrl.u32 %v3164, 7
    %v3166 = vsub.s32 3, %v3165
    %v3167 = vrot.slane %v2995, %v3166
    %v3168 = vlaneseq
    %v3169 = vshrl.u32 %v3168, 7
    %v3170 = vsub.s32 4, %v3169
    %v3171 = vrot.slane %v2995, %v3170
    %v3172 = vlaneseq
    %v3173 = vshrl.u32 %v3172, 7
    %v3174 = vsub.s32 5, %v3173
    %v3175 = vrot.slane %v2995, %v3174
    %v3176 = vlaneseq
    %v3177 = vshrl.u32 %v3176, 7
    %v3178 = vsub.s32 6, %v3177
    %v3179 = vrot.slane %v2995, %v3178
    %v3180 = vlaneseq
    %v3181 = vshrl.u32 %v3180, 7
    %v3182 = vsub.s32 7, %v3181
    %v3183 = vrot.slane %v2995, %v3182
    %v3184 = vlaneseq
    %v3185 = vshrl.u32 %v3184, 7
    %v3186 = vsub.s32 0, %v3185
    %v3187 = vrot.slane %v2996, %v3186
    %v3188 = vlaneseq
    %v3189 = vshrl.u32 %v3188, 7
    %v3190 = vsub.s32 1, %v3189
    %v3191 = vrot.slane %v2996, %v3190
    %v3192 = vlaneseq
    %v3193 = vshrl.u32 %v3192, 7
    %v3194 = vsub.s32 2, %v3193
    %v3195 = vrot.slane %v2996, %v3194
    %v3196 = vlaneseq
    %v3197 = vshrl.u32 %v3196, 7
    %v3198 = vsub.s32 3, %v3197
    %v3199 = vrot.slane %v2996, %v3198
    %v3200 = vlaneseq
    %v3201 = vshrl.u32 %v3200, 7
    %v3202 = vsub.s32 4, %v3201
    %v3203 = vrot.slane %v2996, %v3202
    %v3204 = vlaneseq
    %v3205 = vshrl.u32 %v3204, 7
    %v3206 = vsub.s32 5, %v3205
    %v3207 = vrot.slane %v2996, %v3206
    %v3208 = vlaneseq
    %v3209 = vshrl.u32 %v3208, 7
    %v3210 = vsub.s32 6, %v3209
    %v3211 = vrot.slane %v2996, %v3210
    %v3212 = vlaneseq
    %v3213 = vshrl.u32 %v3212, 7
    %v3214 = vsub.s32 7, %v3213
    %v3215 = vrot.slane %v2996, %v3214
    %v3216 = vlaneseq
    %v3217 = vshrl.u32 %v3216, 7
    %v3218 = vsub.s32 0, %v3217
    %v3219 = vrot.slane %v2997, %v3218
    %v3220 = vlaneseq
    %v3221 = vshrl.u32 %v3220, 7
    %v3222 = vsub.s32 1, %v3221
    %v3223 = vrot.slane %v2997, %v3222
    %v3224 = vlaneseq
    %v3225 = vshrl.u32 %v3224, 7
    %v3226 = vsub.s32 2, %v3225
    %v3227 = vrot.slane %v2997, %v3226
    %v3228 = vlaneseq
    %v3229 = vshrl.u32 %v3228, 7
    %v3230 = vsub.s32 3, %v3229
    %v3231 = vrot.slane %v2997, %v3230
    %v3232 = vlaneseq
    %v3233 = vshrl.u32 %v3232, 7
    %v3234 = vsub.s32 4, %v3233
    %v3235 = vrot.slane %v2997, %v3234
    %v3236 = vlaneseq
    %v3237 = vshrl.u32 %v3236, 7
    %v3238 = vsub.s32 5, %v3237
    %v3239 = vrot.slane %v2997, %v3238
    %v3240 = vlaneseq
    %v3241 = vshrl.u32 %v3240, 7
    %v3242 = vsub.s32 6, %v3241
    %v3243 = vrot.slane %v2997, %v3242
    %v3244 = vlaneseq
    %v3245 = vshrl.u32 %v3244, 7
    %v3246 = vsub.s32 7, %v3245
    %v3247 = vrot.slane %v2997, %v3246
    %v3248 = vlaneseq
    %v3249 = vshrl.u32 %v3248, 7
    %v3250 = vsub.s32 0, %v3249
    %v3251 = vrot.slane %v2998, %v3250
    %v3252 = vlaneseq
    %v3253 = vshrl.u32 %v3252, 7
    %v3254 = vsub.s32 1, %v3253
    %v3255 = vrot.slane %v2998, %v3254
    %v3256 = vlaneseq
    %v3257 = vshrl.u32 %v3256, 7
    %v3258 = vsub.s32 2, %v3257
    %v3259 = vrot.slane %v2998, %v3258
    %v3260 = vlaneseq
    %v3261 = vshrl.u32 %v3260, 7
    %v3262 = vsub.s32 3, %v3261
    %v3263 = vrot.slane %v2998, %v3262
    %v3264 = vlaneseq
    %v3265 = vshrl.u32 %v3264, 7
    %v3266 = vsub.s32 4, %v3265
    %v3267 = vrot.slane %v2998, %v3266
    %v3268 = vlaneseq
    %v3269 = vshrl.u32 %v3268, 7
    %v3270 = vsub.s32 5, %v3269
    %v3271 = vrot.slane %v2998, %v3270
    %v3272 = vlaneseq
    %v3273 = vshrl.u32 %v3272, 7
    %v3274 = vsub.s32 6, %v3273
    %v3275 = vrot.slane %v2998, %v3274
    %v3276 = vlaneseq
    %v3277 = vshrl.u32 %v3276, 7
    %v3278 = vsub.s32 7, %v3277
    %v3279 = vrot.slane %v2998, %v3278
    %v3280 = vlaneseq
    %v3281 = vshrl.u32 %v3280, 7
    %v3282 = vsub.s32 0, %v3281
    %v3283 = vrot.slane %v2999, %v3282
    %v3284 = vlaneseq
    %v3285 = vshrl.u32 %v3284, 7
    %v3286 = vsub.s32 1, %v3285
    %v3287 = vrot.slane %v2999, %v3286
    %v3288 = vlaneseq
    %v3289 = vshrl.u32 %v3288, 7
    %v3290 = vsub.s32 2, %v3289
    %v3291 = vrot.slane %v2999, %v3290
    %v3292 = vlaneseq
    %v3293 = vshrl.u32 %v3292, 7
    %v3294 = vsub.s32 3, %v3293
    %v3295 = vrot.slane %v2999, %v3294
    %v3296 = vlaneseq
    %v3297 = vshrl.u32 %v3296, 7
    %v3298 = vsub.s32 4, %v3297
    %v3299 = vrot.slane %v2999, %v3298
    %v3300 = vlaneseq
    %v3301 = vshrl.u32 %v3300, 7
    %v3302 = vsub.s32 5, %v3301
    %v3303 = vrot.slane %v2999, %v3302
    %v3304 = vlaneseq
    %v3305 = vshrl.u32 %v3304, 7
    %v3306 = vsub.s32 6, %v3305
    %v3307 = vrot.slane %v2999, %v3306
    %v3308 = vlaneseq
    %v3309 = vshrl.u32 %v3308, 7
    %v3310 = vsub.s32 7, %v3309
    %v3311 = vrot.slane %v2999, %v3310
    %v3312 = vlaneseq
    %v3313 = vshrl.u32 %v3312, 7
    %v3314 = vsub.s32 0, %v3313
    %v3315 = vrot.slane %v3000, %v3314
    %v3316 = vlaneseq
    %v3317 = vshrl.u32 %v3316, 7
    %v3318 = vsub.s32 1, %v3317
    %v3319 = vrot.slane %v3000, %v3318
    %v3320 = vlaneseq
    %v3321 = vshrl.u32 %v3320, 7
    %v3322 = vsub.s32 2, %v3321
    %v3323 = vrot.slane %v3000, %v3322
    %v3324 = vlaneseq
    %v3325 = vshrl.u32 %v3324, 7
    %v3326 = vsub.s32 3, %v3325
    %v3327 = vrot.slane %v3000, %v3326
    %v3328 = vlaneseq
    %v3329 = vshrl.u32 %v3328, 7
    %v3330 = vsub.s32 4, %v3329
    %v3331 = vrot.slane %v3000, %v3330
    %v3332 = vlaneseq
    %v3333 = vshrl.u32 %v3332, 7
    %v3334 = vsub.s32 5, %v3333
    %v3335 = vrot.slane %v3000, %v3334
    %v3336 = vlaneseq
    %v3337 = vshrl.u32 %v3336, 7
    %v3338 = vsub.s32 6, %v3337
    %v3339 = vrot.slane %v3000, %v3338
    %v3340 = vlaneseq
    %v3341 = vshrl.u32 %v3340, 7
    %v3342 = vsub.s32 7, %v3341
    %v3343 = vrot.slane %v3000, %v3342
    %v3344 = vlaneseq
    %v3345 = vshrl.u32 %v3344, 7
    %v3346 = vsub.s32 0, %v3345
    %v3347 = vrot.slane %v3001, %v3346
    %v3348 = vlaneseq
    %v3349 = vshrl.u32 %v3348, 7
    %v3350 = vsub.s32 1, %v3349
    %v3351 = vrot.slane %v3001, %v3350
    %v3352 = vlaneseq
    %v3353 = vshrl.u32 %v3352, 7
    %v3354 = vsub.s32 2, %v3353
    %v3355 = vrot.slane %v3001, %v3354
    %v3356 = vlaneseq
    %v3357 = vshrl.u32 %v3356, 7
    %v3358 = vsub.s32 3, %v3357
    %v3359 = vrot.slane %v3001, %v3358
    %v3360 = vlaneseq
    %v3361 = vshrl.u32 %v3360, 7
    %v3362 = vsub.s32 4, %v3361
    %v3363 = vrot.slane %v3001, %v3362
    %v3364 = vlaneseq
    %v3365 = vshrl.u32 %v3364, 7
    %v3366 = vsub.s32 5, %v3365
    %v3367 = vrot.slane %v3001, %v3366
    %v3368 = vlaneseq
    %v3369 = vshrl.u32 %v3368, 7
    %v3370 = vsub.s32 6, %v3369
    %v3371 = vrot.slane %v3001, %v3370
    %v3372 = vlaneseq
    %v3373 = vshrl.u32 %v3372, 7
    %v3374 = vsub.s32 7, %v3373
    %v3375 = vrot.slane %v3001, %v3374
    %v3376 = vlaneseq
    %v3377 = vshrl.u32 %v3376, 7
    %v3378 = vsub.s32 0, %v3377
    %v3379 = vrot.slane %v3002, %v3378
    %v3380 = vlaneseq
    %v3381 = vshrl.u32 %v3380, 7
    %v3382 = vsub.s32 1, %v3381
    %v3383 = vrot.slane %v3002, %v3382
    %v3384 = vlaneseq
    %v3385 = vshrl.u32 %v3384, 7
    %v3386 = vsub.s32 2, %v3385
    %v3387 = vrot.slane %v3002, %v3386
    %v3388 = vlaneseq
    %v3389 = vshrl.u32 %v3388, 7
    %v3390 = vsub.s32 3, %v3389
    %v3391 = vrot.slane %v3002, %v3390
    %v3392 = vlaneseq
    %v3393 = vshrl.u32 %v3392, 7
    %v3394 = vsub.s32 4, %v3393
    %v3395 = vrot.slane %v3002, %v3394
    %v3396 = vlaneseq
    %v3397 = vshrl.u32 %v3396, 7
    %v3398 = vsub.s32 5, %v3397
    %v3399 = vrot.slane %v3002, %v3398
    %v3400 = vlaneseq
    %v3401 = vshrl.u32 %v3400, 7
    %v3402 = vsub.s32 6, %v3401
    %v3403 = vrot.slane %v3002, %v3402
    %v3404 = vlaneseq
    %v3405 = vshrl.u32 %v3404, 7
    %v3406 = vsub.s32 7, %v3405
    %v3407 = vrot.slane %v3002, %v3406
    %v3408 = vlaneseq
    %v3409 = vshrl.u32 %v3408, 7
    %v3410 = vsub.s32 0, %v3409
    %v3411 = vrot.slane %v3003, %v3410
    %v3412 = vlaneseq
    %v3413 = vshrl.u32 %v3412, 7
    %v3414 = vsub.s32 1, %v3413
    %v3415 = vrot.slane %v3003, %v3414
    %v3416 = vlaneseq
    %v3417 = vshrl.u32 %v3416, 7
    %v3418 = vsub.s32 2, %v3417
    %v3419 = vrot.slane %v3003, %v3418
    %v3420 = vlaneseq
    %v3421 = vshrl.u32 %v3420, 7
    %v3422 = vsub.s32 3, %v3421
    %v3423 = vrot.slane %v3003, %v3422
    %v3424 = vlaneseq
    %v3425 = vshrl.u32 %v3424, 7
    %v3426 = vsub.s32 4, %v3425
    %v3427 = vrot.slane %v3003, %v3426
    %v3428 = vlaneseq
    %v3429 = vshrl.u32 %v3428, 7
    %v3430 = vsub.s32 5, %v3429
    %v3431 = vrot.slane %v3003, %v3430
    %v3432 = vlaneseq
    %v3433 = vshrl.u32 %v3432, 7
    %v3434 = vsub.s32 6, %v3433
    %v3435 = vrot.slane %v3003, %v3434
    %v3436 = vlaneseq
    %v3437 = vshrl.u32 %v3436, 7
    %v3438 = vsub.s32 7, %v3437
    %v3439 = vrot.slane %v3003, %v3438
    %v3440 = vlaneseq
    %v3441 = vshrl.u32 %v3440, 7
    %v3442 = vsub.s32 0, %v3441
    %v3443 = vrot.slane %v3004, %v3442
    %v3444 = vlaneseq
    %v3445 = vshrl.u32 %v3444, 7
    %v3446 = vsub.s32 1, %v3445
    %v3447 = vrot.slane %v3004, %v3446
    %v3448 = vlaneseq
    %v3449 = vshrl.u32 %v3448, 7
    %v3450 = vsub.s32 2, %v3449
    %v3451 = vrot.slane %v3004, %v3450
    %v3452 = vlaneseq
    %v3453 = vshrl.u32 %v3452, 7
    %v3454 = vsub.s32 3, %v3453
    %v3455 = vrot.slane %v3004, %v3454
    %v3456 = vlaneseq
    %v3457 = vshrl.u32 %v3456, 7
    %v3458 = vsub.s32 4, %v3457
    %v3459 = vrot.slane %v3004, %v3458
    %v3460 = vlaneseq
    %v3461 = vshrl.u32 %v3460, 7
    %v3462 = vsub.s32 5, %v3461
    %v3463 = vrot.slane %v3004, %v3462
    %v3464 = vlaneseq
    %v3465 = vshrl.u32 %v3464, 7
    %v3466 = vsub.s32 6, %v3465
    %v3467 = vrot.slane %v3004, %v3466
    %v3468 = vlaneseq
    %v3469 = vshrl.u32 %v3468, 7
    %v3470 = vsub.s32 7, %v3469
    %v3471 = vrot.slane %v3004, %v3470
    %v3472 = vlaneseq
    %v3473 = vshrl.u32 %v3472, 7
    %v3474 = vsub.s32 0, %v3473
    %v3475 = vrot.slane %v3005, %v3474
    %v3476 = vlaneseq
    %v3477 = vshrl.u32 %v3476, 7
    %v3478 = vsub.s32 1, %v3477
    %v3479 = vrot.slane %v3005, %v3478
    %v3480 = vlaneseq
    %v3481 = vshrl.u32 %v3480, 7
    %v3482 = vsub.s32 2, %v3481
    %v3483 = vrot.slane %v3005, %v3482
    %v3484 = vlaneseq
    %v3485 = vshrl.u32 %v3484, 7
    %v3486 = vsub.s32 3, %v3485
    %v3487 = vrot.slane %v3005, %v3486
    %v3488 = vlaneseq
    %v3489 = vshrl.u32 %v3488, 7
    %v3490 = vsub.s32 4, %v3489
    %v3491 = vrot.slane %v3005, %v3490
    %v3492 = vlaneseq
    %v3493 = vshrl.u32 %v3492, 7
    %v3494 = vsub.s32 5, %v3493
    %v3495 = vrot.slane %v3005, %v3494
    %v3496 = vlaneseq
    %v3497 = vshrl.u32 %v3496, 7
    %v3498 = vsub.s32 6, %v3497
    %v3499 = vrot.slane %v3005, %v3498
    %v3500 = vlaneseq
    %v3501 = vshrl.u32 %v3500, 7
    %v3502 = vsub.s32 7, %v3501
    %v3503 = vrot.slane %v3005, %v3502
    %v3504 = vlaneseq
    %v3505 = vshrl.u32 %v3504, 7
    %v3506 = vsub.s32 0, %v3505
    %v3507 = vrot.slane %v3006, %v3506
    %v3508 = vlaneseq
    %v3509 = vshrl.u32 %v3508, 7
    %v3510 = vsub.s32 1, %v3509
    %v3511 = vrot.slane %v3006, %v3510
    %v3512 = vlaneseq
    %v3513 = vshrl.u32 %v3512, 7
    %v3514 = vsub.s32 2, %v3513
    %v3515 = vrot.slane %v3006, %v3514
    %v3516 = vlaneseq
    %v3517 = vshrl.u32 %v3516, 7
    %v3518 = vsub.s32 3, %v3517
    %v3519 = vrot.slane %v3006, %v3518
    %v3520 = vlaneseq
    %v3521 = vshrl.u32 %v3520, 7
    %v3522 = vsub.s32 4, %v3521
    %v3523 = vrot.slane %v3006, %v3522
    %v3524 = vlaneseq
    %v3525 = vshrl.u32 %v3524, 7
    %v3526 = vsub.s32 5, %v3525
    %v3527 = vrot.slane %v3006, %v3526
    %v3528 = vlaneseq
    %v3529 = vshrl.u32 %v3528, 7
    %v3530 = vsub.s32 6, %v3529
    %v3531 = vrot.slane %v3006, %v3530
    %v3532 = vlaneseq
    %v3533 = vshrl.u32 %v3532, 7
    %v3534 = vsub.s32 7, %v3533
    %v3535 = vrot.slane %v3006, %v3534
    %v3536 = vlaneseq
    %v3537 = vshrl.u32 %v3536, 7
    %v3538 = vsub.s32 0, %v3537
    %v3539 = vrot.slane %v3007, %v3538
    %v3540 = vlaneseq
    %v3541 = vshrl.u32 %v3540, 7
    %v3542 = vsub.s32 1, %v3541
    %v3543 = vrot.slane %v3007, %v3542
    %v3544 = vlaneseq
    %v3545 = vshrl.u32 %v3544, 7
    %v3546 = vsub.s32 2, %v3545
    %v3547 = vrot.slane %v3007, %v3546
    %v3548 = vlaneseq
    %v3549 = vshrl.u32 %v3548, 7
    %v3550 = vsub.s32 3, %v3549
    %v3551 = vrot.slane %v3007, %v3550
    %v3552 = vlaneseq
    %v3553 = vshrl.u32 %v3552, 7
    %v3554 = vsub.s32 4, %v3553
    %v3555 = vrot.slane %v3007, %v3554
    %v3556 = vlaneseq
    %v3557 = vshrl.u32 %v3556, 7
    %v3558 = vsub.s32 5, %v3557
    %v3559 = vrot.slane %v3007, %v3558
    %v3560 = vlaneseq
    %v3561 = vshrl.u32 %v3560, 7
    %v3562 = vsub.s32 6, %v3561
    %v3563 = vrot.slane %v3007, %v3562
    %v3564 = vlaneseq
    %v3565 = vshrl.u32 %v3564, 7
    %v3566 = vsub.s32 7, %v3565
    %v3567 = vrot.slane %v3007, %v3566
    %v3568 = vlaneseq
    %v3569 = vshrl.u32 %v3568, 7
    %v3570 = vsub.s32 0, %v3569
    %v3571 = vrot.slane %v3008, %v3570
    %v3572 = vlaneseq
    %v3573 = vshrl.u32 %v3572, 7
    %v3574 = vsub.s32 1, %v3573
    %v3575 = vrot.slane %v3008, %v3574
    %v3576 = vlaneseq
    %v3577 = vshrl.u32 %v3576, 7
    %v3578 = vsub.s32 2, %v3577
    %v3579 = vrot.slane %v3008, %v3578
    %v3580 = vlaneseq
    %v3581 = vshrl.u32 %v3580, 7
    %v3582 = vsub.s32 3, %v3581
    %v3583 = vrot.slane %v3008, %v3582
    %v3584 = vlaneseq
    %v3585 = vshrl.u32 %v3584, 7
    %v3586 = vsub.s32 4, %v3585
    %v3587 = vrot.slane %v3008, %v3586
    %v3588 = vlaneseq
    %v3589 = vshrl.u32 %v3588, 7
    %v3590 = vsub.s32 5, %v3589
    %v3591 = vrot.slane %v3008, %v3590
    %v3592 = vlaneseq
    %v3593 = vshrl.u32 %v3592, 7
    %v3594 = vsub.s32 6, %v3593
    %v3595 = vrot.slane %v3008, %v3594
    %v3596 = vlaneseq
    %v3597 = vshrl.u32 %v3596, 7
    %v3598 = vsub.s32 7, %v3597
    %v3599 = vrot.slane %v3008, %v3598
    %v3600 = vlaneseq
    %v3601 = vshrl.u32 %v3600, 7
    %v3602 = vsub.s32 0, %v3601
    %v3603 = vrot.slane %v3009, %v3602
    %v3604 = vlaneseq
    %v3605 = vshrl.u32 %v3604, 7
    %v3606 = vsub.s32 1, %v3605
    %v3607 = vrot.slane %v3009, %v3606
    %v3608 = vlaneseq
    %v3609 = vshrl.u32 %v3608, 7
    %v3610 = vsub.s32 2, %v3609
    %v3611 = vrot.slane %v3009, %v3610
    %v3612 = vlaneseq
    %v3613 = vshrl.u32 %v3612, 7
    %v3614 = vsub.s32 3, %v3613
    %v3615 = vrot.slane %v3009, %v3614
    %v3616 = vlaneseq
    %v3617 = vshrl.u32 %v3616, 7
    %v3618 = vsub.s32 4, %v3617
    %v3619 = vrot.slane %v3009, %v3618
    %v3620 = vlaneseq
    %v3621 = vshrl.u32 %v3620, 7
    %v3622 = vsub.s32 5, %v3621
    %v3623 = vrot.slane %v3009, %v3622
    %v3624 = vlaneseq
    %v3625 = vshrl.u32 %v3624, 7
    %v3626 = vsub.s32 6, %v3625
    %v3627 = vrot.slane %v3009, %v3626
    %v3628 = vlaneseq
    %v3629 = vshrl.u32 %v3628, 7
    %v3630 = vsub.s32 7, %v3629
    %v3631 = vrot.slane %v3009, %v3630
    %v3632 = vlaneseq
    %v3633 = vshrl.u32 %v3632, 7
    %v3634 = vsub.s32 0, %v3633
    %v3635 = vrot.slane %v3010, %v3634
    %v3636 = vlaneseq
    %v3637 = vshrl.u32 %v3636, 7
    %v3638 = vsub.s32 1, %v3637
    %v3639 = vrot.slane %v3010, %v3638
    %v3640 = vlaneseq
    %v3641 = vshrl.u32 %v3640, 7
    %v3642 = vsub.s32 2, %v3641
    %v3643 = vrot.slane %v3010, %v3642
    %v3644 = vlaneseq
    %v3645 = vshrl.u32 %v3644, 7
    %v3646 = vsub.s32 3, %v3645
    %v3647 = vrot.slane %v3010, %v3646
    %v3648 = vlaneseq
    %v3649 = vshrl.u32 %v3648, 7
    %v3650 = vsub.s32 4, %v3649
    %v3651 = vrot.slane %v3010, %v3650
    %v3652 = vlaneseq
    %v3653 = vshrl.u32 %v3652, 7
    %v3654 = vsub.s32 5, %v3653
    %v3655 = vrot.slane %v3010, %v3654
    %v3656 = vlaneseq
    %v3657 = vshrl.u32 %v3656, 7
    %v3658 = vsub.s32 6, %v3657
    %v3659 = vrot.slane %v3010, %v3658
    %v3660 = vlaneseq
    %v3661 = vshrl.u32 %v3660, 7
    %v3662 = vsub.s32 7, %v3661
    %v3663 = vrot.slane %v3010, %v3662
    %v3664 = vlaneseq
    %v3665 = vshrl.u32 %v3664, 7
    %v3666 = vsub.s32 0, %v3665
    %v3667 = vrot.slane %v3011, %v3666
    %v3668 = vlaneseq
    %v3669 = vshrl.u32 %v3668, 7
    %v3670 = vsub.s32 1, %v3669
    %v3671 = vrot.slane %v3011, %v3670
    %v3672 = vlaneseq
    %v3673 = vshrl.u32 %v3672, 7
    %v3674 = vsub.s32 2, %v3673
    %v3675 = vrot.slane %v3011, %v3674
    %v3676 = vlaneseq
    %v3677 = vshrl.u32 %v3676, 7
    %v3678 = vsub.s32 3, %v3677
    %v3679 = vrot.slane %v3011, %v3678
    %v3680 = vlaneseq
    %v3681 = vshrl.u32 %v3680, 7
    %v3682 = vsub.s32 4, %v3681
    %v3683 = vrot.slane %v3011, %v3682
    %v3684 = vlaneseq
    %v3685 = vshrl.u32 %v3684, 7
    %v3686 = vsub.s32 5, %v3685
    %v3687 = vrot.slane %v3011, %v3686
    %v3688 = vlaneseq
    %v3689 = vshrl.u32 %v3688, 7
    %v3690 = vsub.s32 6, %v3689
    %v3691 = vrot.slane %v3011, %v3690
    %v3692 = vlaneseq
    %v3693 = vshrl.u32 %v3692, 7
    %v3694 = vsub.s32 7, %v3693
    %v3695 = vrot.slane %v3011, %v3694
    %v3696 = vlaneseq
    %v3697 = vshrl.u32 %v3696, 7
    %v3698 = vsub.s32 0, %v3697
    %v3699 = vrot.slane %v3012, %v3698
    %v3700 = vlaneseq
    %v3701 = vshrl.u32 %v3700, 7
    %v3702 = vsub.s32 1, %v3701
    %v3703 = vrot.slane %v3012, %v3702
    %v3704 = vlaneseq
    %v3705 = vshrl.u32 %v3704, 7
    %v3706 = vsub.s32 2, %v3705
    %v3707 = vrot.slane %v3012, %v3706
    %v3708 = vlaneseq
    %v3709 = vshrl.u32 %v3708, 7
    %v3710 = vsub.s32 3, %v3709
    %v3711 = vrot.slane %v3012, %v3710
    %v3712 = vlaneseq
    %v3713 = vshrl.u32 %v3712, 7
    %v3714 = vsub.s32 4, %v3713
    %v3715 = vrot.slane %v3012, %v3714
    %v3716 = vlaneseq
    %v3717 = vshrl.u32 %v3716, 7
    %v3718 = vsub.s32 5, %v3717
    %v3719 = vrot.slane %v3012, %v3718
    %v3720 = vlaneseq
    %v3721 = vshrl.u32 %v3720, 7
    %v3722 = vsub.s32 6, %v3721
    %v3723 = vrot.slane %v3012, %v3722
    %v3724 = vlaneseq
    %v3725 = vshrl.u32 %v3724, 7
    %v3726 = vsub.s32 7, %v3725
    %v3727 = vrot.slane %v3012, %v3726
    %v3728 = vlaneseq
    %v3729 = vshrl.u32 %v3728, 7
    %v3730 = vsub.s32 0, %v3729
    %v3731 = vrot.slane %v3013, %v3730
    %v3732 = vlaneseq
    %v3733 = vshrl.u32 %v3732, 7
    %v3734 = vsub.s32 1, %v3733
    %v3735 = vrot.slane %v3013, %v3734
    %v3736 = vlaneseq
    %v3737 = vshrl.u32 %v3736, 7
    %v3738 = vsub.s32 2, %v3737
    %v3739 = vrot.slane %v3013, %v3738
    %v3740 = vlaneseq
    %v3741 = vshrl.u32 %v3740, 7
    %v3742 = vsub.s32 3, %v3741
    %v3743 = vrot.slane %v3013, %v3742
    %v3744 = vlaneseq
    %v3745 = vshrl.u32 %v3744, 7
    %v3746 = vsub.s32 4, %v3745
    %v3747 = vrot.slane %v3013, %v3746
    %v3748 = vlaneseq
    %v3749 = vshrl.u32 %v3748, 7
    %v3750 = vsub.s32 5, %v3749
    %v3751 = vrot.slane %v3013, %v3750
    %v3752 = vlaneseq
    %v3753 = vshrl.u32 %v3752, 7
    %v3754 = vsub.s32 6, %v3753
    %v3755 = vrot.slane %v3013, %v3754
    %v3756 = vlaneseq
    %v3757 = vshrl.u32 %v3756, 7
    %v3758 = vsub.s32 7, %v3757
    %v3759 = vrot.slane %v3013, %v3758
    %v3760 = vlaneseq
    %v3761 = vshrl.u32 %v3760, 7
    %v3762 = vsub.s32 0, %v3761
    %v3763 = vrot.slane %v3014, %v3762
    %v3764 = vlaneseq
    %v3765 = vshrl.u32 %v3764, 7
    %v3766 = vsub.s32 1, %v3765
    %v3767 = vrot.slane %v3014, %v3766
    %v3768 = vlaneseq
    %v3769 = vshrl.u32 %v3768, 7
    %v3770 = vsub.s32 2, %v3769
    %v3771 = vrot.slane %v3014, %v3770
    %v3772 = vlaneseq
    %v3773 = vshrl.u32 %v3772, 7
    %v3774 = vsub.s32 3, %v3773
    %v3775 = vrot.slane %v3014, %v3774
    %v3776 = vlaneseq
    %v3777 = vshrl.u32 %v3776, 7
    %v3778 = vsub.s32 4, %v3777
    %v3779 = vrot.slane %v3014, %v3778
    %v3780 = vlaneseq
    %v3781 = vshrl.u32 %v3780, 7
    %v3782 = vsub.s32 5, %v3781
    %v3783 = vrot.slane %v3014, %v3782
    %v3784 = vlaneseq
    %v3785 = vshrl.u32 %v3784, 7
    %v3786 = vsub.s32 6, %v3785
    %v3787 = vrot.slane %v3014, %v3786
    %v3788 = vlaneseq
    %v3789 = vshrl.u32 %v3788, 7
    %v3790 = vsub.s32 7, %v3789
    %v3791 = vrot.slane %v3014, %v3790
    %v3792 = vlaneseq
    %v3793 = vshrl.u32 %v3792, 7
    %v3794 = vsub.s32 0, %v3793
    %v3795 = vrot.slane %v3015, %v3794
    %v3796 = vlaneseq
    %v3797 = vshrl.u32 %v3796, 7
    %v3798 = vsub.s32 1, %v3797
    %v3799 = vrot.slane %v3015, %v3798
    %v3800 = vlaneseq
    %v3801 = vshrl.u32 %v3800, 7
    %v3802 = vsub.s32 2, %v3801
    %v3803 = vrot.slane %v3015, %v3802
    %v3804 = vlaneseq
    %v3805 = vshrl.u32 %v3804, 7
    %v3806 = vsub.s32 3, %v3805
    %v3807 = vrot.slane %v3015, %v3806
    %v3808 = vlaneseq
    %v3809 = vshrl.u32 %v3808, 7
    %v3810 = vsub.s32 4, %v3809
    %v3811 = vrot.slane %v3015, %v3810
    %v3812 = vlaneseq
    %v3813 = vshrl.u32 %v3812, 7
    %v3814 = vsub.s32 5, %v3813
    %v3815 = vrot.slane %v3015, %v3814
    %v3816 = vlaneseq
    %v3817 = vshrl.u32 %v3816, 7
    %v3818 = vsub.s32 6, %v3817
    %v3819 = vrot.slane %v3015, %v3818
    %v3820 = vlaneseq
    %v3821 = vshrl.u32 %v3820, 7
    %v3822 = vsub.s32 7, %v3821
    %v3823 = vrot.slane %v3015, %v3822
    %v3824 = vlaneseq
    %v3825 = vshrl.u32 %v3824, 7
    %v3826 = vsub.s32 0, %v3825
    %v3827 = vrot.slane %v3016, %v3826
    %v3828 = vlaneseq
    %v3829 = vshrl.u32 %v3828, 7
    %v3830 = vsub.s32 1, %v3829
    %v3831 = vrot.slane %v3016, %v3830
    %v3832 = vlaneseq
    %v3833 = vshrl.u32 %v3832, 7
    %v3834 = vsub.s32 2, %v3833
    %v3835 = vrot.slane %v3016, %v3834
    %v3836 = vlaneseq
    %v3837 = vshrl.u32 %v3836, 7
    %v3838 = vsub.s32 3, %v3837
    %v3839 = vrot.slane %v3016, %v3838
    %v3840 = vlaneseq
    %v3841 = vshrl.u32 %v3840, 7
    %v3842 = vsub.s32 4, %v3841
    %v3843 = vrot.slane %v3016, %v3842
    %v3844 = vlaneseq
    %v3845 = vshrl.u32 %v3844, 7
    %v3846 = vsub.s32 5, %v3845
    %v3847 = vrot.slane %v3016, %v3846
    %v3848 = vlaneseq
    %v3849 = vshrl.u32 %v3848, 7
    %v3850 = vsub.s32 6, %v3849
    %v3851 = vrot.slane %v3016, %v3850
    %v3852 = vlaneseq
    %v3853 = vshrl.u32 %v3852, 7
    %v3854 = vsub.s32 7, %v3853
    %v3855 = vrot.slane %v3016, %v3854
    %v3856 = vlaneseq
    %v3857 = vshrl.u32 %v3856, 7
    %v3858 = vsub.s32 0, %v3857
    %v3859 = vrot.slane %v3017, %v3858
    %v3860 = vlaneseq
    %v3861 = vshrl.u32 %v3860, 7
    %v3862 = vsub.s32 1, %v3861
    %v3863 = vrot.slane %v3017, %v3862
    %v3864 = vlaneseq
    %v3865 = vshrl.u32 %v3864, 7
    %v3866 = vsub.s32 2, %v3865
    %v3867 = vrot.slane %v3017, %v3866
    %v3868 = vlaneseq
    %v3869 = vshrl.u32 %v3868, 7
    %v3870 = vsub.s32 3, %v3869
    %v3871 = vrot.slane %v3017, %v3870
    %v3872 = vlaneseq
    %v3873 = vshrl.u32 %v3872, 7
    %v3874 = vsub.s32 4, %v3873
    %v3875 = vrot.slane %v3017, %v3874
    %v3876 = vlaneseq
    %v3877 = vshrl.u32 %v3876, 7
    %v3878 = vsub.s32 5, %v3877
    %v3879 = vrot.slane %v3017, %v3878
    %v3880 = vlaneseq
    %v3881 = vshrl.u32 %v3880, 7
    %v3882 = vsub.s32 6, %v3881
    %v3883 = vrot.slane %v3017, %v3882
    %v3884 = vlaneseq
    %v3885 = vshrl.u32 %v3884, 7
    %v3886 = vsub.s32 7, %v3885
    %v3887 = vrot.slane %v3017, %v3886
    %v3888 = vlaneseq
    %v3889 = vshrl.u32 %v3888, 7
    %v3890 = vsub.s32 0, %v3889
    %v3891 = vrot.slane %v3018, %v3890
    %v3892 = vlaneseq
    %v3893 = vshrl.u32 %v3892, 7
    %v3894 = vsub.s32 1, %v3893
    %v3895 = vrot.slane %v3018, %v3894
    %v3896 = vlaneseq
    %v3897 = vshrl.u32 %v3896, 7
    %v3898 = vsub.s32 2, %v3897
    %v3899 = vrot.slane %v3018, %v3898
    %v3900 = vlaneseq
    %v3901 = vshrl.u32 %v3900, 7
    %v3902 = vsub.s32 3, %v3901
    %v3903 = vrot.slane %v3018, %v3902
    %v3904 = vlaneseq
    %v3905 = vshrl.u32 %v3904, 7
    %v3906 = vsub.s32 4, %v3905
    %v3907 = vrot.slane %v3018, %v3906
    %v3908 = vlaneseq
    %v3909 = vshrl.u32 %v3908, 7
    %v3910 = vsub.s32 5, %v3909
    %v3911 = vrot.slane %v3018, %v3910
    %v3912 = vlaneseq
    %v3913 = vshrl.u32 %v3912, 7
    %v3914 = vsub.s32 6, %v3913
    %v3915 = vrot.slane %v3018, %v3914
    %v3916 = vlaneseq
    %v3917 = vshrl.u32 %v3916, 7
    %v3918 = vsub.s32 7, %v3917
    %v3919 = vrot.slane %v3018, %v3918
    %v3920 = vlaneseq
    %v3921 = vshrl.u32 %v3920, 7
    %v3922 = vsub.s32 0, %v3921
    %v3923 = vrot.slane %v3019, %v3922
    %v3924 = vlaneseq
    %v3925 = vshrl.u32 %v3924, 7
    %v3926 = vsub.s32 1, %v3925
    %v3927 = vrot.slane %v3019, %v3926
    %v3928 = vlaneseq
    %v3929 = vshrl.u32 %v3928, 7
    %v3930 = vsub.s32 2, %v3929
    %v3931 = vrot.slane %v3019, %v3930
    %v3932 = vlaneseq
    %v3933 = vshrl.u32 %v3932, 7
    %v3934 = vsub.s32 3, %v3933
    %v3935 = vrot.slane %v3019, %v3934
    %v3936 = vlaneseq
    %v3937 = vshrl.u32 %v3936, 7
    %v3938 = vsub.s32 4, %v3937
    %v3939 = vrot.slane %v3019, %v3938
    %v3940 = vlaneseq
    %v3941 = vshrl.u32 %v3940, 7
    %v3942 = vsub.s32 5, %v3941
    %v3943 = vrot.slane %v3019, %v3942
    %v3944 = vlaneseq
    %v3945 = vshrl.u32 %v3944, 7
    %v3946 = vsub.s32 6, %v3945
    %v3947 = vrot.slane %v3019, %v3946
    %v3948 = vlaneseq
    %v3949 = vshrl.u32 %v3948, 7
    %v3950 = vsub.s32 7, %v3949
    %v3951 = vrot.slane %v3019, %v3950
    %v3952 = vlaneseq
    %v3953 = vshrl.u32 %v3952, 7
    %v3954 = vsub.s32 0, %v3953
    %v3955 = vrot.slane %v3020, %v3954
    %v3956 = vlaneseq
    %v3957 = vshrl.u32 %v3956, 7
    %v3958 = vsub.s32 1, %v3957
    %v3959 = vrot.slane %v3020, %v3958
    %v3960 = vlaneseq
    %v3961 = vshrl.u32 %v3960, 7
    %v3962 = vsub.s32 2, %v3961
    %v3963 = vrot.slane %v3020, %v3962
    %v3964 = vlaneseq
    %v3965 = vshrl.u32 %v3964, 7
    %v3966 = vsub.s32 3, %v3965
    %v3967 = vrot.slane %v3020, %v3966
    %v3968 = vlaneseq
    %v3969 = vshrl.u32 %v3968, 7
    %v3970 = vsub.s32 4, %v3969
    %v3971 = vrot.slane %v3020, %v3970
    %v3972 = vlaneseq
    %v3973 = vshrl.u32 %v3972, 7
    %v3974 = vsub.s32 5, %v3973
    %v3975 = vrot.slane %v3020, %v3974
    %v3976 = vlaneseq
    %v3977 = vshrl.u32 %v3976, 7
    %v3978 = vsub.s32 6, %v3977
    %v3979 = vrot.slane %v3020, %v3978
    %v3980 = vlaneseq
    %v3981 = vshrl.u32 %v3980, 7
    %v3982 = vsub.s32 7, %v3981
    %v3983 = vrot.slane %v3020, %v3982
    %v3984 = vlaneseq
    %v3985 = vshrl.u32 %v3984, 7
    %v3986 = vsub.s32 0, %v3985
    %v3987 = vrot.slane %v3021, %v3986
    %v3988 = vlaneseq
    %v3989 = vshrl.u32 %v3988, 7
    %v3990 = vsub.s32 1, %v3989
    %v3991 = vrot.slane %v3021, %v3990
    %v3992 = vlaneseq
    %v3993 = vshrl.u32 %v3992, 7
    %v3994 = vsub.s32 2, %v3993
    %v3995 = vrot.slane %v3021, %v3994
    %v3996 = vlaneseq
    %v3997 = vshrl.u32 %v3996, 7
    %v3998 = vsub.s32 3, %v3997
    %v3999 = vrot.slane %v3021, %v3998
    %v4000 = vlaneseq
    %v4001 = vshrl.u32 %v4000, 7
    %v4002 = vsub.s32 4, %v4001
    %v4003 = vrot.slane %v3021, %v4002
    %v4004 = vlaneseq
    %v4005 = vshrl.u32 %v4004, 7
    %v4006 = vsub.s32 5, %v4005
    %v4007 = vrot.slane %v3021, %v4006
    %v4008 = vlaneseq
    %v4009 = vshrl.u32 %v4008, 7
    %v4010 = vsub.s32 6, %v4009
    %v4011 = vrot.slane %v3021, %v4010
    %v4012 = vlaneseq
    %v4013 = vshrl.u32 %v4012, 7
    %v4014 = vsub.s32 7, %v4013
    %v4015 = vrot.slane %v3021, %v4014
    %v4016 = vlaneseq
    %v4017 = vshrl.u32 %v4016, 7
    %v4018 = vsub.s32 0, %v4017
    %v4019 = vrot.slane %v3022, %v4018
    %v4020 = vlaneseq
    %v4021 = vshrl.u32 %v4020, 7
    %v4022 = vsub.s32 1, %v4021
    %v4023 = vrot.slane %v3022, %v4022
    %v4024 = vlaneseq
    %v4025 = vshrl.u32 %v4024, 7
    %v4026 = vsub.s32 2, %v4025
    %v4027 = vrot.slane %v3022, %v4026
    %v4028 = vlaneseq
    %v4029 = vshrl.u32 %v4028, 7
    %v4030 = vsub.s32 3, %v4029
    %v4031 = vrot.slane %v3022, %v4030
    %v4032 = vlaneseq
    %v4033 = vshrl.u32 %v4032, 7
    %v4034 = vsub.s32 4, %v4033
    %v4035 = vrot.slane %v3022, %v4034
    %v4036 = vlaneseq
    %v4037 = vshrl.u32 %v4036, 7
    %v4038 = vsub.s32 5, %v4037
    %v4039 = vrot.slane %v3022, %v4038
    %v4040 = vlaneseq
    %v4041 = vshrl.u32 %v4040, 7
    %v4042 = vsub.s32 6, %v4041
    %v4043 = vrot.slane %v3022, %v4042
    %v4044 = vlaneseq
    %v4045 = vshrl.u32 %v4044, 7
    %v4046 = vsub.s32 7, %v4045
    %v4047 = vrot.slane %v3022, %v4046
    %v4048 = vlaneseq
    %v4049 = vshrl.u32 %v4048, 7
    %v4050 = vsub.s32 0, %v4049
    %v4051 = vrot.slane %v3023, %v4050
    %v4052 = vlaneseq
    %v4053 = vshrl.u32 %v4052, 7
    %v4054 = vsub.s32 1, %v4053
    %v4055 = vrot.slane %v3023, %v4054
    %v4056 = vlaneseq
    %v4057 = vshrl.u32 %v4056, 7
    %v4058 = vsub.s32 2, %v4057
    %v4059 = vrot.slane %v3023, %v4058
    %v4060 = vlaneseq
    %v4061 = vshrl.u32 %v4060, 7
    %v4062 = vsub.s32 3, %v4061
    %v4063 = vrot.slane %v3023, %v4062
    %v4064 = vlaneseq
    %v4065 = vshrl.u32 %v4064, 7
    %v4066 = vsub.s32 4, %v4065
    %v4067 = vrot.slane %v3023, %v4066
    %v4068 = vlaneseq
    %v4069 = vshrl.u32 %v4068, 7
    %v4070 = vsub.s32 5, %v4069
    %v4071 = vrot.slane %v3023, %v4070
    %v4072 = vlaneseq
    %v4073 = vshrl.u32 %v4072, 7
    %v4074 = vsub.s32 6, %v4073
    %v4075 = vrot.slane %v3023, %v4074
    %v4076 = vlaneseq
    %v4077 = vshrl.u32 %v4076, 7
    %v4078 = vsub.s32 7, %v4077
    %v4079 = vrot.slane %v3023, %v4078
    %v4080 = vcombine.low %v3059, %v3063
    %v4081 = vcombine.low %v3067, %v3071
    %v4082 = vcombine.low %v3075, %v3079
    %v4083 = vcombine.low %v3083, %v3087
    %v4085 = vunpack.c.l.s4 1966171168
    %v4086 = vunpack.c.0.s8 %v4085
    %v4087 = vlaneseq
    %v4088 = vshrl.u32 %v4087, 7
    %v4089 = vsub.s32 %v4086, %v4088
    %v4090 = vrot.slane %v4080, %v4089
    %v4092 = vunpack.c.l.s4 1966171168
    %v4093 = vunpack.c.0.s8 %v4092
    %v4094 = vlaneseq
    %v4095 = vshrl.u32 %v4094, 7
    %v4096 = vsub.s32 %v4093, %v4095
    %v4097 = vrot.slane %v4081, %v4096
    %v4099 = vunpack.c.l.s4 1966171168
    %v4100 = vunpack.c.0.s8 %v4099
    %v4101 = vlaneseq
    %v4102 = vshrl.u32 %v4101, 7
    %v4103 = vsub.s32 %v4100, %v4102
    %v4104 = vrot.slane %v4082, %v4103
    %v4106 = vunpack.c.l.s4 1966171168
    %v4107 = vunpack.c.0.s8 %v4106
    %v4108 = vlaneseq
    %v4109 = vshrl.u32 %v4108, 7
    %v4110 = vsub.s32 %v4107, %v4109
    %v4111 = vrot.slane %v4083, %v4110
    %v4112 = vcombine.low %v4090, %v4097
    %v4113 = vcombine.low %v4104, %v4111
    %v4115 = vunpack.c.l.s4 1966171168
    %v4116 = vunpack.c.0.s8 %v4115
    %v4117 = vlaneseq
    %v4118 = vshrl.u32 %v4117, 7
    %v4119 = vsub.s32 %v4116, %v4118
    %v4120 = vrot.slane %v4112, %v4119
    %v4122 = vunpack.c.l.s4 1966171168
    %v4123 = vunpack.c.0.s8 %v4122
    %v4124 = vlaneseq
    %v4125 = vshrl.u32 %v4124, 7
    %v4126 = vsub.s32 %v4123, %v4125
    %v4127 = vrot.slane %v4113, %v4126
    %v4128 = vcombine.low %v4120, %v4127
    %v4129 = vcombine.low %v3091, %v3095
    %v4130 = vcombine.low %v3099, %v3103
    %v4131 = vcombine.low %v3107, %v3111
    %v4132 = vcombine.low %v3115, %v3119
    %v4134 = vunpack.c.l.s4 1966171168
    %v4135 = vunpack.c.0.s8 %v4134
    %v4136 = vlaneseq
    %v4137 = vshrl.u32 %v4136, 7
    %v4138 = vsub.s32 %v4135, %v4137
    %v4139 = vrot.slane %v4129, %v4138
    %v4141 = vunpack.c.l.s4 1966171168
    %v4142 = vunpack.c.0.s8 %v4141
    %v4143 = vlaneseq
    %v4144 = vshrl.u32 %v4143, 7
    %v4145 = vsub.s32 %v4142, %v4144
    %v4146 = vrot.slane %v4130, %v4145
    %v4148 = vunpack.c.l.s4 1966171168
    %v4149 = vunpack.c.0.s8 %v4148
    %v4150 = vlaneseq
    %v4151 = vshrl.u32 %v4150, 7
    %v4152 = vsub.s32 %v4149, %v4151
    %v4153 = vrot.slane %v4131, %v4152
    %v4155 = vunpack.c.l.s4 1966171168
    %v4156 = vunpack.c.0.s8 %v4155
    %v4157 = vlaneseq
    %v4158 = vshrl.u32 %v4157, 7
    %v4159 = vsub.s32 %v4156, %v4158
    %v4160 = vrot.slane %v4132, %v4159
    %v4161 = vcombine.low %v4139, %v4146
    %v4162 = vcombine.low %v4153, %v4160
    %v4164 = vunpack.c.l.s4 1966171168
    %v4165 = vunpack.c.0.s8 %v4164
    %v4166 = vlaneseq
    %v4167 = vshrl.u32 %v4166, 7
    %v4168 = vsub.s32 %v4165, %v4167
    %v4169 = vrot.slane %v4161, %v4168
    %v4171 = vunpack.c.l.s4 1966171168
    %v4172 = vunpack.c.0.s8 %v4171
    %v4173 = vlaneseq
    %v4174 = vshrl.u32 %v4173, 7
    %v4175 = vsub.s32 %v4172, %v4174
    %v4176 = vrot.slane %v4162, %v4175
    %v4177 = vcombine.low %v4169, %v4176
    %v4178 = vcombine.low %v3123, %v3127
    %v4179 = vcombine.low %v3131, %v3135
    %v4180 = vcombine.low %v3139, %v3143
    %v4181 = vcombine.low %v3147, %v3151
    %v4183 = vunpack.c.l.s4 1966171168
    %v4184 = vunpack.c.0.s8 %v4183
    %v4185 = vlaneseq
    %v4186 = vshrl.u32 %v4185, 7
    %v4187 = vsub.s32 %v4184, %v4186
    %v4188 = vrot.slane %v4178, %v4187
    %v4190 = vunpack.c.l.s4 1966171168
    %v4191 = vunpack.c.0.s8 %v4190
    %v4192 = vlaneseq
    %v4193 = vshrl.u32 %v4192, 7
    %v4194 = vsub.s32 %v4191, %v4193
    %v4195 = vrot.slane %v4179, %v4194
    %v4197 = vunpack.c.l.s4 1966171168
    %v4198 = vunpack.c.0.s8 %v4197
    %v4199 = vlaneseq
    %v4200 = vshrl.u32 %v4199, 7
    %v4201 = vsub.s32 %v4198, %v4200
    %v4202 = vrot.slane %v4180, %v4201
    %v4204 = vunpack.c.l.s4 1966171168
    %v4205 = vunpack.c.0.s8 %v4204
    %v4206 = vlaneseq
    %v4207 = vshrl.u32 %v4206, 7
    %v4208 = vsub.s32 %v4205, %v4207
    %v4209 = vrot.slane %v4181, %v4208
    %v4210 = vcombine.low %v4188, %v4195
    %v4211 = vcombine.low %v4202, %v4209
    %v4213 = vunpack.c.l.s4 1966171168
    %v4214 = vunpack.c.0.s8 %v4213
    %v4215 = vlaneseq
    %v4216 = vshrl.u32 %v4215, 7
    %v4217 = vsub.s32 %v4214, %v4216
    %v4218 = vrot.slane %v4210, %v4217
    %v4220 = vunpack.c.l.s4 1966171168
    %v4221 = vunpack.c.0.s8 %v4220
    %v4222 = vlaneseq
    %v4223 = vshrl.u32 %v4222, 7
    %v4224 = vsub.s32 %v4221, %v4223
    %v4225 = vrot.slane %v4211, %v4224
    %v4226 = vcombine.low %v4218, %v4225
    %v4227 = vcombine.low %v3155, %v3159
    %v4228 = vcombine.low %v3163, %v3167
    %v4229 = vcombine.low %v3171, %v3175
    %v4230 = vcombine.low %v3179, %v3183
    %v4232 = vunpack.c.l.s4 1966171168
    %v4233 = vunpack.c.0.s8 %v4232
    %v4234 = vlaneseq
    %v4235 = vshrl.u32 %v4234, 7
    %v4236 = vsub.s32 %v4233, %v4235
    %v4237 = vrot.slane %v4227, %v4236
    %v4239 = vunpack.c.l.s4 1966171168
    %v4240 = vunpack.c.0.s8 %v4239
    %v4241 = vlaneseq
    %v4242 = vshrl.u32 %v4241, 7
    %v4243 = vsub.s32 %v4240, %v4242
    %v4244 = vrot.slane %v4228, %v4243
    %v4246 = vunpack.c.l.s4 1966171168
    %v4247 = vunpack.c.0.s8 %v4246
    %v4248 = vlaneseq
    %v4249 = vshrl.u32 %v4248, 7
    %v4250 = vsub.s32 %v4247, %v4249
    %v4251 = vrot.slane %v4229, %v4250
    %v4253 = vunpack.c.l.s4 1966171168
    %v4254 = vunpack.c.0.s8 %v4253
    %v4255 = vlaneseq
    %v4256 = vshrl.u32 %v4255, 7
    %v4257 = vsub.s32 %v4254, %v4256
    %v4258 = vrot.slane %v4230, %v4257
    %v4259 = vcombine.low %v4237, %v4244
    %v4260 = vcombine.low %v4251, %v4258
    %v4262 = vunpack.c.l.s4 1966171168
    %v4263 = vunpack.c.0.s8 %v4262
    %v4264 = vlaneseq
    %v4265 = vshrl.u32 %v4264, 7
    %v4266 = vsub.s32 %v4263, %v4265
    %v4267 = vrot.slane %v4259, %v4266
    %v4269 = vunpack.c.l.s4 1966171168
    %v4270 = vunpack.c.0.s8 %v4269
    %v4271 = vlaneseq
    %v4272 = vshrl.u32 %v4271, 7
    %v4273 = vsub.s32 %v4270, %v4272
    %v4274 = vrot.slane %v4260, %v4273
    %v4275 = vcombine.low %v4267, %v4274
    %v4276 = vcombine.low %v3187, %v3191
    %v4277 = vcombine.low %v3195, %v3199
    %v4278 = vcombine.low %v3203, %v3207
    %v4279 = vcombine.low %v3211, %v3215
    %v4281 = vunpack.c.l.s4 1966171168
    %v4282 = vunpack.c.0.s8 %v4281
    %v4283 = vlaneseq
    %v4284 = vshrl.u32 %v4283, 7
    %v4285 = vsub.s32 %v4282, %v4284
    %v4286 = vrot.slane %v4276, %v4285
    %v4288 = vunpack.c.l.s4 1966171168
    %v4289 = vunpack.c.0.s8 %v4288
    %v4290 = vlaneseq
    %v4291 = vshrl.u32 %v4290, 7
    %v4292 = vsub.s32 %v4289, %v4291
    %v4293 = vrot.slane %v4277, %v4292
    %v4295 = vunpack.c.l.s4 1966171168
    %v4296 = vunpack.c.0.s8 %v4295
    %v4297 = vlaneseq
    %v4298 = vshrl.u32 %v4297, 7
    %v4299 = vsub.s32 %v4296, %v4298
    %v4300 = vrot.slane %v4278, %v4299
    %v4302 = vunpack.c.l.s4 1966171168
    %v4303 = vunpack.c.0.s8 %v4302
    %v4304 = vlaneseq
    %v4305 = vshrl.u32 %v4304, 7
    %v4306 = vsub.s32 %v4303, %v4305
    %v4307 = vrot.slane %v4279, %v4306
    %v4308 = vcombine.low %v4286, %v4293
    %v4309 = vcombine.low %v4300, %v4307
    %v4311 = vunpack.c.l.s4 1966171168
    %v4312 = vunpack.c.0.s8 %v4311
    %v4313 = vlaneseq
    %v4314 = vshrl.u32 %v4313, 7
    %v4315 = vsub.s32 %v4312, %v4314
    %v4316 = vrot.slane %v4308, %v4315
    %v4318 = vunpack.c.l.s4 1966171168
    %v4319 = vunpack.c.0.s8 %v4318
    %v4320 = vlaneseq
    %v4321 = vshrl.u32 %v4320, 7
    %v4322 = vsub.s32 %v4319, %v4321
    %v4323 = vrot.slane %v4309, %v4322
    %v4324 = vcombine.low %v4316, %v4323
    %v4325 = vcombine.low %v3219, %v3223
    %v4326 = vcombine.low %v3227, %v3231
    %v4327 = vcombine.low %v3235, %v3239
    %v4328 = vcombine.low %v3243, %v3247
    %v4330 = vunpack.c.l.s4 1966171168
    %v4331 = vunpack.c.0.s8 %v4330
    %v4332 = vlaneseq
    %v4333 = vshrl.u32 %v4332, 7
    %v4334 = vsub.s32 %v4331, %v4333
    %v4335 = vrot.slane %v4325, %v4334
    %v4337 = vunpack.c.l.s4 1966171168
    %v4338 = vunpack.c.0.s8 %v4337
    %v4339 = vlaneseq
    %v4340 = vshrl.u32 %v4339, 7
    %v4341 = vsub.s32 %v4338, %v4340
    %v4342 = vrot.slane %v4326, %v4341
    %v4344 = vunpack.c.l.s4 1966171168
    %v4345 = vunpack.c.0.s8 %v4344
    %v4346 = vlaneseq
    %v4347 = vshrl.u32 %v4346, 7
    %v4348 = vsub.s32 %v4345, %v4347
    %v4349 = vrot.slane %v4327, %v4348
    %v4351 = vunpack.c.l.s4 1966171168
    %v4352 = vunpack.c.0.s8 %v4351
    %v4353 = vlaneseq
    %v4354 = vshrl.u32 %v4353, 7
    %v4355 = vsub.s32 %v4352, %v4354
    %v4356 = vrot.slane %v4328, %v4355
    %v4357 = vcombine.low %v4335, %v4342
    %v4358 = vcombine.low %v4349, %v4356
    %v4360 = vunpack.c.l.s4 1966171168
    %v4361 = vunpack.c.0.s8 %v4360
    %v4362 = vlaneseq
    %v4363 = vshrl.u32 %v4362, 7
    %v4364 = vsub.s32 %v4361, %v4363
    %v4365 = vrot.slane %v4357, %v4364
    %v4367 = vunpack.c.l.s4 1966171168
    %v4368 = vunpack.c.0.s8 %v4367
    %v4369 = vlaneseq
    %v4370 = vshrl.u32 %v4369, 7
    %v4371 = vsub.s32 %v4368, %v4370
    %v4372 = vrot.slane %v4358, %v4371
    %v4373 = vcombine.low %v4365, %v4372
    %v4374 = vcombine.low %v3251, %v3255
    %v4375 = vcombine.low %v3259, %v3263
    %v4376 = vcombine.low %v3267, %v3271
    %v4377 = vcombine.low %v3275, %v3279
    %v4379 = vunpack.c.l.s4 1966171168
    %v4380 = vunpack.c.0.s8 %v4379
    %v4381 = vlaneseq
    %v4382 = vshrl.u32 %v4381, 7
    %v4383 = vsub.s32 %v4380, %v4382
    %v4384 = vrot.slane %v4374, %v4383
    %v4386 = vunpack.c.l.s4 1966171168
    %v4387 = vunpack.c.0.s8 %v4386
    %v4388 = vlaneseq
    %v4389 = vshrl.u32 %v4388, 7
    %v4390 = vsub.s32 %v4387, %v4389
    %v4391 = vrot.slane %v4375, %v4390
    %v4393 = vunpack.c.l.s4 1966171168
    %v4394 = vunpack.c.0.s8 %v4393
    %v4395 = vlaneseq
    %v4396 = vshrl.u32 %v4395, 7
    %v4397 = vsub.s32 %v4394, %v4396
    %v4398 = vrot.slane %v4376, %v4397
    %v4400 = vunpack.c.l.s4 1966171168
    %v4401 = vunpack.c.0.s8 %v4400
    %v4402 = vlaneseq
    %v4403 = vshrl.u32 %v4402, 7
    %v4404 = vsub.s32 %v4401, %v4403
    %v4405 = vrot.slane %v4377, %v4404
    %v4406 = vcombine.low %v4384, %v4391
    %v4407 = vcombine.low %v4398, %v4405
    %v4409 = vunpack.c.l.s4 1966171168
    %v4410 = vunpack.c.0.s8 %v4409
    %v4411 = vlaneseq
    %v4412 = vshrl.u32 %v4411, 7
    %v4413 = vsub.s32 %v4410, %v4412
    %v4414 = vrot.slane %v4406, %v4413
    %v4416 = vunpack.c.l.s4 1966171168
    %v4417 = vunpack.c.0.s8 %v4416
    %v4418 = vlaneseq
    %v4419 = vshrl.u32 %v4418, 7
    %v4420 = vsub.s32 %v4417, %v4419
    %v4421 = vrot.slane %v4407, %v4420
    %v4422 = vcombine.low %v4414, %v4421
    %v4423 = vcombine.low %v3283, %v3287
    %v4424 = vcombine.low %v3291, %v3295
    %v4425 = vcombine.low %v3299, %v3303
    %v4426 = vcombine.low %v3307, %v3311
    %v4428 = vunpack.c.l.s4 1966171168
    %v4429 = vunpack.c.0.s8 %v4428
    %v4430 = vlaneseq
    %v4431 = vshrl.u32 %v4430, 7
    %v4432 = vsub.s32 %v4429, %v4431
    %v4433 = vrot.slane %v4423, %v4432
    %v4435 = vunpack.c.l.s4 1966171168
    %v4436 = vunpack.c.0.s8 %v4435
    %v4437 = vlaneseq
    %v4438 = vshrl.u32 %v4437, 7
    %v4439 = vsub.s32 %v4436, %v4438
    %v4440 = vrot.slane %v4424, %v4439
    %v4442 = vunpack.c.l.s4 1966171168
    %v4443 = vunpack.c.0.s8 %v4442
    %v4444 = vlaneseq
    %v4445 = vshrl.u32 %v4444, 7
    %v4446 = vsub.s32 %v4443, %v4445
    %v4447 = vrot.slane %v4425, %v4446
    %v4449 = vunpack.c.l.s4 1966171168
    %v4450 = vunpack.c.0.s8 %v4449
    %v4451 = vlaneseq
    %v4452 = vshrl.u32 %v4451, 7
    %v4453 = vsub.s32 %v4450, %v4452
    %v4454 = vrot.slane %v4426, %v4453
    %v4455 = vcombine.low %v4433, %v4440
    %v4456 = vcombine.low %v4447, %v4454
    %v4458 = vunpack.c.l.s4 1966171168
    %v4459 = vunpack.c.0.s8 %v4458
    %v4460 = vlaneseq
    %v4461 = vshrl.u32 %v4460, 7
    %v4462 = vsub.s32 %v4459, %v4461
    %v4463 = vrot.slane %v4455, %v4462
    %v4465 = vunpack.c.l.s4 1966171168
    %v4466 = vunpack.c.0.s8 %v4465
    %v4467 = vlaneseq
    %v4468 = vshrl.u32 %v4467, 7
    %v4469 = vsub.s32 %v4466, %v4468
    %v4470 = vrot.slane %v4456, %v4469
    %v4471 = vcombine.low %v4463, %v4470
    %v4472 = vcombine.low %v3315, %v3319
    %v4473 = vcombine.low %v3323, %v3327
    %v4474 = vcombine.low %v3331, %v3335
    %v4475 = vcombine.low %v3339, %v3343
    %v4477 = vunpack.c.l.s4 1966171168
    %v4478 = vunpack.c.0.s8 %v4477
    %v4479 = vlaneseq
    %v4480 = vshrl.u32 %v4479, 7
    %v4481 = vsub.s32 %v4478, %v4480
    %v4482 = vrot.slane %v4472, %v4481
    %v4484 = vunpack.c.l.s4 1966171168
    %v4485 = vunpack.c.0.s8 %v4484
    %v4486 = vlaneseq
    %v4487 = vshrl.u32 %v4486, 7
    %v4488 = vsub.s32 %v4485, %v4487
    %v4489 = vrot.slane %v4473, %v4488
    %v4491 = vunpack.c.l.s4 1966171168
    %v4492 = vunpack.c.0.s8 %v4491
    %v4493 = vlaneseq
    %v4494 = vshrl.u32 %v4493, 7
    %v4495 = vsub.s32 %v4492, %v4494
    %v4496 = vrot.slane %v4474, %v4495
    %v4498 = vunpack.c.l.s4 1966171168
    %v4499 = vunpack.c.0.s8 %v4498
    %v4500 = vlaneseq
    %v4501 = vshrl.u32 %v4500, 7
    %v4502 = vsub.s32 %v4499, %v4501
    %v4503 = vrot.slane %v4475, %v4502
    %v4504 = vcombine.low %v4482, %v4489
    %v4505 = vcombine.low %v4496, %v4503
    %v4507 = vunpack.c.l.s4 1966171168
    %v4508 = vunpack.c.0.s8 %v4507
    %v4509 = vlaneseq
    %v4510 = vshrl.u32 %v4509, 7
    %v4511 = vsub.s32 %v4508, %v4510
    %v4512 = vrot.slane %v4504, %v4511
    %v4514 = vunpack.c.l.s4 1966171168
    %v4515 = vunpack.c.0.s8 %v4514
    %v4516 = vlaneseq
    %v4517 = vshrl.u32 %v4516, 7
    %v4518 = vsub.s32 %v4515, %v4517
    %v4519 = vrot.slane %v4505, %v4518
    %v4520 = vcombine.low %v4512, %v4519
    %v4521 = vcombine.low %v3347, %v3351
    %v4522 = vcombine.low %v3355, %v3359
    %v4523 = vcombine.low %v3363, %v3367
    %v4524 = vcombine.low %v3371, %v3375
    %v4526 = vunpack.c.l.s4 1966171168
    %v4527 = vunpack.c.0.s8 %v4526
    %v4528 = vlaneseq
    %v4529 = vshrl.u32 %v4528, 7
    %v4530 = vsub.s32 %v4527, %v4529
    %v4531 = vrot.slane %v4521, %v4530
    %v4533 = vunpack.c.l.s4 1966171168
    %v4534 = vunpack.c.0.s8 %v4533
    %v4535 = vlaneseq
    %v4536 = vshrl.u32 %v4535, 7
    %v4537 = vsub.s32 %v4534, %v4536
    %v4538 = vrot.slane %v4522, %v4537
    %v4540 = vunpack.c.l.s4 1966171168
    %v4541 = vunpack.c.0.s8 %v4540
    %v4542 = vlaneseq
    %v4543 = vshrl.u32 %v4542, 7
    %v4544 = vsub.s32 %v4541, %v4543
    %v4545 = vrot.slane %v4523, %v4544
    %v4547 = vunpack.c.l.s4 1966171168
    %v4548 = vunpack.c.0.s8 %v4547
    %v4549 = vlaneseq
    %v4550 = vshrl.u32 %v4549, 7
    %v4551 = vsub.s32 %v4548, %v4550
    %v4552 = vrot.slane %v4524, %v4551
    %v4553 = vcombine.low %v4531, %v4538
    %v4554 = vcombine.low %v4545, %v4552
    %v4556 = vunpack.c.l.s4 1966171168
    %v4557 = vunpack.c.0.s8 %v4556
    %v4558 = vlaneseq
    %v4559 = vshrl.u32 %v4558, 7
    %v4560 = vsub.s32 %v4557, %v4559
    %v4561 = vrot.slane %v4553, %v4560
    %v4563 = vunpack.c.l.s4 1966171168
    %v4564 = vunpack.c.0.s8 %v4563
    %v4565 = vlaneseq
    %v4566 = vshrl.u32 %v4565, 7
    %v4567 = vsub.s32 %v4564, %v4566
    %v4568 = vrot.slane %v4554, %v4567
    %v4569 = vcombine.low %v4561, %v4568
    %v4570 = vcombine.low %v3379, %v3383
    %v4571 = vcombine.low %v3387, %v3391
    %v4572 = vcombine.low %v3395, %v3399
    %v4573 = vcombine.low %v3403, %v3407
    %v4575 = vunpack.c.l.s4 1966171168
    %v4576 = vunpack.c.0.s8 %v4575
    %v4577 = vlaneseq
    %v4578 = vshrl.u32 %v4577, 7
    %v4579 = vsub.s32 %v4576, %v4578
    %v4580 = vrot.slane %v4570, %v4579
    %v4582 = vunpack.c.l.s4 1966171168
    %v4583 = vunpack.c.0.s8 %v4582
    %v4584 = vlaneseq
    %v4585 = vshrl.u32 %v4584, 7
    %v4586 = vsub.s32 %v4583, %v4585
    %v4587 = vrot.slane %v4571, %v4586
    %v4589 = vunpack.c.l.s4 1966171168
    %v4590 = vunpack.c.0.s8 %v4589
    %v4591 = vlaneseq
    %v4592 = vshrl.u32 %v4591, 7
    %v4593 = vsub.s32 %v4590, %v4592
    %v4594 = vrot.slane %v4572, %v4593
    %v4596 = vunpack.c.l.s4 1966171168
    %v4597 = vunpack.c.0.s8 %v4596
    %v4598 = vlaneseq
    %v4599 = vshrl.u32 %v4598, 7
    %v4600 = vsub.s32 %v4597, %v4599
    %v4601 = vrot.slane %v4573, %v4600
    %v4602 = vcombine.low %v4580, %v4587
    %v4603 = vcombine.low %v4594, %v4601
    %v4605 = vunpack.c.l.s4 1966171168
    %v4606 = vunpack.c.0.s8 %v4605
    %v4607 = vlaneseq
    %v4608 = vshrl.u32 %v4607, 7
    %v4609 = vsub.s32 %v4606, %v4608
    %v4610 = vrot.slane %v4602, %v4609
    %v4612 = vunpack.c.l.s4 1966171168
    %v4613 = vunpack.c.0.s8 %v4612
    %v4614 = vlaneseq
    %v4615 = vshrl.u32 %v4614, 7
    %v4616 = vsub.s32 %v4613, %v4615
    %v4617 = vrot.slane %v4603, %v4616
    %v4618 = vcombine.low %v4610, %v4617
    %v4619 = vcombine.low %v3411, %v3415
    %v4620 = vcombine.low %v3419, %v3423
    %v4621 = vcombine.low %v3427, %v3431
    %v4622 = vcombine.low %v3435, %v3439
    %v4624 = vunpack.c.l.s4 1966171168
    %v4625 = vunpack.c.0.s8 %v4624
    %v4626 = vlaneseq
    %v4627 = vshrl.u32 %v4626, 7
    %v4628 = vsub.s32 %v4625, %v4627
    %v4629 = vrot.slane %v4619, %v4628
    %v4631 = vunpack.c.l.s4 1966171168
    %v4632 = vunpack.c.0.s8 %v4631
    %v4633 = vlaneseq
    %v4634 = vshrl.u32 %v4633, 7
    %v4635 = vsub.s32 %v4632, %v4634
    %v4636 = vrot.slane %v4620, %v4635
    %v4638 = vunpack.c.l.s4 1966171168
    %v4639 = vunpack.c.0.s8 %v4638
    %v4640 = vlaneseq
    %v4641 = vshrl.u32 %v4640, 7
    %v4642 = vsub.s32 %v4639, %v4641
    %v4643 = vrot.slane %v4621, %v4642
    %v4645 = vunpack.c.l.s4 1966171168
    %v4646 = vunpack.c.0.s8 %v4645
    %v4647 = vlaneseq
    %v4648 = vshrl.u32 %v4647, 7
    %v4649 = vsub.s32 %v4646, %v4648
    %v4650 = vrot.slane %v4622, %v4649
    %v4651 = vcombine.low %v4629, %v4636
    %v4652 = vcombine.low %v4643, %v4650
    %v4654 = vunpack.c.l.s4 1966171168
    %v4655 = vunpack.c.0.s8 %v4654
    %v4656 = vlaneseq
    %v4657 = vshrl.u32 %v4656, 7
    %v4658 = vsub.s32 %v4655, %v4657
    %v4659 = vrot.slane %v4651, %v4658
    %v4661 = vunpack.c.l.s4 1966171168
    %v4662 = vunpack.c.0.s8 %v4661
    %v4663 = vlaneseq
    %v4664 = vshrl.u32 %v4663, 7
    %v4665 = vsub.s32 %v4662, %v4664
    %v4666 = vrot.slane %v4652, %v4665
    %v4667 = vcombine.low %v4659, %v4666
    %v4668 = vcombine.low %v3443, %v3447
    %v4669 = vcombine.low %v3451, %v3455
    %v4670 = vcombine.low %v3459, %v3463
    %v4671 = vcombine.low %v3467, %v3471
    %v4673 = vunpack.c.l.s4 1966171168
    %v4674 = vunpack.c.0.s8 %v4673
    %v4675 = vlaneseq
    %v4676 = vshrl.u32 %v4675, 7
    %v4677 = vsub.s32 %v4674, %v4676
    %v4678 = vrot.slane %v4668, %v4677
    %v4680 = vunpack.c.l.s4 1966171168
    %v4681 = vunpack.c.0.s8 %v4680
    %v4682 = vlaneseq
    %v4683 = vshrl.u32 %v4682, 7
    %v4684 = vsub.s32 %v4681, %v4683
    %v4685 = vrot.slane %v4669, %v4684
    %v4687 = vunpack.c.l.s4 1966171168
    %v4688 = vunpack.c.0.s8 %v4687
    %v4689 = vlaneseq
    %v4690 = vshrl.u32 %v4689, 7
    %v4691 = vsub.s32 %v4688, %v4690
    %v4692 = vrot.slane %v4670, %v4691
    %v4694 = vunpack.c.l.s4 1966171168
    %v4695 = vunpack.c.0.s8 %v4694
    %v4696 = vlaneseq
    %v4697 = vshrl.u32 %v4696, 7
    %v4698 = vsub.s32 %v4695, %v4697
    %v4699 = vrot.slane %v4671, %v4698
    %v4700 = vcombine.low %v4678, %v4685
    %v4701 = vcombine.low %v4692, %v4699
    %v4703 = vunpack.c.l.s4 1966171168
    %v4704 = vunpack.c.0.s8 %v4703
    %v4705 = vlaneseq
    %v4706 = vshrl.u32 %v4705, 7
    %v4707 = vsub.s32 %v4704, %v4706
    %v4708 = vrot.slane %v4700, %v4707
    %v4710 = vunpack.c.l.s4 1966171168
    %v4711 = vunpack.c.0.s8 %v4710
    %v4712 = vlaneseq
    %v4713 = vshrl.u32 %v4712, 7
    %v4714 = vsub.s32 %v4711, %v4713
    %v4715 = vrot.slane %v4701, %v4714
    %v4716 = vcombine.low %v4708, %v4715
    %v4717 = vcombine.low %v3475, %v3479
    %v4718 = vcombine.low %v3483, %v3487
    %v4719 = vcombine.low %v3491, %v3495
    %v4720 = vcombine.low %v3499, %v3503
    %v4722 = vunpack.c.l.s4 1966171168
    %v4723 = vunpack.c.0.s8 %v4722
    %v4724 = vlaneseq
    %v4725 = vshrl.u32 %v4724, 7
    %v4726 = vsub.s32 %v4723, %v4725
    %v4727 = vrot.slane %v4717, %v4726
    %v4729 = vunpack.c.l.s4 1966171168
    %v4730 = vunpack.c.0.s8 %v4729
    %v4731 = vlaneseq
    %v4732 = vshrl.u32 %v4731, 7
    %v4733 = vsub.s32 %v4730, %v4732
    %v4734 = vrot.slane %v4718, %v4733
    %v4736 = vunpack.c.l.s4 1966171168
    %v4737 = vunpack.c.0.s8 %v4736
    %v4738 = vlaneseq
    %v4739 = vshrl.u32 %v4738, 7
    %v4740 = vsub.s32 %v4737, %v4739
    %v4741 = vrot.slane %v4719, %v4740
    %v4743 = vunpack.c.l.s4 1966171168
    %v4744 = vunpack.c.0.s8 %v4743
    %v4745 = vlaneseq
    %v4746 = vshrl.u32 %v4745, 7
    %v4747 = vsub.s32 %v4744, %v4746
    %v4748 = vrot.slane %v4720, %v4747
    %v4749 = vcombine.low %v4727, %v4734
    %v4750 = vcombine.low %v4741, %v4748
    %v4752 = vunpack.c.l.s4 1966171168
    %v4753 = vunpack.c.0.s8 %v4752
    %v4754 = vlaneseq
    %v4755 = vshrl.u32 %v4754, 7
    %v4756 = vsub.s32 %v4753, %v4755
    %v4757 = vrot.slane %v4749, %v4756
    %v4759 = vunpack.c.l.s4 1966171168
    %v4760 = vunpack.c.0.s8 %v4759
    %v4761 = vlaneseq
    %v4762 = vshrl.u32 %v4761, 7
    %v4763 = vsub.s32 %v4760, %v4762
    %v4764 = vrot.slane %v4750, %v4763
    %v4765 = vcombine.low %v4757, %v4764
    %v4766 = vcombine.low %v3507, %v3511
    %v4767 = vcombine.low %v3515, %v3519
    %v4768 = vcombine.low %v3523, %v3527
    %v4769 = vcombine.low %v3531, %v3535
    %v4771 = vunpack.c.l.s4 1966171168
    %v4772 = vunpack.c.0.s8 %v4771
    %v4773 = vlaneseq
    %v4774 = vshrl.u32 %v4773, 7
    %v4775 = vsub.s32 %v4772, %v4774
    %v4776 = vrot.slane %v4766, %v4775
    %v4778 = vunpack.c.l.s4 1966171168
    %v4779 = vunpack.c.0.s8 %v4778
    %v4780 = vlaneseq
    %v4781 = vshrl.u32 %v4780, 7
    %v4782 = vsub.s32 %v4779, %v4781
    %v4783 = vrot.slane %v4767, %v4782
    %v4785 = vunpack.c.l.s4 1966171168
    %v4786 = vunpack.c.0.s8 %v4785
    %v4787 = vlaneseq
    %v4788 = vshrl.u32 %v4787, 7
    %v4789 = vsub.s32 %v4786, %v4788
    %v4790 = vrot.slane %v4768, %v4789
    %v4792 = vunpack.c.l.s4 1966171168
    %v4793 = vunpack.c.0.s8 %v4792
    %v4794 = vlaneseq
    %v4795 = vshrl.u32 %v4794, 7
    %v4796 = vsub.s32 %v4793, %v4795
    %v4797 = vrot.slane %v4769, %v4796
    %v4798 = vcombine.low %v4776, %v4783
    %v4799 = vcombine.low %v4790, %v4797
    %v4801 = vunpack.c.l.s4 1966171168
    %v4802 = vunpack.c.0.s8 %v4801
    %v4803 = vlaneseq
    %v4804 = vshrl.u32 %v4803, 7
    %v4805 = vsub.s32 %v4802, %v4804
    %v4806 = vrot.slane %v4798, %v4805
    %v4808 = vunpack.c.l.s4 1966171168
    %v4809 = vunpack.c.0.s8 %v4808
    %v4810 = vlaneseq
    %v4811 = vshrl.u32 %v4810, 7
    %v4812 = vsub.s32 %v4809, %v4811
    %v4813 = vrot.slane %v4799, %v4812
    %v4814 = vcombine.low %v4806, %v4813
    %v4815 = vcombine.low %v3539, %v3543
    %v4816 = vcombine.low %v3547, %v3551
    %v4817 = vcombine.low %v3555, %v3559
    %v4818 = vcombine.low %v3563, %v3567
    %v4820 = vunpack.c.l.s4 1966171168
    %v4821 = vunpack.c.0.s8 %v4820
    %v4822 = vlaneseq
    %v4823 = vshrl.u32 %v4822, 7
    %v4824 = vsub.s32 %v4821, %v4823
    %v4825 = vrot.slane %v4815, %v4824
    %v4827 = vunpack.c.l.s4 1966171168
    %v4828 = vunpack.c.0.s8 %v4827
    %v4829 = vlaneseq
    %v4830 = vshrl.u32 %v4829, 7
    %v4831 = vsub.s32 %v4828, %v4830
    %v4832 = vrot.slane %v4816, %v4831
    %v4834 = vunpack.c.l.s4 1966171168
    %v4835 = vunpack.c.0.s8 %v4834
    %v4836 = vlaneseq
    %v4837 = vshrl.u32 %v4836, 7
    %v4838 = vsub.s32 %v4835, %v4837
    %v4839 = vrot.slane %v4817, %v4838
    %v4841 = vunpack.c.l.s4 1966171168
    %v4842 = vunpack.c.0.s8 %v4841
    %v4843 = vlaneseq
    %v4844 = vshrl.u32 %v4843, 7
    %v4845 = vsub.s32 %v4842, %v4844
    %v4846 = vrot.slane %v4818, %v4845
    %v4847 = vcombine.low %v4825, %v4832
    %v4848 = vcombine.low %v4839, %v4846
    %v4850 = vunpack.c.l.s4 1966171168
    %v4851 = vunpack.c.0.s8 %v4850
    %v4852 = vlaneseq
    %v4853 = vshrl.u32 %v4852, 7
    %v4854 = vsub.s32 %v4851, %v4853
    %v4855 = vrot.slane %v4847, %v4854
    %v4857 = vunpack.c.l.s4 1966171168
    %v4858 = vunpack.c.0.s8 %v4857
    %v4859 = vlaneseq
    %v4860 = vshrl.u32 %v4859, 7
    %v4861 = vsub.s32 %v4858, %v4860
    %v4862 = vrot.slane %v4848, %v4861
    %v4863 = vcombine.low %v4855, %v4862
    %v4864 = vcombine.low %v3571, %v3575
    %v4865 = vcombine.low %v3579, %v3583
    %v4866 = vcombine.low %v3587, %v3591
    %v4867 = vcombine.low %v3595, %v3599
    %v4869 = vunpack.c.l.s4 1966171168
    %v4870 = vunpack.c.0.s8 %v4869
    %v4871 = vlaneseq
    %v4872 = vshrl.u32 %v4871, 7
    %v4873 = vsub.s32 %v4870, %v4872
    %v4874 = vrot.slane %v4864, %v4873
    %v4876 = vunpack.c.l.s4 1966171168
    %v4877 = vunpack.c.0.s8 %v4876
    %v4878 = vlaneseq
    %v4879 = vshrl.u32 %v4878, 7
    %v4880 = vsub.s32 %v4877, %v4879
    %v4881 = vrot.slane %v4865, %v4880
    %v4883 = vunpack.c.l.s4 1966171168
    %v4884 = vunpack.c.0.s8 %v4883
    %v4885 = vlaneseq
    %v4886 = vshrl.u32 %v4885, 7
    %v4887 = vsub.s32 %v4884, %v4886
    %v4888 = vrot.slane %v4866, %v4887
    %v4890 = vunpack.c.l.s4 1966171168
    %v4891 = vunpack.c.0.s8 %v4890
    %v4892 = vlaneseq
    %v4893 = vshrl.u32 %v4892, 7
    %v4894 = vsub.s32 %v4891, %v4893
    %v4895 = vrot.slane %v4867, %v4894
    %v4896 = vcombine.low %v4874, %v4881
    %v4897 = vcombine.low %v4888, %v4895
    %v4899 = vunpack.c.l.s4 1966171168
    %v4900 = vunpack.c.0.s8 %v4899
    %v4901 = vlaneseq
    %v4902 = vshrl.u32 %v4901, 7
    %v4903 = vsub.s32 %v4900, %v4902
    %v4904 = vrot.slane %v4896, %v4903
    %v4906 = vunpack.c.l.s4 1966171168
    %v4907 = vunpack.c.0.s8 %v4906
    %v4908 = vlaneseq
    %v4909 = vshrl.u32 %v4908, 7
    %v4910 = vsub.s32 %v4907, %v4909
    %v4911 = vrot.slane %v4897, %v4910
    %v4912 = vcombine.low %v4904, %v4911
    %v4913 = vcombine.low %v3603, %v3607
    %v4914 = vcombine.low %v3611, %v3615
    %v4915 = vcombine.low %v3619, %v3623
    %v4916 = vcombine.low %v3627, %v3631
    %v4918 = vunpack.c.l.s4 1966171168
    %v4919 = vunpack.c.0.s8 %v4918
    %v4920 = vlaneseq
    %v4921 = vshrl.u32 %v4920, 7
    %v4922 = vsub.s32 %v4919, %v4921
    %v4923 = vrot.slane %v4913, %v4922
    %v4925 = vunpack.c.l.s4 1966171168
    %v4926 = vunpack.c.0.s8 %v4925
    %v4927 = vlaneseq
    %v4928 = vshrl.u32 %v4927, 7
    %v4929 = vsub.s32 %v4926, %v4928
    %v4930 = vrot.slane %v4914, %v4929
    %v4932 = vunpack.c.l.s4 1966171168
    %v4933 = vunpack.c.0.s8 %v4932
    %v4934 = vlaneseq
    %v4935 = vshrl.u32 %v4934, 7
    %v4936 = vsub.s32 %v4933, %v4935
    %v4937 = vrot.slane %v4915, %v4936
    %v4939 = vunpack.c.l.s4 1966171168
    %v4940 = vunpack.c.0.s8 %v4939
    %v4941 = vlaneseq
    %v4942 = vshrl.u32 %v4941, 7
    %v4943 = vsub.s32 %v4940, %v4942
    %v4944 = vrot.slane %v4916, %v4943
    %v4945 = vcombine.low %v4923, %v4930
    %v4946 = vcombine.low %v4937, %v4944
    %v4948 = vunpack.c.l.s4 1966171168
    %v4949 = vunpack.c.0.s8 %v4948
    %v4950 = vlaneseq
    %v4951 = vshrl.u32 %v4950, 7
    %v4952 = vsub.s32 %v4949, %v4951
    %v4953 = vrot.slane %v4945, %v4952
    %v4955 = vunpack.c.l.s4 1966171168
    %v4956 = vunpack.c.0.s8 %v4955
    %v4957 = vlaneseq
    %v4958 = vshrl.u32 %v4957, 7
    %v4959 = vsub.s32 %v4956, %v4958
    %v4960 = vrot.slane %v4946, %v4959
    %v4961 = vcombine.low %v4953, %v4960
    %v4962 = vcombine.low %v3635, %v3639
    %v4963 = vcombine.low %v3643, %v3647
    %v4964 = vcombine.low %v3651, %v3655
    %v4965 = vcombine.low %v3659, %v3663
    %v4967 = vunpack.c.l.s4 1966171168
    %v4968 = vunpack.c.0.s8 %v4967
    %v4969 = vlaneseq
    %v4970 = vshrl.u32 %v4969, 7
    %v4971 = vsub.s32 %v4968, %v4970
    %v4972 = vrot.slane %v4962, %v4971
    %v4974 = vunpack.c.l.s4 1966171168
    %v4975 = vunpack.c.0.s8 %v4974
    %v4976 = vlaneseq
    %v4977 = vshrl.u32 %v4976, 7
    %v4978 = vsub.s32 %v4975, %v4977
    %v4979 = vrot.slane %v4963, %v4978
    %v4981 = vunpack.c.l.s4 1966171168
    %v4982 = vunpack.c.0.s8 %v4981
    %v4983 = vlaneseq
    %v4984 = vshrl.u32 %v4983, 7
    %v4985 = vsub.s32 %v4982, %v4984
    %v4986 = vrot.slane %v4964, %v4985
    %v4988 = vunpack.c.l.s4 1966171168
    %v4989 = vunpack.c.0.s8 %v4988
    %v4990 = vlaneseq
    %v4991 = vshrl.u32 %v4990, 7
    %v4992 = vsub.s32 %v4989, %v4991
    %v4993 = vrot.slane %v4965, %v4992
    %v4994 = vcombine.low %v4972, %v4979
    %v4995 = vcombine.low %v4986, %v4993
    %v4997 = vunpack.c.l.s4 1966171168
    %v4998 = vunpack.c.0.s8 %v4997
    %v4999 = vlaneseq
    %v5000 = vshrl.u32 %v4999, 7
    %v5001 = vsub.s32 %v4998, %v5000
    %v5002 = vrot.slane %v4994, %v5001
    %v5004 = vunpack.c.l.s4 1966171168
    %v5005 = vunpack.c.0.s8 %v5004
    %v5006 = vlaneseq
    %v5007 = vshrl.u32 %v5006, 7
    %v5008 = vsub.s32 %v5005, %v5007
    %v5009 = vrot.slane %v4995, %v5008
    %v5010 = vcombine.low %v5002, %v5009
    %v5011 = vcombine.low %v3667, %v3671
    %v5012 = vcombine.low %v3675, %v3679
    %v5013 = vcombine.low %v3683, %v3687
    %v5014 = vcombine.low %v3691, %v3695
    %v5016 = vunpack.c.l.s4 1966171168
    %v5017 = vunpack.c.0.s8 %v5016
    %v5018 = vlaneseq
    %v5019 = vshrl.u32 %v5018, 7
    %v5020 = vsub.s32 %v5017, %v5019
    %v5021 = vrot.slane %v5011, %v5020
    %v5023 = vunpack.c.l.s4 1966171168
    %v5024 = vunpack.c.0.s8 %v5023
    %v5025 = vlaneseq
    %v5026 = vshrl.u32 %v5025, 7
    %v5027 = vsub.s32 %v5024, %v5026
    %v5028 = vrot.slane %v5012, %v5027
    %v5030 = vunpack.c.l.s4 1966171168
    %v5031 = vunpack.c.0.s8 %v5030
    %v5032 = vlaneseq
    %v5033 = vshrl.u32 %v5032, 7
    %v5034 = vsub.s32 %v5031, %v5033
    %v5035 = vrot.slane %v5013, %v5034
    %v5037 = vunpack.c.l.s4 1966171168
    %v5038 = vunpack.c.0.s8 %v5037
    %v5039 = vlaneseq
    %v5040 = vshrl.u32 %v5039, 7
    %v5041 = vsub.s32 %v5038, %v5040
    %v5042 = vrot.slane %v5014, %v5041
    %v5043 = vcombine.low %v5021, %v5028
    %v5044 = vcombine.low %v5035, %v5042
    %v5046 = vunpack.c.l.s4 1966171168
    %v5047 = vunpack.c.0.s8 %v5046
    %v5048 = vlaneseq
    %v5049 = vshrl.u32 %v5048, 7
    %v5050 = vsub.s32 %v5047, %v5049
    %v5051 = vrot.slane %v5043, %v5050
    %v5053 = vunpack.c.l.s4 1966171168
    %v5054 = vunpack.c.0.s8 %v5053
    %v5055 = vlaneseq
    %v5056 = vshrl.u32 %v5055, 7
    %v5057 = vsub.s32 %v5054, %v5056
    %v5058 = vrot.slane %v5044, %v5057
    %v5059 = vcombine.low %v5051, %v5058
    %v5060 = vcombine.low %v3699, %v3703
    %v5061 = vcombine.low %v3707, %v3711
    %v5062 = vcombine.low %v3715, %v3719
    %v5063 = vcombine.low %v3723, %v3727
    %v5065 = vunpack.c.l.s4 1966171168
    %v5066 = vunpack.c.0.s8 %v5065
    %v5067 = vlaneseq
    %v5068 = vshrl.u32 %v5067, 7
    %v5069 = vsub.s32 %v5066, %v5068
    %v5070 = vrot.slane %v5060, %v5069
    %v5072 = vunpack.c.l.s4 1966171168
    %v5073 = vunpack.c.0.s8 %v5072
    %v5074 = vlaneseq
    %v5075 = vshrl.u32 %v5074, 7
    %v5076 = vsub.s32 %v5073, %v5075
    %v5077 = vrot.slane %v5061, %v5076
    %v5079 = vunpack.c.l.s4 1966171168
    %v5080 = vunpack.c.0.s8 %v5079
    %v5081 = vlaneseq
    %v5082 = vshrl.u32 %v5081, 7
    %v5083 = vsub.s32 %v5080, %v5082
    %v5084 = vrot.slane %v5062, %v5083
    %v5086 = vunpack.c.l.s4 1966171168
    %v5087 = vunpack.c.0.s8 %v5086
    %v5088 = vlaneseq
    %v5089 = vshrl.u32 %v5088, 7
    %v5090 = vsub.s32 %v5087, %v5089
    %v5091 = vrot.slane %v5063, %v5090
    %v5092 = vcombine.low %v5070, %v5077
    %v5093 = vcombine.low %v5084, %v5091
    %v5095 = vunpack.c.l.s4 1966171168
    %v5096 = vunpack.c.0.s8 %v5095
    %v5097 = vlaneseq
    %v5098 = vshrl.u32 %v5097, 7
    %v5099 = vsub.s32 %v5096, %v5098
    %v5100 = vrot.slane %v5092, %v5099
    %v5102 = vunpack.c.l.s4 1966171168
    %v5103 = vunpack.c.0.s8 %v5102
    %v5104 = vlaneseq
    %v5105 = vshrl.u32 %v5104, 7
    %v5106 = vsub.s32 %v5103, %v5105
    %v5107 = vrot.slane %v5093, %v5106
    %v5108 = vcombine.low %v5100, %v5107
    %v5109 = vcombine.low %v3731, %v3735
    %v5110 = vcombine.low %v3739, %v3743
    %v5111 = vcombine.low %v3747, %v3751
    %v5112 = vcombine.low %v3755, %v3759
    %v5114 = vunpack.c.l.s4 1966171168
    %v5115 = vunpack.c.0.s8 %v5114
    %v5116 = vlaneseq
    %v5117 = vshrl.u32 %v5116, 7
    %v5118 = vsub.s32 %v5115, %v5117
    %v5119 = vrot.slane %v5109, %v5118
    %v5121 = vunpack.c.l.s4 1966171168
    %v5122 = vunpack.c.0.s8 %v5121
    %v5123 = vlaneseq
    %v5124 = vshrl.u32 %v5123, 7
    %v5125 = vsub.s32 %v5122, %v5124
    %v5126 = vrot.slane %v5110, %v5125
    %v5128 = vunpack.c.l.s4 1966171168
    %v5129 = vunpack.c.0.s8 %v5128
    %v5130 = vlaneseq
    %v5131 = vshrl.u32 %v5130, 7
    %v5132 = vsub.s32 %v5129, %v5131
    %v5133 = vrot.slane %v5111, %v5132
    %v5135 = vunpack.c.l.s4 1966171168
    %v5136 = vunpack.c.0.s8 %v5135
    %v5137 = vlaneseq
    %v5138 = vshrl.u32 %v5137, 7
    %v5139 = vsub.s32 %v5136, %v5138
    %v5140 = vrot.slane %v5112, %v5139
    %v5141 = vcombine.low %v5119, %v5126
    %v5142 = vcombine.low %v5133, %v5140
    %v5144 = vunpack.c.l.s4 1966171168
    %v5145 = vunpack.c.0.s8 %v5144
    %v5146 = vlaneseq
    %v5147 = vshrl.u32 %v5146, 7
    %v5148 = vsub.s32 %v5145, %v5147
    %v5149 = vrot.slane %v5141, %v5148
    %v5151 = vunpack.c.l.s4 1966171168
    %v5152 = vunpack.c.0.s8 %v5151
    %v5153 = vlaneseq
    %v5154 = vshrl.u32 %v5153, 7
    %v5155 = vsub.s32 %v5152, %v5154
    %v5156 = vrot.slane %v5142, %v5155
    %v5157 = vcombine.low %v5149, %v5156
    %v5158 = vcombine.low %v3763, %v3767
    %v5159 = vcombine.low %v3771, %v3775
    %v5160 = vcombine.low %v3779, %v3783
    %v5161 = vcombine.low %v3787, %v3791
    %v5163 = vunpack.c.l.s4 1966171168
    %v5164 = vunpack.c.0.s8 %v5163
    %v5165 = vlaneseq
    %v5166 = vshrl.u32 %v5165, 7
    %v5167 = vsub.s32 %v5164, %v5166
    %v5168 = vrot.slane %v5158, %v5167
    %v5170 = vunpack.c.l.s4 1966171168
    %v5171 = vunpack.c.0.s8 %v5170
    %v5172 = vlaneseq
    %v5173 = vshrl.u32 %v5172, 7
    %v5174 = vsub.s32 %v5171, %v5173
    %v5175 = vrot.slane %v5159, %v5174
    %v5177 = vunpack.c.l.s4 1966171168
    %v5178 = vunpack.c.0.s8 %v5177
    %v5179 = vlaneseq
    %v5180 = vshrl.u32 %v5179, 7
    %v5181 = vsub.s32 %v5178, %v5180
    %v5182 = vrot.slane %v5160, %v5181
    %v5184 = vunpack.c.l.s4 1966171168
    %v5185 = vunpack.c.0.s8 %v5184
    %v5186 = vlaneseq
    %v5187 = vshrl.u32 %v5186, 7
    %v5188 = vsub.s32 %v5185, %v5187
    %v5189 = vrot.slane %v5161, %v5188
    %v5190 = vcombine.low %v5168, %v5175
    %v5191 = vcombine.low %v5182, %v5189
    %v5193 = vunpack.c.l.s4 1966171168
    %v5194 = vunpack.c.0.s8 %v5193
    %v5195 = vlaneseq
    %v5196 = vshrl.u32 %v5195, 7
    %v5197 = vsub.s32 %v5194, %v5196
    %v5198 = vrot.slane %v5190, %v5197
    %v5200 = vunpack.c.l.s4 1966171168
    %v5201 = vunpack.c.0.s8 %v5200
    %v5202 = vlaneseq
    %v5203 = vshrl.u32 %v5202, 7
    %v5204 = vsub.s32 %v5201, %v5203
    %v5205 = vrot.slane %v5191, %v5204
    %v5206 = vcombine.low %v5198, %v5205
    %v5207 = vcombine.low %v3795, %v3799
    %v5208 = vcombine.low %v3803, %v3807
    %v5209 = vcombine.low %v3811, %v3815
    %v5210 = vcombine.low %v3819, %v3823
    %v5212 = vunpack.c.l.s4 1966171168
    %v5213 = vunpack.c.0.s8 %v5212
    %v5214 = vlaneseq
    %v5215 = vshrl.u32 %v5214, 7
    %v5216 = vsub.s32 %v5213, %v5215
    %v5217 = vrot.slane %v5207, %v5216
    %v5219 = vunpack.c.l.s4 1966171168
    %v5220 = vunpack.c.0.s8 %v5219
    %v5221 = vlaneseq
    %v5222 = vshrl.u32 %v5221, 7
    %v5223 = vsub.s32 %v5220, %v5222
    %v5224 = vrot.slane %v5208, %v5223
    %v5226 = vunpack.c.l.s4 1966171168
    %v5227 = vunpack.c.0.s8 %v5226
    %v5228 = vlaneseq
    %v5229 = vshrl.u32 %v5228, 7
    %v5230 = vsub.s32 %v5227, %v5229
    %v5231 = vrot.slane %v5209, %v5230
    %v5233 = vunpack.c.l.s4 1966171168
    %v5234 = vunpack.c.0.s8 %v5233
    %v5235 = vlaneseq
    %v5236 = vshrl.u32 %v5235, 7
    %v5237 = vsub.s32 %v5234, %v5236
    %v5238 = vrot.slane %v5210, %v5237
    %v5239 = vcombine.low %v5217, %v5224
    %v5240 = vcombine.low %v5231, %v5238
    %v5242 = vunpack.c.l.s4 1966171168
    %v5243 = vunpack.c.0.s8 %v5242
    %v5244 = vlaneseq
    %v5245 = vshrl.u32 %v5244, 7
    %v5246 = vsub.s32 %v5243, %v5245
    %v5247 = vrot.slane %v5239, %v5246
    %v5249 = vunpack.c.l.s4 1966171168
    %v5250 = vunpack.c.0.s8 %v5249
    %v5251 = vlaneseq
    %v5252 = vshrl.u32 %v5251, 7
    %v5253 = vsub.s32 %v5250, %v5252
    %v5254 = vrot.slane %v5240, %v5253
    %v5255 = vcombine.low %v5247, %v5254
    %v5256 = vcombine.low %v3827, %v3831
    %v5257 = vcombine.low %v3835, %v3839
    %v5258 = vcombine.low %v3843, %v3847
    %v5259 = vcombine.low %v3851, %v3855
    %v5261 = vunpack.c.l.s4 1966171168
    %v5262 = vunpack.c.0.s8 %v5261
    %v5263 = vlaneseq
    %v5264 = vshrl.u32 %v5263, 7
    %v5265 = vsub.s32 %v5262, %v5264
    %v5266 = vrot.slane %v5256, %v5265
    %v5268 = vunpack.c.l.s4 1966171168
    %v5269 = vunpack.c.0.s8 %v5268
    %v5270 = vlaneseq
    %v5271 = vshrl.u32 %v5270, 7
    %v5272 = vsub.s32 %v5269, %v5271
    %v5273 = vrot.slane %v5257, %v5272
    %v5275 = vunpack.c.l.s4 1966171168
    %v5276 = vunpack.c.0.s8 %v5275
    %v5277 = vlaneseq
    %v5278 = vshrl.u32 %v5277, 7
    %v5279 = vsub.s32 %v5276, %v5278
    %v5280 = vrot.slane %v5258, %v5279
    %v5282 = vunpack.c.l.s4 1966171168
    %v5283 = vunpack.c.0.s8 %v5282
    %v5284 = vlaneseq
    %v5285 = vshrl.u32 %v5284, 7
    %v5286 = vsub.s32 %v5283, %v5285
    %v5287 = vrot.slane %v5259, %v5286
    %v5288 = vcombine.low %v5266, %v5273
    %v5289 = vcombine.low %v5280, %v5287
    %v5291 = vunpack.c.l.s4 1966171168
    %v5292 = vunpack.c.0.s8 %v5291
    %v5293 = vlaneseq
    %v5294 = vshrl.u32 %v5293, 7
    %v5295 = vsub.s32 %v5292, %v5294
    %v5296 = vrot.slane %v5288, %v5295
    %v5298 = vunpack.c.l.s4 1966171168
    %v5299 = vunpack.c.0.s8 %v5298
    %v5300 = vlaneseq
    %v5301 = vshrl.u32 %v5300, 7
    %v5302 = vsub.s32 %v5299, %v5301
    %v5303 = vrot.slane %v5289, %v5302
    %v5304 = vcombine.low %v5296, %v5303
    %v5305 = vcombine.low %v3859, %v3863
    %v5306 = vcombine.low %v3867, %v3871
    %v5307 = vcombine.low %v3875, %v3879
    %v5308 = vcombine.low %v3883, %v3887
    %v5310 = vunpack.c.l.s4 1966171168
    %v5311 = vunpack.c.0.s8 %v5310
    %v5312 = vlaneseq
    %v5313 = vshrl.u32 %v5312, 7
    %v5314 = vsub.s32 %v5311, %v5313
    %v5315 = vrot.slane %v5305, %v5314
    %v5317 = vunpack.c.l.s4 1966171168
    %v5318 = vunpack.c.0.s8 %v5317
    %v5319 = vlaneseq
    %v5320 = vshrl.u32 %v5319, 7
    %v5321 = vsub.s32 %v5318, %v5320
    %v5322 = vrot.slane %v5306, %v5321
    %v5324 = vunpack.c.l.s4 1966171168
    %v5325 = vunpack.c.0.s8 %v5324
    %v5326 = vlaneseq
    %v5327 = vshrl.u32 %v5326, 7
    %v5328 = vsub.s32 %v5325, %v5327
    %v5329 = vrot.slane %v5307, %v5328
    %v5331 = vunpack.c.l.s4 1966171168
    %v5332 = vunpack.c.0.s8 %v5331
    %v5333 = vlaneseq
    %v5334 = vshrl.u32 %v5333, 7
    %v5335 = vsub.s32 %v5332, %v5334
    %v5336 = vrot.slane %v5308, %v5335
    %v5337 = vcombine.low %v5315, %v5322
    %v5338 = vcombine.low %v5329, %v5336
    %v5340 = vunpack.c.l.s4 1966171168
    %v5341 = vunpack.c.0.s8 %v5340
    %v5342 = vlaneseq
    %v5343 = vshrl.u32 %v5342, 7
    %v5344 = vsub.s32 %v5341, %v5343
    %v5345 = vrot.slane %v5337, %v5344
    %v5347 = vunpack.c.l.s4 1966171168
    %v5348 = vunpack.c.0.s8 %v5347
    %v5349 = vlaneseq
    %v5350 = vshrl.u32 %v5349, 7
    %v5351 = vsub.s32 %v5348, %v5350
    %v5352 = vrot.slane %v5338, %v5351
    %v5353 = vcombine.low %v5345, %v5352
    %v5354 = vcombine.low %v3891, %v3895
    %v5355 = vcombine.low %v3899, %v3903
    %v5356 = vcombine.low %v3907, %v3911
    %v5357 = vcombine.low %v3915, %v3919
    %v5359 = vunpack.c.l.s4 1966171168
    %v5360 = vunpack.c.0.s8 %v5359
    %v5361 = vlaneseq
    %v5362 = vshrl.u32 %v5361, 7
    %v5363 = vsub.s32 %v5360, %v5362
    %v5364 = vrot.slane %v5354, %v5363
    %v5366 = vunpack.c.l.s4 1966171168
    %v5367 = vunpack.c.0.s8 %v5366
    %v5368 = vlaneseq
    %v5369 = vshrl.u32 %v5368, 7
    %v5370 = vsub.s32 %v5367, %v5369
    %v5371 = vrot.slane %v5355, %v5370
    %v5373 = vunpack.c.l.s4 1966171168
    %v5374 = vunpack.c.0.s8 %v5373
    %v5375 = vlaneseq
    %v5376 = vshrl.u32 %v5375, 7
    %v5377 = vsub.s32 %v5374, %v5376
    %v5378 = vrot.slane %v5356, %v5377
    %v5380 = vunpack.c.l.s4 1966171168
    %v5381 = vunpack.c.0.s8 %v5380
    %v5382 = vlaneseq
    %v5383 = vshrl.u32 %v5382, 7
    %v5384 = vsub.s32 %v5381, %v5383
    %v5385 = vrot.slane %v5357, %v5384
    %v5386 = vcombine.low %v5364, %v5371
    %v5387 = vcombine.low %v5378, %v5385
    %v5389 = vunpack.c.l.s4 1966171168
    %v5390 = vunpack.c.0.s8 %v5389
    %v5391 = vlaneseq
    %v5392 = vshrl.u32 %v5391, 7
    %v5393 = vsub.s32 %v5390, %v5392
    %v5394 = vrot.slane %v5386, %v5393
    %v5396 = vunpack.c.l.s4 1966171168
    %v5397 = vunpack.c.0.s8 %v5396
    %v5398 = vlaneseq
    %v5399 = vshrl.u32 %v5398, 7
    %v5400 = vsub.s32 %v5397, %v5399
    %v5401 = vrot.slane %v5387, %v5400
    %v5402 = vcombine.low %v5394, %v5401
    %v5403 = vcombine.low %v3923, %v3927
    %v5404 = vcombine.low %v3931, %v3935
    %v5405 = vcombine.low %v3939, %v3943
    %v5406 = vcombine.low %v3947, %v3951
    %v5408 = vunpack.c.l.s4 1966171168
    %v5409 = vunpack.c.0.s8 %v5408
    %v5410 = vlaneseq
    %v5411 = vshrl.u32 %v5410, 7
    %v5412 = vsub.s32 %v5409, %v5411
    %v5413 = vrot.slane %v5403, %v5412
    %v5415 = vunpack.c.l.s4 1966171168
    %v5416 = vunpack.c.0.s8 %v5415
    %v5417 = vlaneseq
    %v5418 = vshrl.u32 %v5417, 7
    %v5419 = vsub.s32 %v5416, %v5418
    %v5420 = vrot.slane %v5404, %v5419
    %v5422 = vunpack.c.l.s4 1966171168
    %v5423 = vunpack.c.0.s8 %v5422
    %v5424 = vlaneseq
    %v5425 = vshrl.u32 %v5424, 7
    %v5426 = vsub.s32 %v5423, %v5425
    %v5427 = vrot.slane %v5405, %v5426
    %v5429 = vunpack.c.l.s4 1966171168
    %v5430 = vunpack.c.0.s8 %v5429
    %v5431 = vlaneseq
    %v5432 = vshrl.u32 %v5431, 7
    %v5433 = vsub.s32 %v5430, %v5432
    %v5434 = vrot.slane %v5406, %v5433
    %v5435 = vcombine.low %v5413, %v5420
    %v5436 = vcombine.low %v5427, %v5434
    %v5438 = vunpack.c.l.s4 1966171168
    %v5439 = vunpack.c.0.s8 %v5438
    %v5440 = vlaneseq
    %v5441 = vshrl.u32 %v5440, 7
    %v5442 = vsub.s32 %v5439, %v5441
    %v5443 = vrot.slane %v5435, %v5442
    %v5445 = vunpack.c.l.s4 1966171168
    %v5446 = vunpack.c.0.s8 %v5445
    %v5447 = vlaneseq
    %v5448 = vshrl.u32 %v5447, 7
    %v5449 = vsub.s32 %v5446, %v5448
    %v5450 = vrot.slane %v5436, %v5449
    %v5451 = vcombine.low %v5443, %v5450
    %v5452 = vcombine.low %v3955, %v3959
    %v5453 = vcombine.low %v3963, %v3967
    %v5454 = vcombine.low %v3971, %v3975
    %v5455 = vcombine.low %v3979, %v3983
    %v5457 = vunpack.c.l.s4 1966171168
    %v5458 = vunpack.c.0.s8 %v5457
    %v5459 = vlaneseq
    %v5460 = vshrl.u32 %v5459, 7
    %v5461 = vsub.s32 %v5458, %v5460
    %v5462 = vrot.slane %v5452, %v5461
    %v5464 = vunpack.c.l.s4 1966171168
    %v5465 = vunpack.c.0.s8 %v5464
    %v5466 = vlaneseq
    %v5467 = vshrl.u32 %v5466, 7
    %v5468 = vsub.s32 %v5465, %v5467
    %v5469 = vrot.slane %v5453, %v5468
    %v5471 = vunpack.c.l.s4 1966171168
    %v5472 = vunpack.c.0.s8 %v5471
    %v5473 = vlaneseq
    %v5474 = vshrl.u32 %v5473, 7
    %v5475 = vsub.s32 %v5472, %v5474
    %v5476 = vrot.slane %v5454, %v5475
    %v5478 = vunpack.c.l.s4 1966171168
    %v5479 = vunpack.c.0.s8 %v5478
    %v5480 = vlaneseq
    %v5481 = vshrl.u32 %v5480, 7
    %v5482 = vsub.s32 %v5479, %v5481
    %v5483 = vrot.slane %v5455, %v5482
    %v5484 = vcombine.low %v5462, %v5469
    %v5485 = vcombine.low %v5476, %v5483
    %v5487 = vunpack.c.l.s4 1966171168
    %v5488 = vunpack.c.0.s8 %v5487
    %v5489 = vlaneseq
    %v5490 = vshrl.u32 %v5489, 7
    %v5491 = vsub.s32 %v5488, %v5490
    %v5492 = vrot.slane %v5484, %v5491
    %v5494 = vunpack.c.l.s4 1966171168
    %v5495 = vunpack.c.0.s8 %v5494
    %v5496 = vlaneseq
    %v5497 = vshrl.u32 %v5496, 7
    %v5498 = vsub.s32 %v5495, %v5497
    %v5499 = vrot.slane %v5485, %v5498
    %v5500 = vcombine.low %v5492, %v5499
    %v5501 = vcombine.low %v3987, %v3991
    %v5502 = vcombine.low %v3995, %v3999
    %v5503 = vcombine.low %v4003, %v4007
    %v5504 = vcombine.low %v4011, %v4015
    %v5506 = vunpack.c.l.s4 1966171168
    %v5507 = vunpack.c.0.s8 %v5506
    %v5508 = vlaneseq
    %v5509 = vshrl.u32 %v5508, 7
    %v5510 = vsub.s32 %v5507, %v5509
    %v5511 = vrot.slane %v5501, %v5510
    %v5513 = vunpack.c.l.s4 1966171168
    %v5514 = vunpack.c.0.s8 %v5513
    %v5515 = vlaneseq
    %v5516 = vshrl.u32 %v5515, 7
    %v5517 = vsub.s32 %v5514, %v5516
    %v5518 = vrot.slane %v5502, %v5517
    %v5520 = vunpack.c.l.s4 1966171168
    %v5521 = vunpack.c.0.s8 %v5520
    %v5522 = vlaneseq
    %v5523 = vshrl.u32 %v5522, 7
    %v5524 = vsub.s32 %v5521, %v5523
    %v5525 = vrot.slane %v5503, %v5524
    %v5527 = vunpack.c.l.s4 1966171168
    %v5528 = vunpack.c.0.s8 %v5527
    %v5529 = vlaneseq
    %v5530 = vshrl.u32 %v5529, 7
    %v5531 = vsub.s32 %v5528, %v5530
    %v5532 = vrot.slane %v5504, %v5531
    %v5533 = vcombine.low %v5511, %v5518
    %v5534 = vcombine.low %v5525, %v5532
    %v5536 = vunpack.c.l.s4 1966171168
    %v5537 = vunpack.c.0.s8 %v5536
    %v5538 = vlaneseq
    %v5539 = vshrl.u32 %v5538, 7
    %v5540 = vsub.s32 %v5537, %v5539
    %v5541 = vrot.slane %v5533, %v5540
    %v5543 = vunpack.c.l.s4 1966171168
    %v5544 = vunpack.c.0.s8 %v5543
    %v5545 = vlaneseq
    %v5546 = vshrl.u32 %v5545, 7
    %v5547 = vsub.s32 %v5544, %v5546
    %v5548 = vrot.slane %v5534, %v5547
    %v5549 = vcombine.low %v5541, %v5548
    %v5550 = vcombine.low %v4019, %v4023
    %v5551 = vcombine.low %v4027, %v4031
    %v5552 = vcombine.low %v4035, %v4039
    %v5553 = vcombine.low %v4043, %v4047
    %v5555 = vunpack.c.l.s4 1966171168
    %v5556 = vunpack.c.0.s8 %v5555
    %v5557 = vlaneseq
    %v5558 = vshrl.u32 %v5557, 7
    %v5559 = vsub.s32 %v5556, %v5558
    %v5560 = vrot.slane %v5550, %v5559
    %v5562 = vunpack.c.l.s4 1966171168
    %v5563 = vunpack.c.0.s8 %v5562
    %v5564 = vlaneseq
    %v5565 = vshrl.u32 %v5564, 7
    %v5566 = vsub.s32 %v5563, %v5565
    %v5567 = vrot.slane %v5551, %v5566
    %v5569 = vunpack.c.l.s4 1966171168
    %v5570 = vunpack.c.0.s8 %v5569
    %v5571 = vlaneseq
    %v5572 = vshrl.u32 %v5571, 7
    %v5573 = vsub.s32 %v5570, %v5572
    %v5574 = vrot.slane %v5552, %v5573
    %v5576 = vunpack.c.l.s4 1966171168
    %v5577 = vunpack.c.0.s8 %v5576
    %v5578 = vlaneseq
    %v5579 = vshrl.u32 %v5578, 7
    %v5580 = vsub.s32 %v5577, %v5579
    %v5581 = vrot.slane %v5553, %v5580
    %v5582 = vcombine.low %v5560, %v5567
    %v5583 = vcombine.low %v5574, %v5581
    %v5585 = vunpack.c.l.s4 1966171168
    %v5586 = vunpack.c.0.s8 %v5585
    %v5587 = vlaneseq
    %v5588 = vshrl.u32 %v5587, 7
    %v5589 = vsub.s32 %v5586, %v5588
    %v5590 = vrot.slane %v5582, %v5589
    %v5592 = vunpack.c.l.s4 1966171168
    %v5593 = vunpack.c.0.s8 %v5592
    %v5594 = vlaneseq
    %v5595 = vshrl.u32 %v5594, 7
    %v5596 = vsub.s32 %v5593, %v5595
    %v5597 = vrot.slane %v5583, %v5596
    %v5598 = vcombine.low %v5590, %v5597
    %v5599 = vcombine.low %v4051, %v4055
    %v5600 = vcombine.low %v4059, %v4063
    %v5601 = vcombine.low %v4067, %v4071
    %v5602 = vcombine.low %v4075, %v4079
    %v5604 = vunpack.c.l.s4 1966171168
    %v5605 = vunpack.c.0.s8 %v5604
    %v5606 = vlaneseq
    %v5607 = vshrl.u32 %v5606, 7
    %v5608 = vsub.s32 %v5605, %v5607
    %v5609 = vrot.slane %v5599, %v5608
    %v5611 = vunpack.c.l.s4 1966171168
    %v5612 = vunpack.c.0.s8 %v5611
    %v5613 = vlaneseq
    %v5614 = vshrl.u32 %v5613, 7
    %v5615 = vsub.s32 %v5612, %v5614
    %v5616 = vrot.slane %v5600, %v5615
    %v5618 = vunpack.c.l.s4 1966171168
    %v5619 = vunpack.c.0.s8 %v5618
    %v5620 = vlaneseq
    %v5621 = vshrl.u32 %v5620, 7
    %v5622 = vsub.s32 %v5619, %v5621
    %v5623 = vrot.slane %v5601, %v5622
    %v5625 = vunpack.c.l.s4 1966171168
    %v5626 = vunpack.c.0.s8 %v5625
    %v5627 = vlaneseq
    %v5628 = vshrl.u32 %v5627, 7
    %v5629 = vsub.s32 %v5626, %v5628
    %v5630 = vrot.slane %v5602, %v5629
    %v5631 = vcombine.low %v5609, %v5616
    %v5632 = vcombine.low %v5623, %v5630
    %v5634 = vunpack.c.l.s4 1966171168
    %v5635 = vunpack.c.0.s8 %v5634
    %v5636 = vlaneseq
    %v5637 = vshrl.u32 %v5636, 7
    %v5638 = vsub.s32 %v5635, %v5637
    %v5639 = vrot.slane %v5631, %v5638
    %v5641 = vunpack.c.l.s4 1966171168
    %v5642 = vunpack.c.0.s8 %v5641
    %v5643 = vlaneseq
    %v5644 = vshrl.u32 %v5643, 7
    %v5645 = vsub.s32 %v5642, %v5644
    %v5646 = vrot.slane %v5632, %v5645
    %v5647 = vcombine.low %v5639, %v5646
    %5648 = vset.pattern.permute.xlu0 0
    %5649 = vperm.xlu0 %5648, %v4128
    %v5650 = vpop.permute.xlu0 %5649
    %5651 = vset.pattern.permute.xlu0 0
    %5652 = vperm.xlu0 %5651, %v4177
    %v5653 = vpop.permute.xlu0 %5652
    %5654 = vset.pattern.permute.xlu0 0
    %5655 = vperm.xlu0 %5654, %v4226
    %v5656 = vpop.permute.xlu0 %5655
    %5657 = vset.pattern.permute.xlu0 0
    %5658 = vperm.xlu0 %5657, %v4275
    %v5659 = vpop.permute.xlu0 %5658
    %5660 = vset.pattern.permute.xlu0 0
    %5661 = vperm.xlu0 %5660, %v4324
    %v5662 = vpop.permute.xlu0 %5661
    %5663 = vset.pattern.permute.xlu0 0
    %5664 = vperm.xlu0 %5663, %v4373
    %v5665 = vpop.permute.xlu0 %5664
    %5666 = vset.pattern.permute.xlu0 0
    %5667 = vperm.xlu0 %5666, %v4422
    %v5668 = vpop.permute.xlu0 %5667
    %5669 = vset.pattern.permute.xlu0 0
    %5670 = vperm.xlu0 %5669, %v4471
    %v5671 = vpop.permute.xlu0 %5670
    %5672 = vset.pattern.permute.xlu0 0
    %5673 = vperm.xlu0 %5672, %v4520
    %v5674 = vpop.permute.xlu0 %5673
    %5675 = vset.pattern.permute.xlu0 0
    %5676 = vperm.xlu0 %5675, %v4569
    %v5677 = vpop.permute.xlu0 %5676
    %5678 = vset.pattern.permute.xlu0 0
    %5679 = vperm.xlu0 %5678, %v4618
    %v5680 = vpop.permute.xlu0 %5679
    %5681 = vset.pattern.permute.xlu0 0
    %5682 = vperm.xlu0 %5681, %v4667
    %v5683 = vpop.permute.xlu0 %5682
    %5684 = vset.pattern.permute.xlu0 0
    %5685 = vperm.xlu0 %5684, %v4716
    %v5686 = vpop.permute.xlu0 %5685
    %5687 = vset.pattern.permute.xlu0 0
    %5688 = vperm.xlu0 %5687, %v4765
    %v5689 = vpop.permute.xlu0 %5688
    %5690 = vset.pattern.permute.xlu0 0
    %5691 = vperm.xlu0 %5690, %v4814
    %v5692 = vpop.permute.xlu0 %5691
    %5693 = vset.pattern.permute.xlu0 0
    %5694 = vperm.xlu0 %5693, %v4863
    %v5695 = vpop.permute.xlu0 %5694
    %5696 = vset.pattern.permute.xlu0 0
    %5697 = vperm.xlu0 %5696, %v4912
    %v5698 = vpop.permute.xlu0 %5697
    %5699 = vset.pattern.permute.xlu0 0
    %5700 = vperm.xlu0 %5699, %v4961
    %v5701 = vpop.permute.xlu0 %5700
    %5702 = vset.pattern.permute.xlu0 0
    %5703 = vperm.xlu0 %5702, %v5010
    %v5704 = vpop.permute.xlu0 %5703
    %5705 = vset.pattern.permute.xlu0 0
    %5706 = vperm.xlu0 %5705, %v5059
    %v5707 = vpop.permute.xlu0 %5706
    %5708 = vset.pattern.permute.xlu0 0
    %5709 = vperm.xlu0 %5708, %v5108
    %v5710 = vpop.permute.xlu0 %5709
    %5711 = vset.pattern.permute.xlu0 0
    %5712 = vperm.xlu0 %5711, %v5157
    %v5713 = vpop.permute.xlu0 %5712
    %5714 = vset.pattern.permute.xlu0 0
    %5715 = vperm.xlu0 %5714, %v5206
    %v5716 = vpop.permute.xlu0 %5715
    %5717 = vset.pattern.permute.xlu0 0
    %5718 = vperm.xlu0 %5717, %v5255
    %v5719 = vpop.permute.xlu0 %5718
    %5720 = vset.pattern.permute.xlu0 0
    %5721 = vperm.xlu0 %5720, %v5304
    %v5722 = vpop.permute.xlu0 %5721
    %5723 = vset.pattern.permute.xlu0 0
    %5724 = vperm.xlu0 %5723, %v5353
    %v5725 = vpop.permute.xlu0 %5724
    %5726 = vset.pattern.permute.xlu0 0
    %5727 = vperm.xlu0 %5726, %v5402
    %v5728 = vpop.permute.xlu0 %5727
    %5729 = vset.pattern.permute.xlu0 0
    %5730 = vperm.xlu0 %5729, %v5451
    %v5731 = vpop.permute.xlu0 %5730
    %5732 = vset.pattern.permute.xlu0 0
    %5733 = vperm.xlu0 %5732, %v5500
    %v5734 = vpop.permute.xlu0 %5733
    %5735 = vset.pattern.permute.xlu0 0
    %5736 = vperm.xlu0 %5735, %v5549
    %v5737 = vpop.permute.xlu0 %5736
    %5738 = vset.pattern.permute.xlu0 0
    %5739 = vperm.xlu0 %5738, %v5598
    %v5740 = vpop.permute.xlu0 %5739
    %5741 = vset.pattern.permute.xlu0 0
    %5742 = vperm.xlu0 %5741, %v5647
    %v5743 = vpop.permute.xlu0 %5742
    %v5744 = vlaneseq
    %v5745 = vand.u32 %v5744, 127
    %v5746 = vlaneseq
    %v5747 = vshrl.u32 %v5746, 7
    %v5748 = vsub.s32 %v5745, %v5747
    %v5749 = vrot.slane %v5650, %v5748
    %v5750 = vadd.s32 %v5745, 4294967288
    %v5751 = vlaneseq
    %v5752 = vshrl.u32 %v5751, 7
    %v5753 = vsub.s32 %v5750, %v5752
    %v5754 = vrot.slane %v5653, %v5753
    %vm5755 = vcmask 130112
    %v5756 = vsel %vm5755, %v5754, %v5749
    %v5757 = vadd.s32 %v5745, 4294967280
    %v5758 = vlaneseq
    %v5759 = vshrl.u32 %v5758, 7
    %v5760 = vsub.s32 %v5757, %v5759
    %v5761 = vrot.slane %v5656, %v5760
    %vm5762 = vcmask 195712
    %v5763 = vsel %vm5762, %v5761, %v5756
    %v5764 = vadd.s32 %v5745, 4294967272
    %v5765 = vlaneseq
    %v5766 = vshrl.u32 %v5765, 7
    %v5767 = vsub.s32 %v5764, %v5766
    %v5768 = vrot.slane %v5659, %v5767
    %vm5769 = vcmask 261312
    %v5770 = vsel %vm5769, %v5768, %v5763
    %v5771 = vadd.s32 %v5745, 4294967264
    %v5772 = vlaneseq
    %v5773 = vshrl.u32 %v5772, 7
    %v5774 = vsub.s32 %v5771, %v5773
    %v5775 = vrot.slane %v5662, %v5774
    %vm5776 = vcmask 326912
    %v5777 = vsel %vm5776, %v5775, %v5770
    %v5778 = vadd.s32 %v5745, 4294967256
    %v5779 = vlaneseq
    %v5780 = vshrl.u32 %v5779, 7
    %v5781 = vsub.s32 %v5778, %v5780
    %v5782 = vrot.slane %v5665, %v5781
    %vm5783 = vcmask 392512
    %v5784 = vsel %vm5783, %v5782, %v5777
    %v5785 = vadd.s32 %v5745, 4294967248
    %v5786 = vlaneseq
    %v5787 = vshrl.u32 %v5786, 7
    %v5788 = vsub.s32 %v5785, %v5787
    %v5789 = vrot.slane %v5668, %v5788
    %vm5790 = vcmask 458112
    %v5791 = vsel %vm5790, %v5789, %v5784
    %v5792 = vadd.s32 %v5745, 4294967240
    %v5793 = vlaneseq
    %v5794 = vshrl.u32 %v5793, 7
    %v5795 = vsub.s32 %v5792, %v5794
    %v5796 = vrot.slane %v5671, %v5795
    %vm5797 = vcmask 523712
    %v5798 = vsel %vm5797, %v5796, %v5791
    %v5799 = vadd.s32 %v5745, 4294967232
    %v5800 = vlaneseq
    %v5801 = vshrl.u32 %v5800, 7
    %v5802 = vsub.s32 %v5799, %v5801
    %v5803 = vrot.slane %v5674, %v5802
    %vm5804 = vcmask 589312
    %v5805 = vsel %vm5804, %v5803, %v5798
    %v5806 = vadd.s32 %v5745, 4294967224
    %v5807 = vlaneseq
    %v5808 = vshrl.u32 %v5807, 7
    %v5809 = vsub.s32 %v5806, %v5808
    %v5810 = vrot.slane %v5677, %v5809
    %vm5811 = vcmask 654912
    %v5812 = vsel %vm5811, %v5810, %v5805
    %v5813 = vadd.s32 %v5745, 4294967216
    %v5814 = vlaneseq
    %v5815 = vshrl.u32 %v5814, 7
    %v5816 = vsub.s32 %v5813, %v5815
    %v5817 = vrot.slane %v5680, %v5816
    %vm5818 = vcmask 720512
    %v5819 = vsel %vm5818, %v5817, %v5812
    %v5820 = vadd.s32 %v5745, 4294967208
    %v5821 = vlaneseq
    %v5822 = vshrl.u32 %v5821, 7
    %v5823 = vsub.s32 %v5820, %v5822
    %v5824 = vrot.slane %v5683, %v5823
    %vm5825 = vcmask 786112
    %v5826 = vsel %vm5825, %v5824, %v5819
    %v5827 = vadd.s32 %v5745, 4294967200
    %v5828 = vlaneseq
    %v5829 = vshrl.u32 %v5828, 7
    %v5830 = vsub.s32 %v5827, %v5829
    %v5831 = vrot.slane %v5686, %v5830
    %vm5832 = vcmask 851712
    %v5833 = vsel %vm5832, %v5831, %v5826
    %v5834 = vadd.s32 %v5745, 4294967192
    %v5835 = vlaneseq
    %v5836 = vshrl.u32 %v5835, 7
    %v5837 = vsub.s32 %v5834, %v5836
    %v5838 = vrot.slane %v5689, %v5837
    %vm5839 = vcmask 917312
    %v5840 = vsel %vm5839, %v5838, %v5833
    %v5841 = vadd.s32 %v5745, 4294967184
    %v5842 = vlaneseq
    %v5843 = vshrl.u32 %v5842, 7
    %v5844 = vsub.s32 %v5841, %v5843
    %v5845 = vrot.slane %v5692, %v5844
    %vm5846 = vcmask 982912
    %v5847 = vsel %vm5846, %v5845, %v5840
    %v5848 = vadd.s32 %v5745, 4294967176
    %v5849 = vlaneseq
    %v5850 = vshrl.u32 %v5849, 7
    %v5851 = vsub.s32 %v5848, %v5850
    %v5852 = vrot.slane %v5695, %v5851
    %vm5853 = vcmask 1048512
    %v5854 = vsel %vm5853, %v5852, %v5847
    %v5855 = vlaneseq
    %v5856 = vshrl.u32 %v5855, 7
    %v5857 = vsub.s32 %v5745, %v5856
    %v5858 = vrot.slane %v5698, %v5857
    %v5859 = vlaneseq
    %v5860 = vshrl.u32 %v5859, 7
    %v5861 = vsub.s32 %v5750, %v5860
    %v5862 = vrot.slane %v5701, %v5861
    %v5863 = vsel %vm5755, %v5862, %v5858
    %v5864 = vlaneseq
    %v5865 = vshrl.u32 %v5864, 7
    %v5866 = vsub.s32 %v5757, %v5865
    %v5867 = vrot.slane %v5704, %v5866
    %v5868 = vsel %vm5762, %v5867, %v5863
    %v5869 = vlaneseq
    %v5870 = vshrl.u32 %v5869, 7
    %v5871 = vsub.s32 %v5764, %v5870
    %v5872 = vrot.slane %v5707, %v5871
    %v5873 = vsel %vm5769, %v5872, %v5868
    %v5874 = vlaneseq
    %v5875 = vshrl.u32 %v5874, 7
    %v5876 = vsub.s32 %v5771, %v5875
    %v5877 = vrot.slane %v5710, %v5876
    %v5878 = vsel %vm5776, %v5877, %v5873
    %v5879 = vlaneseq
    %v5880 = vshrl.u32 %v5879, 7
    %v5881 = vsub.s32 %v5778, %v5880
    %v5882 = vrot.slane %v5713, %v5881
    %v5883 = vsel %vm5783, %v5882, %v5878
    %v5884 = vlaneseq
    %v5885 = vshrl.u32 %v5884, 7
    %v5886 = vsub.s32 %v5785, %v5885
    %v5887 = vrot.slane %v5716, %v5886
    %v5888 = vsel %vm5790, %v5887, %v5883
    %v5889 = vlaneseq
    %v5890 = vshrl.u32 %v5889, 7
    %v5891 = vsub.s32 %v5792, %v5890
    %v5892 = vrot.slane %v5719, %v5891
    %v5893 = vsel %vm5797, %v5892, %v5888
    %v5894 = vlaneseq
    %v5895 = vshrl.u32 %v5894, 7
    %v5896 = vsub.s32 %v5799, %v5895
    %v5897 = vrot.slane %v5722, %v5896
    %v5898 = vsel %vm5804, %v5897, %v5893
    %v5899 = vlaneseq
    %v5900 = vshrl.u32 %v5899, 7
    %v5901 = vsub.s32 %v5806, %v5900
    %v5902 = vrot.slane %v5725, %v5901
    %v5903 = vsel %vm5811, %v5902, %v5898
    %v5904 = vlaneseq
    %v5905 = vshrl.u32 %v5904, 7
    %v5906 = vsub.s32 %v5813, %v5905
    %v5907 = vrot.slane %v5728, %v5906
    %v5908 = vsel %vm5818, %v5907, %v5903
    %v5909 = vlaneseq
    %v5910 = vshrl.u32 %v5909, 7
    %v5911 = vsub.s32 %v5820, %v5910
    %v5912 = vrot.slane %v5731, %v5911
    %v5913 = vsel %vm5825, %v5912, %v5908
    %v5914 = vlaneseq
    %v5915 = vshrl.u32 %v5914, 7
    %v5916 = vsub.s32 %v5827, %v5915
    %v5917 = vrot.slane %v5734, %v5916
    %v5918 = vsel %vm5832, %v5917, %v5913
    %v5919 = vlaneseq
    %v5920 = vshrl.u32 %v5919, 7
    %v5921 = vsub.s32 %v5834, %v5920
    %v5922 = vrot.slane %v5737, %v5921
    %v5923 = vsel %vm5839, %v5922, %v5918
    %v5924 = vlaneseq
    %v5925 = vshrl.u32 %v5924, 7
    %v5926 = vsub.s32 %v5841, %v5925
    %v5927 = vrot.slane %v5740, %v5926
    %v5928 = vsel %vm5846, %v5927, %v5923
    %v5929 = vlaneseq
    %v5930 = vshrl.u32 %v5929, 7
    %v5931 = vsub.s32 %v5848, %v5930
    %v5932 = vrot.slane %v5743, %v5931
    %v5933 = vsel %vm5853, %v5932, %v5928
    %v5934 = vcombine.low %v5854, %v5933
    %v5936 = vunpack.c.l.s4 1966171168
    %v5937 = vunpack.c.0.s8 %v5936
    %v5938 = vlaneseq
    %v5939 = vshrl.u32 %v5938, 7
    %v5940 = vsub.s32 %v5937, %v5939
    %v5941 = vrot.slane %v5934, %v5940
    %v5943 = vunpack.c.l.s4 1966171168
    %v5944 = vunpack.c.0.s8 %v5943
    %v5945 = vlaneseq
    %v5946 = vshrl.u32 %v5945, 7
    %v5947 = vsub.s32 %v5944, %v5946
    %v5948 = vrot.slane %v5941, %v5947
    %v5950 = vlaneseq
    %vm5951 = vcmp.ge.s32.totalorder %v5950, 0
    %vm5952 = vcmp.lt.s32.totalorder %v5950, 256
    %vm5953 = vmand %vm5951, %vm5952
    %5954 = vst.msk [vmem:[#allocation9] sm:$0x3] %vm5953, %v5948
    // Predicated region
    $region42: #{tpu_custom_call.1} parent=1 // pred_check
      _
    $region43: #{tpu_custom_call.1} parent=1 // pred_check_branch
      %5956 = sbr.rel (0) target = $region45
    $region44: #{tpu_custom_call.1} parent=1 // pred_region
      %s5958 = ssub.s32 32, 32
      %5959 = vsyncadd [#allocation5], %s5958
      %s5961 = sshll.u32 [#allocation9], 4
      %s5962 = int_to_ptr.vmem [resolvable:$true] %s5961
      %5964 = dma.vmem_to_hbm [thread:$0]  %s5962, 32, %s7, [#allocation5]
    $region45: #{tpu_custom_call.1} parent=1 // pred_fallthru
      _
    // Predicated region
    $region46: #{tpu_custom_call.1} parent=1 // pred_check
      _
    $region47: #{tpu_custom_call.1} parent=1 // pred_check_branch
      %5966 = sbr.rel (0) target = $region49
    $region48: #{tpu_custom_call.1} parent=1 // pred_region
      %5967 = dma.done [#allocation5], 32
    $region49: #{tpu_custom_call.1} parent=1 // pred_fallthru
      _
    %5968 = vsyncpa [#allocation4], 1
    %5969 = vsyncpa [#allocation7], 1
    %5970 = vsyncpa [#allocation5], 1

</llo_original>
